<compile_context>
chip_gen: v5e
topology: v5e:2x2
jax: 0.10.0
libtpu: 0.0.40
codegen_flags: <defaults>
</compile_context>

<pallas_src>
import functools

import jax
import jax.numpy as jnp
from jax import lax
from jax.experimental import pallas as pl
from jax.experimental.pallas import tpu as pltpu

LANES = 128
BTILE = 8  # batch rows handled per grid step (sublane count)


def _round_up(n, m):
    return ((n + m - 1) // m) * m


# ---------------- Fused forward kernel (one batch tile of 8) ----------------

def _fused_net_kernel(patches_ref, w1_ref, b1_ref, w2_ref, b2_ref,
                      wf1a_ref, wf1b_ref, bf1_ref, wf2_ref, bf2_ref, o_ref, *, bt):
    f32 = jnp.float32
    bf16 = jnp.bfloat16

    # ---- conv1 + bias + ReLU + 2x2 max-pool: ONE dot, pool offsets packed in lane groups ----
    # patches rows = (ph, pw, b) with ph, pw in 0..11; lanes = 6x6 patch (real 0..35).
    patches = patches_ref[...].reshape(12 * 12 * bt, LANES)              # bf16
    y = jnp.dot(patches, w1_ref[...], preferred_element_type=f32)        # lanes g*4 + oc
    m = y
    for g in range(1, 4):                                                # max over pool offsets
        m = jnp.maximum(m, pltpu.roll(y, shift=LANES - 4 * g, axis=1))   # lane c <- lane c+4g
    lane = lax.broadcasted_iota(jnp.int32, (1, LANES), 1)
    mask4 = (lane < 4).astype(f32)                                       # exact zeros in lanes>=4
    p1 = jnp.maximum(m + b1_ref[...], 0.0) * mask4                       # rows=(ph,pw,b), lanes=c
    p1 = p1.reshape(12, 12, bt, LANES)

    # ---- conv2 + bias + ReLU: pack all 25 taps into 100 lanes, then ONE dot ----
    # P[ph, ow, b, kw*4+c] = p1[ph, ow+kw, b, c]   (kw packing via lane rolls + adds)
    P = None
    for kw in range(5):
        s = p1[:, kw:kw + 8, :, :].reshape(12 * 8 * bt, LANES)
        if kw:
            s = pltpu.roll(s, shift=4 * kw, axis=1)
        P = s if P is None else P + s
    P = P.reshape(12, 8 * bt, LANES)
    # Q[oh, ow, b, kh*20 + kw*4 + c] = p1[oh+kh, ow+kw, b, c]   (kh packing)
    Q = None
    for kh in range(5):
        s = P[kh:kh + 8].reshape(8 * 8 * bt, LANES)
        if kh:
            s = pltpu.roll(s, shift=20 * kh, axis=1)
        Q = s if Q is None else Q + s
    h2 = jnp.dot(Q.astype(bf16), w2_ref[...], preferred_element_type=f32) + b2_ref[...]
    h2 = jnp.maximum(h2, 0.0)                                  # rows=(oh,ow,b), lanes 0..9 real

    # ---- 2x2 max-pool #2 (spatial dims lead; batch sits in sublanes) ----
    h2r = h2.reshape(4, 2, 4, 2, bt, LANES)                    # (qh, oh_lo, qw, ow_lo, b, c)
    p2 = jnp.maximum(jnp.maximum(h2r[:, 0, :, 0], h2r[:, 0, :, 1]),
                     jnp.maximum(h2r[:, 1, :, 0], h2r[:, 1, :, 1]))   # [4, 4, bt, 128]
    p2 = p2.reshape(16, bt, LANES)                             # padded lanes (>=10) exactly 0

    # ---- fc1 + ReLU: (s, channel) packed into lanes s_local*16 + c; two halves, two dots ----
    half0 = p2[0]
    half1 = p2[8]
    for s in range(1, 8):
        half0 = half0 + pltpu.roll(p2[s], shift=16 * s, axis=1)
        half1 = half1 + pltpu.roll(p2[s + 8], shift=16 * s, axis=1)
    h1 = (jnp.dot(half0.astype(bf16), wf1a_ref[...], preferred_element_type=f32)
          + jnp.dot(half1.astype(bf16), wf1b_ref[...], preferred_element_type=f32)
          + bf1_ref[...])
    h1 = jnp.maximum(h1, 0.0)                                  # [bt, 128], real cols 0..99

    # ---- fc2 (lane-dense [bt,128] store; wrapper slices to [B, n_classes]) ----
    o_ref[...] = (jnp.dot(h1.astype(bf16), wf2_ref[...], preferred_element_type=f32)
                  + bf2_ref[...])


# ---------------- One-time parameter preparation (outside the forward) ----------------

def prepare_params(params, n_classes=4):
    f32 = jnp.float32
    bf16 = jnp.bfloat16
    w1 = params["conv1_w"].astype(f32)   # [4, 1, 5, 5]
    b1 = params["conv1_b"].astype(f32)   # [4]
    w2 = params["conv2_w"].astype(f32)   # [10, 4, 5, 5]
    b2 = params["conv2_b"].astype(f32)   # [10]
    wf1 = params["fc1_w"].astype(f32)    # [100, 160]
    bf1 = params["fc1_b"].astype(f32)    # [100]
    wf2 = params["fc2_w"].astype(f32)    # [n_classes, 100]
    bf2 = params["fc2_b"].astype(f32)    # [n_classes]

    # conv1: the 4 pool offsets (dy, dx) packed into column groups g*4 + oc of ONE block.
    # row a*6+b, col g*4+oc = w1[oc, 0, a-dy, b-dx] (zero outside the 5x5 support).
    cols = []
    for dy in range(2):
        for dx in range(2):
            padk = jnp.zeros((4, 6, 6), f32).at[:, dy:dy + 5, dx:dx + 5].set(w1[:, 0])
            cols.append(padk.reshape(4, 36).T)                        # [36, 4]
    w1_blk = jnp.zeros((LANES, LANES), f32).at[:36, :16].set(jnp.concatenate(cols, axis=1))
    b1_row = jnp.zeros((1, LANES), f32).at[0, :4].set(b1)

    # conv2: all 25 taps packed into rows kh*20 + kw*4 + c of ONE block (cols = oc).
    w2_rows = jnp.transpose(w2, (2, 3, 1, 0)).reshape(100, 10)        # [(kh,kw,c), oc]
    w2_blk = jnp.zeros((LANES, LANES), f32).at[:100, :10].set(w2_rows)
    b2_row = jnp.zeros((1, LANES), f32).at[0, :10].set(b2)

    # fc1: PyTorch flatten index = c*16 + s (s = qh*4 + qw).  Two halves (s 0..7 / 8..15),
    # rows s_local*16 + c (c padded 10 -> 16), cols = output feature.
    t = jnp.transpose(wf1.reshape(100, 10, 16), (2, 1, 0))            # [s, c, o]
    t = jnp.pad(t, ((0, 0), (0, 6), (0, 0)))                          # [16, 16, 100]
    wf1_a = jnp.zeros((LANES, LANES), f32).at[:, :100].set(t[:8].reshape(LANES, 100))
    wf1_b = jnp.zeros((LANES, LANES), f32).at[:, :100].set(t[8:].reshape(LANES, 100))
    bf1_row = jnp.zeros((1, LANES), f32).at[0, :100].set(bf1)

    # fc2: pre-transposed to [in, out], lane-padded.
    wf2_blk = jnp.zeros((LANES, LANES), f32).at[:100, :n_classes].set(wf2.T)
    bf2_row = jnp.zeros((1, LANES), f32).at[0, :n_classes].set(bf2)

    return dict(w1=w1_blk.astype(bf16), b1=b1_row,
                w2=w2_blk.astype(bf16), b2=b2_row,
                wf1a=wf1_a.astype(bf16), wf1b=wf1_b.astype(bf16), bf1=bf1_row,
                wf2=wf2_blk.astype(bf16), bf2=bf2_row)


# ---------------- Forward pass: thin wrapper + single pallas_call ----------------

def net_forward(x, prepped, n_classes=4):
    # x: [B, 1, 28, 28] float32
    B = x.shape[0]
    BP = _round_up(max(B, BTILE), BTILE)                        # batch lives in sublanes
    xb = jnp.pad(x.astype(jnp.float32), ((0, BP - B), (0, 0), (0, 0), (0, 0)))

    # 6x6 / stride-2 patches: one row per POOLED conv1 output position (no spatial pad).
    pats = lax.conv_general_dilated_patches(xb, (6, 6), (2, 2), 'VALID')   # [BP, 36, 12, 12]
    pats = jnp.transpose(pats, (2, 3, 0, 1))                               # [12, 12, BP, 36]
    patches = jnp.pad(pats, ((0, 0), (0, 0), (0, 0), (0, LANES - 36))).astype(jnp.bfloat16)

    kernel = functools.partial(_fused_net_kernel, bt=BTILE)
    wspec = pl.BlockSpec((LANES, LANES), lambda i: (0, 0))
    bspec = pl.BlockSpec((1, LANES), lambda i: (0, 0))
    out = pl.pallas_call(
        kernel,
        out_shape=jax.ShapeDtypeStruct((BP, LANES), jnp.float32),
        grid=(BP // BTILE,),
        in_specs=[pl.BlockSpec((12, 12, BTILE, LANES), lambda i: (0, 0, i, 0)),
                  wspec, bspec, wspec, bspec, wspec, wspec, bspec, wspec, bspec],
        out_specs=pl.BlockSpec((BTILE, LANES), lambda i: (i, 0)),
        compiler_params=pltpu.CompilerParams(
            dimension_semantics=("parallel",),
            vmem_limit_bytes=16 * 1024 * 1024),
    )(patches, prepped["w1"], prepped["b1"], prepped["w2"], prepped["b2"],
      prepped["wf1a"], prepped["wf1b"], prepped["bf1"], prepped["wf2"], prepped["bf2"])
    return out[:B, :n_classes]


# ---------------- Pure-JAX reference (for a one-shot numerical check) ----------------

def net_reference(x, params):
    hp = lax.Precision.HIGHEST

    def conv(h, w, b):
        y = lax.conv_general_dilated(h, w, (1, 1), 'VALID',
                                     dimension_numbers=('NCHW', 'OIHW', 'NCHW'),
                                     precision=hp)
        return y + b[None, :, None, None]

    def pool(h):
        return lax.reduce_window(h, -jnp.inf, lax.max, (1, 1, 2, 2), (1, 1, 2, 2), 'VALID')

    h = pool(jax.nn.relu(conv(x, params["conv1_w"], params["conv1_b"])))
    h = pool(jax.nn.relu(conv(h, params["conv2_w"], params["conv2_b"])))
    h = h.reshape(x.shape[0], -1)
    h = jax.nn.relu(jnp.dot(h, params["fc1_w"].T, precision=hp) + params["fc1_b"])
    return jnp.dot(h, params["fc2_w"].T, precision=hp) + params["fc2_b"]


def init_params(key, n_classes=4):
    # Deterministic synthetic init (PyTorch-style uniform(-1/sqrt(fan_in), 1/sqrt(fan_in))).
    ks = jax.random.split(key, 8)

    def u(k, shape, fan_in):
        bound = 1.0 / (fan_in ** 0.5)
        return jax.random.uniform(k, shape, jnp.float32, -bound, bound)

    return {
        "conv1_w": u(ks[0], (4, 1, 5, 5), 1 * 5 * 5),
        "conv1_b": u(ks[1], (4,), 1 * 5 * 5),
        "conv2_w": u(ks[2], (10, 4, 5, 5), 4 * 5 * 5),
        "conv2_b": u(ks[3], (10,), 4 * 5 * 5),
        "fc1_w": u(ks[4], (100, 4 * 4 * 10), 4 * 4 * 10),   # PyTorch Linear weight [out, in]
        "fc1_b": u(ks[5], (100,), 4 * 4 * 10),
        "fc2_w": u(ks[6], (n_classes, 100), 100),
        "fc2_b": u(ks[7], (n_classes,), 100),
    }


if __name__ == "__main__":
    key = jax.random.PRNGKey(0)
    pkey, xkey = jax.random.split(key)
    params = init_params(pkey, n_classes=4)
    prepped = prepare_params(params, n_classes=4)        # one-time weight transform

    # Input must be 28x28 for fc_1's in_features = 4*4*10 to hold; small batch of 2.
    x = jax.random.normal(xkey, (2, 1, 28, 28), jnp.float32)

    fwd = jax.jit(functools.partial(net_forward, n_classes=4))
    out = jax.block_until_ready(fwd(x, prepped))
    assert out.shape == (2, 4) and out.dtype == jnp.float32

    ref = net_reference(x, params)
    err = float(jnp.max(jnp.abs(out - ref)))
    assert err < 2e-2, f"mismatch vs reference: max abs err {err}"
    print("KERNEL_OK")
</pallas_src>

<mosaic_0001>
module attributes {stable_mosaic.version = 11 : i64} {
  func.func @_fused_net_kernel(%arg0: i32, %arg1: memref<12x12x8x128xbf16, #tpu.memory_space<vmem>>, %arg2: memref<128x128xbf16, #tpu.memory_space<vmem>>, %arg3: memref<1x128xf32, #tpu.memory_space<vmem>>, %arg4: memref<128x128xbf16, #tpu.memory_space<vmem>>, %arg5: memref<1x128xf32, #tpu.memory_space<vmem>>, %arg6: memref<128x128xbf16, #tpu.memory_space<vmem>>, %arg7: memref<128x128xbf16, #tpu.memory_space<vmem>>, %arg8: memref<1x128xf32, #tpu.memory_space<vmem>>, %arg9: memref<128x128xbf16, #tpu.memory_space<vmem>>, %arg10: memref<1x128xf32, #tpu.memory_space<vmem>>, %arg11: memref<8x128xf32, #tpu.memory_space<vmem>>) attributes {dimension_semantics = [#tpu.dimension_semantics<parallel>], iteration_bounds = array<i64: 1>, scalar_prefetch = 0 : i64, scratch_operands = 0 : i64, tpu.core_type = #tpu.core_type<tc>, window_params = [{transform_indices = @transform_0, window_bounds = array<i64: 12, 12, 8, 128>}, {pipeline_mode = #tpu.pipeline_mode<synchronous>, transform_indices = @transform_1, window_bounds = array<i64: 128, 128>}, {pipeline_mode = #tpu.pipeline_mode<synchronous>, transform_indices = @transform_2, window_bounds = array<i64: 1, 128>}, {pipeline_mode = #tpu.pipeline_mode<synchronous>, transform_indices = @transform_3, window_bounds = array<i64: 128, 128>}, {pipeline_mode = #tpu.pipeline_mode<synchronous>, transform_indices = @transform_4, window_bounds = array<i64: 1, 128>}, {pipeline_mode = #tpu.pipeline_mode<synchronous>, transform_indices = @transform_5, window_bounds = array<i64: 128, 128>}, {pipeline_mode = #tpu.pipeline_mode<synchronous>, transform_indices = @transform_6, window_bounds = array<i64: 128, 128>}, {pipeline_mode = #tpu.pipeline_mode<synchronous>, transform_indices = @transform_7, window_bounds = array<i64: 1, 128>}, {pipeline_mode = #tpu.pipeline_mode<synchronous>, transform_indices = @transform_8, window_bounds = array<i64: 128, 128>}, {pipeline_mode = #tpu.pipeline_mode<synchronous>, transform_indices = @transform_9, window_bounds = array<i64: 1, 128>}, {transform_indices = @transform_10, window_bounds = array<i64: 8, 128>}]} {
    %c0 = arith.constant 0 : index
    %c0_0 = arith.constant 0 : index
    %c0_1 = arith.constant 0 : index
    %c0_2 = arith.constant 0 : index
    %0 = vector.load %arg1[%c0, %c0_0, %c0_1, %c0_2] : memref<12x12x8x128xbf16, #tpu.memory_space<vmem>>, vector<12x12x8x128xbf16>
    %1 = vector.shape_cast %0 : vector<12x12x8x128xbf16> to vector<1152x128xbf16>
    %c0_3 = arith.constant 0 : index
    %c0_4 = arith.constant 0 : index
    %2 = vector.load %arg2[%c0_3, %c0_4] : memref<128x128xbf16, #tpu.memory_space<vmem>>, vector<128x128xbf16>
    %cst = arith.constant dense<0.000000e+00> : vector<1152x128xf32>
    %3 = tpu.matmul %1, %2, %cst {dimension_numbers = #tpu.dot_dimension_numbers<[1], [0], [0], [1], [0, 0, 1, 1], [], []>} : vector<1152x128xbf16>, vector<128x128xbf16>, vector<1152x128xf32> -> vector<1152x128xf32>
    %c124_i32 = arith.constant 124 : i32
    %4 = tpu.dynamic_rotate %3 by %c124_i32 dim 1 : vector<1152x128xf32>, i32 -> vector<1152x128xf32>
    %5 = arith.maximumf %3, %4 : vector<1152x128xf32>
    %c120_i32 = arith.constant 120 : i32
    %6 = tpu.dynamic_rotate %3 by %c120_i32 dim 1 : vector<1152x128xf32>, i32 -> vector<1152x128xf32>
    %7 = arith.maximumf %5, %6 : vector<1152x128xf32>
    %c116_i32 = arith.constant 116 : i32
    %8 = tpu.dynamic_rotate %3 by %c116_i32 dim 1 : vector<1152x128xf32>, i32 -> vector<1152x128xf32>
    %9 = arith.maximumf %7, %8 : vector<1152x128xf32>
    %10 = tpu.iota {dimensions = array<i32: 1>} : vector<1x128xi32>
    %c4_i32 = arith.constant 4 : i32
    %11 = vector.broadcast %c4_i32 : i32 to vector<1x128xi32>
    %12 = arith.cmpi slt, %10, %11 : vector<1x128xi32>
    %13 = arith.extui %12 : vector<1x128xi1> to vector<1x128xi32>
    %14 = arith.sitofp %13 : vector<1x128xi32> to vector<1x128xf32>
    %c0_5 = arith.constant 0 : index
    %c0_6 = arith.constant 0 : index
    %15 = vector.load %arg3[%c0_5, %c0_6] : memref<1x128xf32, #tpu.memory_space<vmem>>, vector<1x128xf32>
    %16 = vector.broadcast %15 : vector<1x128xf32> to vector<1152x128xf32>
    %17 = arith.addf %9, %16 : vector<1152x128xf32>
    %cst_7 = arith.constant 0.000000e+00 : f32
    %18 = vector.broadcast %cst_7 : f32 to vector<1152x128xf32>
    %19 = arith.maximumf %17, %18 : vector<1152x128xf32>
    %20 = vector.broadcast %14 : vector<1x128xf32> to vector<1152x128xf32>
    %21 = arith.mulf %19, %20 : vector<1152x128xf32>
    %22 = vector.shape_cast %21 : vector<1152x128xf32> to vector<12x12x8x128xf32>
    %23 = vector.extract_strided_slice %22 {offsets = [0, 0, 0, 0], sizes = [12, 8, 8, 128], strides = [1, 1, 1, 1]} : vector<12x12x8x128xf32> to vector<12x8x8x128xf32>
    %24 = vector.shape_cast %23 : vector<12x8x8x128xf32> to vector<768x128xf32>
    %25 = vector.extract_strided_slice %22 {offsets = [0, 1, 0, 0], sizes = [12, 8, 8, 128], strides = [1, 1, 1, 1]} : vector<12x12x8x128xf32> to vector<12x8x8x128xf32>
    %26 = vector.shape_cast %25 : vector<12x8x8x128xf32> to vector<768x128xf32>
    %c4_i32_8 = arith.constant 4 : i32
    %27 = tpu.dynamic_rotate %26 by %c4_i32_8 dim 1 : vector<768x128xf32>, i32 -> vector<768x128xf32>
    %28 = arith.addf %24, %27 : vector<768x128xf32>
    %29 = vector.extract_strided_slice %22 {offsets = [0, 2, 0, 0], sizes = [12, 8, 8, 128], strides = [1, 1, 1, 1]} : vector<12x12x8x128xf32> to vector<12x8x8x128xf32>
    %30 = vector.shape_cast %29 : vector<12x8x8x128xf32> to vector<768x128xf32>
    %c8_i32 = arith.constant 8 : i32
    %31 = tpu.dynamic_rotate %30 by %c8_i32 dim 1 : vector<768x128xf32>, i32 -> vector<768x128xf32>
    %32 = arith.addf %28, %31 : vector<768x128xf32>
    %33 = vector.extract_strided_slice %22 {offsets = [0, 3, 0, 0], sizes = [12, 8, 8, 128], strides = [1, 1, 1, 1]} : vector<12x12x8x128xf32> to vector<12x8x8x128xf32>
    %34 = vector.shape_cast %33 : vector<12x8x8x128xf32> to vector<768x128xf32>
    %c12_i32 = arith.constant 12 : i32
    %35 = tpu.dynamic_rotate %34 by %c12_i32 dim 1 : vector<768x128xf32>, i32 -> vector<768x128xf32>
    %36 = arith.addf %32, %35 : vector<768x128xf32>
    %37 = vector.extract_strided_slice %22 {offsets = [0, 4, 0, 0], sizes = [12, 8, 8, 128], strides = [1, 1, 1, 1]} : vector<12x12x8x128xf32> to vector<12x8x8x128xf32>
    %38 = vector.shape_cast %37 : vector<12x8x8x128xf32> to vector<768x128xf32>
    %c16_i32 = arith.constant 16 : i32
    %39 = tpu.dynamic_rotate %38 by %c16_i32 dim 1 : vector<768x128xf32>, i32 -> vector<768x128xf32>
    %40 = arith.addf %36, %39 : vector<768x128xf32>
    %41 = vector.shape_cast %40 : vector<768x128xf32> to vector<12x64x128xf32>
    %42 = vector.extract_strided_slice %41 {offsets = [0, 0, 0], sizes = [8, 64, 128], strides = [1, 1, 1]} : vector<12x64x128xf32> to vector<8x64x128xf32>
    %43 = vector.shape_cast %42 : vector<8x64x128xf32> to vector<512x128xf32>
    %44 = vector.extract_strided_slice %41 {offsets = [1, 0, 0], sizes = [8, 64, 128], strides = [1, 1, 1]} : vector<12x64x128xf32> to vector<8x64x128xf32>
    %45 = vector.shape_cast %44 : vector<8x64x128xf32> to vector<512x128xf32>
    %c20_i32 = arith.constant 20 : i32
    %46 = tpu.dynamic_rotate %45 by %c20_i32 dim 1 : vector<512x128xf32>, i32 -> vector<512x128xf32>
    %47 = arith.addf %43, %46 : vector<512x128xf32>
    %48 = vector.extract_strided_slice %41 {offsets = [2, 0, 0], sizes = [8, 64, 128], strides = [1, 1, 1]} : vector<12x64x128xf32> to vector<8x64x128xf32>
    %49 = vector.shape_cast %48 : vector<8x64x128xf32> to vector<512x128xf32>
    %c40_i32 = arith.constant 40 : i32
    %50 = tpu.dynamic_rotate %49 by %c40_i32 dim 1 : vector<512x128xf32>, i32 -> vector<512x128xf32>
    %51 = arith.addf %47, %50 : vector<512x128xf32>
    %52 = vector.extract_strided_slice %41 {offsets = [3, 0, 0], sizes = [8, 64, 128], strides = [1, 1, 1]} : vector<12x64x128xf32> to vector<8x64x128xf32>
    %53 = vector.shape_cast %52 : vector<8x64x128xf32> to vector<512x128xf32>
    %c60_i32 = arith.constant 60 : i32
    %54 = tpu.dynamic_rotate %53 by %c60_i32 dim 1 : vector<512x128xf32>, i32 -> vector<512x128xf32>
    %55 = arith.addf %51, %54 : vector<512x128xf32>
    %56 = vector.extract_strided_slice %41 {offsets = [4, 0, 0], sizes = [8, 64, 128], strides = [1, 1, 1]} : vector<12x64x128xf32> to vector<8x64x128xf32>
    %57 = vector.shape_cast %56 : vector<8x64x128xf32> to vector<512x128xf32>
    %c80_i32 = arith.constant 80 : i32
    %58 = tpu.dynamic_rotate %57 by %c80_i32 dim 1 : vector<512x128xf32>, i32 -> vector<512x128xf32>
    %59 = arith.addf %55, %58 : vector<512x128xf32>
    %60 = arith.truncf %59 : vector<512x128xf32> to vector<512x128xbf16>
    %c0_9 = arith.constant 0 : index
    %c0_10 = arith.constant 0 : index
    %61 = vector.load %arg4[%c0_9, %c0_10] : memref<128x128xbf16, #tpu.memory_space<vmem>>, vector<128x128xbf16>
    %cst_11 = arith.constant dense<0.000000e+00> : vector<512x128xf32>
    %62 = tpu.matmul %60, %61, %cst_11 {dimension_numbers = #tpu.dot_dimension_numbers<[1], [0], [0], [1], [0, 0, 1, 1], [], []>} : vector<512x128xbf16>, vector<128x128xbf16>, vector<512x128xf32> -> vector<512x128xf32>
    %c0_12 = arith.constant 0 : index
    %c0_13 = arith.constant 0 : index
    %63 = vector.load %arg5[%c0_12, %c0_13] : memref<1x128xf32, #tpu.memory_space<vmem>>, vector<1x128xf32>
    %64 = vector.broadcast %63 : vector<1x128xf32> to vector<512x128xf32>
    %65 = arith.addf %62, %64 : vector<512x128xf32>
    %cst_14 = arith.constant 0.000000e+00 : f32
    %66 = vector.broadcast %cst_14 : f32 to vector<512x128xf32>
    %67 = arith.maximumf %65, %66 : vector<512x128xf32>
    %68 = vector.shape_cast %67 : vector<512x128xf32> to vector<4x2x4x2x8x128xf32>
    %69 = vector.extract_strided_slice %68 {offsets = [0, 0, 0, 0, 0, 0], sizes = [4, 1, 4, 1, 8, 128], strides = [1, 1, 1, 1, 1, 1]} : vector<4x2x4x2x8x128xf32> to vector<4x1x4x1x8x128xf32>
    %70 = vector.shape_cast %69 : vector<4x1x4x1x8x128xf32> to vector<4x4x8x128xf32>
    %71 = vector.extract_strided_slice %68 {offsets = [0, 0, 0, 1, 0, 0], sizes = [4, 1, 4, 1, 8, 128], strides = [1, 1, 1, 1, 1, 1]} : vector<4x2x4x2x8x128xf32> to vector<4x1x4x1x8x128xf32>
    %72 = vector.shape_cast %71 : vector<4x1x4x1x8x128xf32> to vector<4x4x8x128xf32>
    %73 = arith.maximumf %70, %72 : vector<4x4x8x128xf32>
    %74 = vector.extract_strided_slice %68 {offsets = [0, 1, 0, 0, 0, 0], sizes = [4, 1, 4, 1, 8, 128], strides = [1, 1, 1, 1, 1, 1]} : vector<4x2x4x2x8x128xf32> to vector<4x1x4x1x8x128xf32>
    %75 = vector.shape_cast %74 : vector<4x1x4x1x8x128xf32> to vector<4x4x8x128xf32>
    %76 = vector.extract_strided_slice %68 {offsets = [0, 1, 0, 1, 0, 0], sizes = [4, 1, 4, 1, 8, 128], strides = [1, 1, 1, 1, 1, 1]} : vector<4x2x4x2x8x128xf32> to vector<4x1x4x1x8x128xf32>
    %77 = vector.shape_cast %76 : vector<4x1x4x1x8x128xf32> to vector<4x4x8x128xf32>
    %78 = arith.maximumf %75, %77 : vector<4x4x8x128xf32>
    %79 = arith.maximumf %73, %78 : vector<4x4x8x128xf32>
    %80 = vector.shape_cast %79 : vector<4x4x8x128xf32> to vector<16x8x128xf32>
    %81 = vector.extract_strided_slice %80 {offsets = [0, 0, 0], sizes = [1, 8, 128], strides = [1, 1, 1]} : vector<16x8x128xf32> to vector<1x8x128xf32>
    %82 = vector.shape_cast %81 : vector<1x8x128xf32> to vector<8x128xf32>
    %83 = vector.extract_strided_slice %80 {offsets = [8, 0, 0], sizes = [1, 8, 128], strides = [1, 1, 1]} : vector<16x8x128xf32> to vector<1x8x128xf32>
    %84 = vector.shape_cast %83 : vector<1x8x128xf32> to vector<8x128xf32>
    %85 = vector.extract_strided_slice %80 {offsets = [1, 0, 0], sizes = [1, 8, 128], strides = [1, 1, 1]} : vector<16x8x128xf32> to vector<1x8x128xf32>
    %86 = vector.shape_cast %85 : vector<1x8x128xf32> to vector<8x128xf32>
    %c16_i32_15 = arith.constant 16 : i32
    %87 = tpu.dynamic_rotate %86 by %c16_i32_15 dim 1 : vector<8x128xf32>, i32 -> vector<8x128xf32>
    %88 = arith.addf %82, %87 : vector<8x128xf32>
    %89 = vector.extract_strided_slice %80 {offsets = [9, 0, 0], sizes = [1, 8, 128], strides = [1, 1, 1]} : vector<16x8x128xf32> to vector<1x8x128xf32>
    %90 = vector.shape_cast %89 : vector<1x8x128xf32> to vector<8x128xf32>
    %c16_i32_16 = arith.constant 16 : i32
    %91 = tpu.dynamic_rotate %90 by %c16_i32_16 dim 1 : vector<8x128xf32>, i32 -> vector<8x128xf32>
    %92 = arith.addf %84, %91 : vector<8x128xf32>
    %93 = vector.extract_strided_slice %80 {offsets = [2, 0, 0], sizes = [1, 8, 128], strides = [1, 1, 1]} : vector<16x8x128xf32> to vector<1x8x128xf32>
    %94 = vector.shape_cast %93 : vector<1x8x128xf32> to vector<8x128xf32>
    %c32_i32 = arith.constant 32 : i32
    %95 = tpu.dynamic_rotate %94 by %c32_i32 dim 1 : vector<8x128xf32>, i32 -> vector<8x128xf32>
    %96 = arith.addf %88, %95 : vector<8x128xf32>
    %97 = vector.extract_strided_slice %80 {offsets = [10, 0, 0], sizes = [1, 8, 128], strides = [1, 1, 1]} : vector<16x8x128xf32> to vector<1x8x128xf32>
    %98 = vector.shape_cast %97 : vector<1x8x128xf32> to vector<8x128xf32>
    %c32_i32_17 = arith.constant 32 : i32
    %99 = tpu.dynamic_rotate %98 by %c32_i32_17 dim 1 : vector<8x128xf32>, i32 -> vector<8x128xf32>
    %100 = arith.addf %92, %99 : vector<8x128xf32>
    %101 = vector.extract_strided_slice %80 {offsets = [3, 0, 0], sizes = [1, 8, 128], strides = [1, 1, 1]} : vector<16x8x128xf32> to vector<1x8x128xf32>
    %102 = vector.shape_cast %101 : vector<1x8x128xf32> to vector<8x128xf32>
    %c48_i32 = arith.constant 48 : i32
    %103 = tpu.dynamic_rotate %102 by %c48_i32 dim 1 : vector<8x128xf32>, i32 -> vector<8x128xf32>
    %104 = arith.addf %96, %103 : vector<8x128xf32>
    %105 = vector.extract_strided_slice %80 {offsets = [11, 0, 0], sizes = [1, 8, 128], strides = [1, 1, 1]} : vector<16x8x128xf32> to vector<1x8x128xf32>
    %106 = vector.shape_cast %105 : vector<1x8x128xf32> to vector<8x128xf32>
    %c48_i32_18 = arith.constant 48 : i32
    %107 = tpu.dynamic_rotate %106 by %c48_i32_18 dim 1 : vector<8x128xf32>, i32 -> vector<8x128xf32>
    %108 = arith.addf %100, %107 : vector<8x128xf32>
    %109 = vector.extract_strided_slice %80 {offsets = [4, 0, 0], sizes = [1, 8, 128], strides = [1, 1, 1]} : vector<16x8x128xf32> to vector<1x8x128xf32>
    %110 = vector.shape_cast %109 : vector<1x8x128xf32> to vector<8x128xf32>
    %c64_i32 = arith.constant 64 : i32
    %111 = tpu.dynamic_rotate %110 by %c64_i32 dim 1 : vector<8x128xf32>, i32 -> vector<8x128xf32>
    %112 = arith.addf %104, %111 : vector<8x128xf32>
    %113 = vector.extract_strided_slice %80 {offsets = [12, 0, 0], sizes = [1, 8, 128], strides = [1, 1, 1]} : vector<16x8x128xf32> to vector<1x8x128xf32>
    %114 = vector.shape_cast %113 : vector<1x8x128xf32> to vector<8x128xf32>
    %c64_i32_19 = arith.constant 64 : i32
    %115 = tpu.dynamic_rotate %114 by %c64_i32_19 dim 1 : vector<8x128xf32>, i32 -> vector<8x128xf32>
    %116 = arith.addf %108, %115 : vector<8x128xf32>
    %117 = vector.extract_strided_slice %80 {offsets = [5, 0, 0], sizes = [1, 8, 128], strides = [1, 1, 1]} : vector<16x8x128xf32> to vector<1x8x128xf32>
    %118 = vector.shape_cast %117 : vector<1x8x128xf32> to vector<8x128xf32>
    %c80_i32_20 = arith.constant 80 : i32
    %119 = tpu.dynamic_rotate %118 by %c80_i32_20 dim 1 : vector<8x128xf32>, i32 -> vector<8x128xf32>
    %120 = arith.addf %112, %119 : vector<8x128xf32>
    %121 = vector.extract_strided_slice %80 {offsets = [13, 0, 0], sizes = [1, 8, 128], strides = [1, 1, 1]} : vector<16x8x128xf32> to vector<1x8x128xf32>
    %122 = vector.shape_cast %121 : vector<1x8x128xf32> to vector<8x128xf32>
    %c80_i32_21 = arith.constant 80 : i32
    %123 = tpu.dynamic_rotate %122 by %c80_i32_21 dim 1 : vector<8x128xf32>, i32 -> vector<8x128xf32>
    %124 = arith.addf %116, %123 : vector<8x128xf32>
    %125 = vector.extract_strided_slice %80 {offsets = [6, 0, 0], sizes = [1, 8, 128], strides = [1, 1, 1]} : vector<16x8x128xf32> to vector<1x8x128xf32>
    %126 = vector.shape_cast %125 : vector<1x8x128xf32> to vector<8x128xf32>
    %c96_i32 = arith.constant 96 : i32
    %127 = tpu.dynamic_rotate %126 by %c96_i32 dim 1 : vector<8x128xf32>, i32 -> vector<8x128xf32>
    %128 = arith.addf %120, %127 : vector<8x128xf32>
    %129 = vector.extract_strided_slice %80 {offsets = [14, 0, 0], sizes = [1, 8, 128], strides = [1, 1, 1]} : vector<16x8x128xf32> to vector<1x8x128xf32>
    %130 = vector.shape_cast %129 : vector<1x8x128xf32> to vector<8x128xf32>
    %c96_i32_22 = arith.constant 96 : i32
    %131 = tpu.dynamic_rotate %130 by %c96_i32_22 dim 1 : vector<8x128xf32>, i32 -> vector<8x128xf32>
    %132 = arith.addf %124, %131 : vector<8x128xf32>
    %133 = vector.extract_strided_slice %80 {offsets = [7, 0, 0], sizes = [1, 8, 128], strides = [1, 1, 1]} : vector<16x8x128xf32> to vector<1x8x128xf32>
    %134 = vector.shape_cast %133 : vector<1x8x128xf32> to vector<8x128xf32>
    %c112_i32 = arith.constant 112 : i32
    %135 = tpu.dynamic_rotate %134 by %c112_i32 dim 1 : vector<8x128xf32>, i32 -> vector<8x128xf32>
    %136 = arith.addf %128, %135 : vector<8x128xf32>
    %137 = vector.extract_strided_slice %80 {offsets = [15, 0, 0], sizes = [1, 8, 128], strides = [1, 1, 1]} : vector<16x8x128xf32> to vector<1x8x128xf32>
    %138 = vector.shape_cast %137 : vector<1x8x128xf32> to vector<8x128xf32>
    %c112_i32_23 = arith.constant 112 : i32
    %139 = tpu.dynamic_rotate %138 by %c112_i32_23 dim 1 : vector<8x128xf32>, i32 -> vector<8x128xf32>
    %140 = arith.addf %132, %139 : vector<8x128xf32>
    %141 = arith.truncf %136 : vector<8x128xf32> to vector<8x128xbf16>
    %c0_24 = arith.constant 0 : index
    %c0_25 = arith.constant 0 : index
    %142 = vector.load %arg6[%c0_24, %c0_25] : memref<128x128xbf16, #tpu.memory_space<vmem>>, vector<128x128xbf16>
    %cst_26 = arith.constant dense<0.000000e+00> : vector<8x128xf32>
    %143 = tpu.matmul %141, %142, %cst_26 {dimension_numbers = #tpu.dot_dimension_numbers<[1], [0], [0], [1], [0, 0, 1, 1], [], []>} : vector<8x128xbf16>, vector<128x128xbf16>, vector<8x128xf32> -> vector<8x128xf32>
    %144 = arith.truncf %140 : vector<8x128xf32> to vector<8x128xbf16>
    %c0_27 = arith.constant 0 : index
    %c0_28 = arith.constant 0 : index
    %145 = vector.load %arg7[%c0_27, %c0_28] : memref<128x128xbf16, #tpu.memory_space<vmem>>, vector<128x128xbf16>
    %cst_29 = arith.constant dense<0.000000e+00> : vector<8x128xf32>
    %146 = tpu.matmul %144, %145, %cst_29 {dimension_numbers = #tpu.dot_dimension_numbers<[1], [0], [0], [1], [0, 0, 1, 1], [], []>} : vector<8x128xbf16>, vector<128x128xbf16>, vector<8x128xf32> -> vector<8x128xf32>
    %147 = arith.addf %143, %146 : vector<8x128xf32>
    %c0_30 = arith.constant 0 : index
    %c0_31 = arith.constant 0 : index
    %148 = vector.load %arg8[%c0_30, %c0_31] : memref<1x128xf32, #tpu.memory_space<vmem>>, vector<1x128xf32>
    %149 = vector.broadcast %148 : vector<1x128xf32> to vector<8x128xf32>
    %150 = arith.addf %147, %149 : vector<8x128xf32>
    %cst_32 = arith.constant 0.000000e+00 : f32
    %151 = vector.broadcast %cst_32 : f32 to vector<8x128xf32>
    %152 = arith.maximumf %150, %151 : vector<8x128xf32>
    %153 = arith.truncf %152 : vector<8x128xf32> to vector<8x128xbf16>
    %c0_33 = arith.constant 0 : index
    %c0_34 = arith.constant 0 : index
    %154 = vector.load %arg9[%c0_33, %c0_34] : memref<128x128xbf16, #tpu.memory_space<vmem>>, vector<128x128xbf16>
    %cst_35 = arith.constant dense<0.000000e+00> : vector<8x128xf32>
    %155 = tpu.matmul %153, %154, %cst_35 {dimension_numbers = #tpu.dot_dimension_numbers<[1], [0], [0], [1], [0, 0, 1, 1], [], []>} : vector<8x128xbf16>, vector<128x128xbf16>, vector<8x128xf32> -> vector<8x128xf32>
    %c0_36 = arith.constant 0 : index
    %c0_37 = arith.constant 0 : index
    %156 = vector.load %arg10[%c0_36, %c0_37] : memref<1x128xf32, #tpu.memory_space<vmem>>, vector<1x128xf32>
    %157 = vector.broadcast %156 : vector<1x128xf32> to vector<8x128xf32>
    %158 = arith.addf %155, %157 : vector<8x128xf32>
    %c0_38 = arith.constant 0 : index
    %c0_39 = arith.constant 0 : index
    %159 = vector.load %arg11[%c0_38, %c0_39] : memref<8x128xf32, #tpu.memory_space<vmem>>, vector<8x128xf32>
    tpu.vector_store %arg11[%c0_38, %c0_39], %158 {strides = array<i32>} : memref<8x128xf32, #tpu.memory_space<vmem>>, vector<8x128xf32>,
    return
  }
  func.func @transform_0(%arg0: i32) -> (i32, i32, i32, i32) {
    %c0_i32 = arith.constant 0 : i32
    %c0_i32_0 = arith.constant 0 : i32
    %c0_i32_1 = arith.constant 0 : i32
    %c0_i32_2 = arith.constant 0 : i32
    return %c0_i32, %c0_i32_0, %arg0, %c0_i32_1 : i32, i32, i32, i32
  }
  func.func @transform_1(%arg0: i32) -> (i32, i32) {
    %c0_i32 = arith.constant 0 : i32
    %c0_i32_0 = arith.constant 0 : i32
    %c0_i32_1 = arith.constant 0 : i32
    return %c0_i32, %c0_i32_0 : i32, i32
  }
  func.func @transform_2(%arg0: i32) -> (i32, i32) {
    %c0_i32 = arith.constant 0 : i32
    %c0_i32_0 = arith.constant 0 : i32
    %c0_i32_1 = arith.constant 0 : i32
    return %c0_i32, %c0_i32_0 : i32, i32
  }
  func.func @transform_3(%arg0: i32) -> (i32, i32) {
    %c0_i32 = arith.constant 0 : i32
    %c0_i32_0 = arith.constant 0 : i32
    %c0_i32_1 = arith.constant 0 : i32
    return %c0_i32, %c0_i32_0 : i32, i32
  }
  func.func @transform_4(%arg0: i32) -> (i32, i32) {
    %c0_i32 = arith.constant 0 : i32
    %c0_i32_0 = arith.constant 0 : i32
    %c0_i32_1 = arith.constant 0 : i32
    return %c0_i32, %c0_i32_0 : i32, i32
  }
  func.func @transform_5(%arg0: i32) -> (i32, i32) {
    %c0_i32 = arith.constant 0 : i32
    %c0_i32_0 = arith.constant 0 : i32
    %c0_i32_1 = arith.constant 0 : i32
    return %c0_i32, %c0_i32_0 : i32, i32
  }
  func.func @transform_6(%arg0: i32) -> (i32, i32) {
    %c0_i32 = arith.constant 0 : i32
    %c0_i32_0 = arith.constant 0 : i32
    %c0_i32_1 = arith.constant 0 : i32
    return %c0_i32, %c0_i32_0 : i32, i32
  }
  func.func @transform_7(%arg0: i32) -> (i32, i32) {
    %c0_i32 = arith.constant 0 : i32
    %c0_i32_0 = arith.constant 0 : i32
    %c0_i32_1 = arith.constant 0 : i32
    return %c0_i32, %c0_i32_0 : i32, i32
  }
  func.func @transform_8(%arg0: i32) -> (i32, i32) {
    %c0_i32 = arith.constant 0 : i32
    %c0_i32_0 = arith.constant 0 : i32
    %c0_i32_1 = arith.constant 0 : i32
    return %c0_i32, %c0_i32_0 : i32, i32
  }
  func.func @transform_9(%arg0: i32) -> (i32, i32) {
    %c0_i32 = arith.constant 0 : i32
    %c0_i32_0 = arith.constant 0 : i32
    %c0_i32_1 = arith.constant 0 : i32
    return %c0_i32, %c0_i32_0 : i32, i32
  }
  func.func @transform_10(%arg0: i32) -> (i32, i32) {
    %c0_i32 = arith.constant 0 : i32
    %c0_i32_0 = arith.constant 0 : i32
    return %arg0, %c0_i32 : i32, i32
  }
}

</mosaic_0001>

<llo_original>
// kernel: net_forward.1
$region0: #{net_forward.1}
  #allocation0 [shape = 'u32[]', space=smem, size = 0x4, offset = 0x4, fixed_abs, tag = 'smem constant byte address 0x4 - core index']
  #allocation1 [shape = 'u32[72,128]{1,0:T(1,128)}', space=vmem, size = 0x9000, scoped, tag = 'internal scratch']
  %s0 = inlined_call_operand.vmem [shape: bf16[12,12,8,128], index: 0, kind: input, shape index: {}]
  %s1 = inlined_call_operand.vmem [shape: bf16[128,128], index: 1, kind: input, shape index: {}]
  %s2 = inlined_call_operand.vmem [shape: f32[1,128], index: 2, kind: input, shape index: {}]
  %s3 = inlined_call_operand.vmem [shape: bf16[128,128], index: 3, kind: input, shape index: {}]
  %s4 = inlined_call_operand.vmem [shape: f32[1,128], index: 4, kind: input, shape index: {}]
  %s5 = inlined_call_operand.vmem [shape: bf16[128,128], index: 5, kind: input, shape index: {}]
  %s6 = inlined_call_operand.vmem [shape: bf16[128,128], index: 6, kind: input, shape index: {}]
  %s7 = inlined_call_operand.vmem [shape: f32[1,128], index: 7, kind: input, shape index: {}]
  %s8 = inlined_call_operand.vmem [shape: bf16[128,128], index: 8, kind: input, shape index: {}]
  %s9 = inlined_call_operand.vmem [shape: f32[1,128], index: 9, kind: input, shape index: {}]
  %s10 = inlined_call_operand.vmem [shape: f32[8,128], index: 10, kind: output, shape index: {}]
  %s11 = sld [smem:[#allocation0]]
  $region50: #{net_forward.1} parent=0
    _
  %s13 = ssub.s32 1, %s11
  %s14 = scalar_select 0, %s13, %s11
  // Predicated region
  $region2: #{net_forward.1} parent=0 // pred_check
    _
  $region3: #{net_forward.1} parent=0 // pred_check_branch
    %16 = sbr.rel (0) target = $region5
  $region4: #{net_forward.1} parent=0 // pred_region
    _
  $region5: #{net_forward.1} parent=0 // pred_fallthru
    _
  // Predicated region
  $region6: #{net_forward.1} parent=0 // pred_check
    _
  $region7: #{net_forward.1} parent=0 // pred_check_branch
    %18 = sbr.rel (0) target = $region9
  $region8: #{net_forward.1} parent=0 // pred_region
    _
  $region9: #{net_forward.1} parent=0 // pred_fallthru
    _
  // Predicated region
  $region10: #{net_forward.1} parent=0 // pred_check
    _
  $region11: #{net_forward.1} parent=0 // pred_check_branch
    %20 = sbr.rel (0) target = $region13
  $region12: #{net_forward.1} parent=0 // pred_region
    _
  $region13: #{net_forward.1} parent=0 // pred_fallthru
    _
  // Predicated region
  $region14: #{net_forward.1} parent=0 // pred_check
    _
  $region15: #{net_forward.1} parent=0 // pred_check_branch
    %22 = sbr.rel (0) target = $region17
  $region16: #{net_forward.1} parent=0 // pred_region
    _
  $region17: #{net_forward.1} parent=0 // pred_fallthru
    _
  // Predicated region
  $region18: #{net_forward.1} parent=0 // pred_check
    _
  $region19: #{net_forward.1} parent=0 // pred_check_branch
    %24 = sbr.rel (0) target = $region21
  $region20: #{net_forward.1} parent=0 // pred_region
    _
  $region21: #{net_forward.1} parent=0 // pred_fallthru
    _
  // Predicated region
  $region22: #{net_forward.1} parent=0 // pred_check
    _
  $region23: #{net_forward.1} parent=0 // pred_check_branch
    %26 = sbr.rel (0) target = $region25
  $region24: #{net_forward.1} parent=0 // pred_region
    _
  $region25: #{net_forward.1} parent=0 // pred_fallthru
    _
  // Predicated region
  $region26: #{net_forward.1} parent=0 // pred_check
    _
  $region27: #{net_forward.1} parent=0 // pred_check_branch
    %28 = sbr.rel (0) target = $region29
  $region28: #{net_forward.1} parent=0 // pred_region
    _
  $region29: #{net_forward.1} parent=0 // pred_fallthru
    _
  // Predicated region
  $region30: #{net_forward.1} parent=0 // pred_check
    _
  $region31: #{net_forward.1} parent=0 // pred_check_branch
    %30 = sbr.rel (0) target = $region33
  $region32: #{net_forward.1} parent=0 // pred_region
    _
  $region33: #{net_forward.1} parent=0 // pred_fallthru
    _
  // Predicated region
  $region34: #{net_forward.1} parent=0 // pred_check
    _
  $region35: #{net_forward.1} parent=0 // pred_check_branch
    %32 = sbr.rel (0) target = $region37
  $region36: #{net_forward.1} parent=0 // pred_region
    _
  $region37: #{net_forward.1} parent=0 // pred_fallthru
    _
  // Predicated region
  $region38: #{net_forward.1} parent=0 // pred_check
    _
  $region39: #{net_forward.1} parent=0 // pred_check_branch
    %34 = sbr.rel (0) target = $region41
  $region40: #{net_forward.1} parent=0 // pred_region
    _
  $region41: #{net_forward.1} parent=0 // pred_fallthru
    _
  %v35 = vld [vmem:[%s0] sm:$0xf]
  %v36 = vld [vmem:[%s0 + $0x4] sm:$0xf]
  %v37 = vld [vmem:[%s0 + $0x8] sm:$0xf]
  %v38 = vld [vmem:[%s0 + $0xc] sm:$0xf]
  %v39 = vld [vmem:[%s0 + $0x10] sm:$0xf]
  %v40 = vld [vmem:[%s0 + $0x14] sm:$0xf]
  %v41 = vld [vmem:[%s0 + $0x18] sm:$0xf]
  %v42 = vld [vmem:[%s0 + $0x1c] sm:$0xf]
  %v43 = vld [vmem:[%s0 + $0x20] sm:$0xf]
  %v44 = vld [vmem:[%s0 + $0x24] sm:$0xf]
  %v45 = vld [vmem:[%s0 + $0x28] sm:$0xf]
  %v46 = vld [vmem:[%s0 + $0x2c] sm:$0xf]
  %v47 = vld [vmem:[%s0 + $0x30] sm:$0xf]
  %v48 = vld [vmem:[%s0 + $0x34] sm:$0xf]
  %v49 = vld [vmem:[%s0 + $0x38] sm:$0xf]
  %v50 = vld [vmem:[%s0 + $0x3c] sm:$0xf]
  %v51 = vld [vmem:[%s0 + $0x40] sm:$0xf]
  %v52 = vld [vmem:[%s0 + $0x44] sm:$0xf]
  %v53 = vld [vmem:[%s0 + $0x48] sm:$0xf]
  %v54 = vld [vmem:[%s0 + $0x4c] sm:$0xf]
  %v55 = vld [vmem:[%s0 + $0x50] sm:$0xf]
  %v56 = vld [vmem:[%s0 + $0x54] sm:$0xf]
  %v57 = vld [vmem:[%s0 + $0x58] sm:$0xf]
  %v58 = vld [vmem:[%s0 + $0x5c] sm:$0xf]
  %v59 = vld [vmem:[%s0 + $0x60] sm:$0xf]
  %v60 = vld [vmem:[%s0 + $0x64] sm:$0xf]
  %v61 = vld [vmem:[%s0 + $0x68] sm:$0xf]
  %v62 = vld [vmem:[%s0 + $0x6c] sm:$0xf]
  %v63 = vld [vmem:[%s0 + $0x70] sm:$0xf]
  %v64 = vld [vmem:[%s0 + $0x74] sm:$0xf]
  %v65 = vld [vmem:[%s0 + $0x78] sm:$0xf]
  %v66 = vld [vmem:[%s0 + $0x7c] sm:$0xf]
  %v67 = vld [vmem:[%s0 + $0x80] sm:$0xf]
  %v68 = vld [vmem:[%s0 + $0x84] sm:$0xf]
  %v69 = vld [vmem:[%s0 + $0x88] sm:$0xf]
  %v70 = vld [vmem:[%s0 + $0x8c] sm:$0xf]
  %v71 = vld [vmem:[%s0 + $0x90] sm:$0xf]
  %v72 = vld [vmem:[%s0 + $0x94] sm:$0xf]
  %v73 = vld [vmem:[%s0 + $0x98] sm:$0xf]
  %v74 = vld [vmem:[%s0 + $0x9c] sm:$0xf]
  %v75 = vld [vmem:[%s0 + $0xa0] sm:$0xf]
  %v76 = vld [vmem:[%s0 + $0xa4] sm:$0xf]
  %v77 = vld [vmem:[%s0 + $0xa8] sm:$0xf]
  %v78 = vld [vmem:[%s0 + $0xac] sm:$0xf]
  %v79 = vld [vmem:[%s0 + $0xb0] sm:$0xf]
  %v80 = vld [vmem:[%s0 + $0xb4] sm:$0xf]
  %v81 = vld [vmem:[%s0 + $0xb8] sm:$0xf]
  %v82 = vld [vmem:[%s0 + $0xbc] sm:$0xf]
  %v83 = vld [vmem:[%s0 + $0xc0] sm:$0xf]
  %v84 = vld [vmem:[%s0 + $0xc4] sm:$0xf]
  %v85 = vld [vmem:[%s0 + $0xc8] sm:$0xf]
  %v86 = vld [vmem:[%s0 + $0xcc] sm:$0xf]
  %v87 = vld [vmem:[%s0 + $0xd0] sm:$0xf]
  %v88 = vld [vmem:[%s0 + $0xd4] sm:$0xf]
  %v89 = vld [vmem:[%s0 + $0xd8] sm:$0xf]
  %v90 = vld [vmem:[%s0 + $0xdc] sm:$0xf]
  %v91 = vld [vmem:[%s0 + $0xe0] sm:$0xf]
  %v92 = vld [vmem:[%s0 + $0xe4] sm:$0xf]
  %v93 = vld [vmem:[%s0 + $0xe8] sm:$0xf]
  %v94 = vld [vmem:[%s0 + $0xec] sm:$0xf]
  %v95 = vld [vmem:[%s0 + $0xf0] sm:$0xf]
  %v96 = vld [vmem:[%s0 + $0xf4] sm:$0xf]
  %v97 = vld [vmem:[%s0 + $0xf8] sm:$0xf]
  %v98 = vld [vmem:[%s0 + $0xfc] sm:$0xf]
  %v99 = vld [vmem:[%s0 + $0x100] sm:$0xf]
  %v100 = vld [vmem:[%s0 + $0x104] sm:$0xf]
  %v101 = vld [vmem:[%s0 + $0x108] sm:$0xf]
  %v102 = vld [vmem:[%s0 + $0x10c] sm:$0xf]
  %v103 = vld [vmem:[%s0 + $0x110] sm:$0xf]
  %v104 = vld [vmem:[%s0 + $0x114] sm:$0xf]
  %v105 = vld [vmem:[%s0 + $0x118] sm:$0xf]
  %v106 = vld [vmem:[%s0 + $0x11c] sm:$0xf]
  %v107 = vld [vmem:[%s0 + $0x120] sm:$0xf]
  %v108 = vld [vmem:[%s0 + $0x124] sm:$0xf]
  %v109 = vld [vmem:[%s0 + $0x128] sm:$0xf]
  %v110 = vld [vmem:[%s0 + $0x12c] sm:$0xf]
  %v111 = vld [vmem:[%s0 + $0x130] sm:$0xf]
  %v112 = vld [vmem:[%s0 + $0x134] sm:$0xf]
  %v113 = vld [vmem:[%s0 + $0x138] sm:$0xf]
  %v114 = vld [vmem:[%s0 + $0x13c] sm:$0xf]
  %v115 = vld [vmem:[%s0 + $0x140] sm:$0xf]
  %v116 = vld [vmem:[%s0 + $0x144] sm:$0xf]
  %v117 = vld [vmem:[%s0 + $0x148] sm:$0xf]
  %v118 = vld [vmem:[%s0 + $0x14c] sm:$0xf]
  %v119 = vld [vmem:[%s0 + $0x150] sm:$0xf]
  %v120 = vld [vmem:[%s0 + $0x154] sm:$0xf]
  %v121 = vld [vmem:[%s0 + $0x158] sm:$0xf]
  %v122 = vld [vmem:[%s0 + $0x15c] sm:$0xf]
  %v123 = vld [vmem:[%s0 + $0x160] sm:$0xf]
  %v124 = vld [vmem:[%s0 + $0x164] sm:$0xf]
  %v125 = vld [vmem:[%s0 + $0x168] sm:$0xf]
  %v126 = vld [vmem:[%s0 + $0x16c] sm:$0xf]
  %v127 = vld [vmem:[%s0 + $0x170] sm:$0xf]
  %v128 = vld [vmem:[%s0 + $0x174] sm:$0xf]
  %v129 = vld [vmem:[%s0 + $0x178] sm:$0xf]
  %v130 = vld [vmem:[%s0 + $0x17c] sm:$0xf]
  %v131 = vld [vmem:[%s0 + $0x180] sm:$0xf]
  %v132 = vld [vmem:[%s0 + $0x184] sm:$0xf]
  %v133 = vld [vmem:[%s0 + $0x188] sm:$0xf]
  %v134 = vld [vmem:[%s0 + $0x18c] sm:$0xf]
  %v135 = vld [vmem:[%s0 + $0x190] sm:$0xf]
  %v136 = vld [vmem:[%s0 + $0x194] sm:$0xf]
  %v137 = vld [vmem:[%s0 + $0x198] sm:$0xf]
  %v138 = vld [vmem:[%s0 + $0x19c] sm:$0xf]
  %v139 = vld [vmem:[%s0 + $0x1a0] sm:$0xf]
  %v140 = vld [vmem:[%s0 + $0x1a4] sm:$0xf]
  %v141 = vld [vmem:[%s0 + $0x1a8] sm:$0xf]
  %v142 = vld [vmem:[%s0 + $0x1ac] sm:$0xf]
  %v143 = vld [vmem:[%s0 + $0x1b0] sm:$0xf]
  %v144 = vld [vmem:[%s0 + $0x1b4] sm:$0xf]
  %v145 = vld [vmem:[%s0 + $0x1b8] sm:$0xf]
  %v146 = vld [vmem:[%s0 + $0x1bc] sm:$0xf]
  %v147 = vld [vmem:[%s0 + $0x1c0] sm:$0xf]
  %v148 = vld [vmem:[%s0 + $0x1c4] sm:$0xf]
  %v149 = vld [vmem:[%s0 + $0x1c8] sm:$0xf]
  %v150 = vld [vmem:[%s0 + $0x1cc] sm:$0xf]
  %v151 = vld [vmem:[%s0 + $0x1d0] sm:$0xf]
  %v152 = vld [vmem:[%s0 + $0x1d4] sm:$0xf]
  %v153 = vld [vmem:[%s0 + $0x1d8] sm:$0xf]
  %v154 = vld [vmem:[%s0 + $0x1dc] sm:$0xf]
  %v155 = vld [vmem:[%s0 + $0x1e0] sm:$0xf]
  %v156 = vld [vmem:[%s0 + $0x1e4] sm:$0xf]
  %v157 = vld [vmem:[%s0 + $0x1e8] sm:$0xf]
  %v158 = vld [vmem:[%s0 + $0x1ec] sm:$0xf]
  %v159 = vld [vmem:[%s0 + $0x1f0] sm:$0xf]
  %v160 = vld [vmem:[%s0 + $0x1f4] sm:$0xf]
  %v161 = vld [vmem:[%s0 + $0x1f8] sm:$0xf]
  %v162 = vld [vmem:[%s0 + $0x1fc] sm:$0xf]
  %v163 = vld [vmem:[%s0 + $0x200] sm:$0xf]
  %v164 = vld [vmem:[%s0 + $0x204] sm:$0xf]
  %v165 = vld [vmem:[%s0 + $0x208] sm:$0xf]
  %v166 = vld [vmem:[%s0 + $0x20c] sm:$0xf]
  %v167 = vld [vmem:[%s0 + $0x210] sm:$0xf]
  %v168 = vld [vmem:[%s0 + $0x214] sm:$0xf]
  %v169 = vld [vmem:[%s0 + $0x218] sm:$0xf]
  %v170 = vld [vmem:[%s0 + $0x21c] sm:$0xf]
  %v171 = vld [vmem:[%s0 + $0x220] sm:$0xf]
  %v172 = vld [vmem:[%s0 + $0x224] sm:$0xf]
  %v173 = vld [vmem:[%s0 + $0x228] sm:$0xf]
  %v174 = vld [vmem:[%s0 + $0x22c] sm:$0xf]
  %v175 = vld [vmem:[%s0 + $0x230] sm:$0xf]
  %v176 = vld [vmem:[%s0 + $0x234] sm:$0xf]
  %v177 = vld [vmem:[%s0 + $0x238] sm:$0xf]
  %v178 = vld [vmem:[%s0 + $0x23c] sm:$0xf]
  %v179 = vld [vmem:[%s1] sm:$0xf]
  %v180 = vld [vmem:[%s1 + $0x4] sm:$0xf]
  %v181 = vld [vmem:[%s1 + $0x8] sm:$0xf]
  %v182 = vld [vmem:[%s1 + $0xc] sm:$0xf]
  %v183 = vld [vmem:[%s1 + $0x10] sm:$0xf]
  %v184 = vld [vmem:[%s1 + $0x14] sm:$0xf]
  %v185 = vld [vmem:[%s1 + $0x18] sm:$0xf]
  %v186 = vld [vmem:[%s1 + $0x1c] sm:$0xf]
  %v187 = vld [vmem:[%s1 + $0x20] sm:$0xf]
  %v188 = vld [vmem:[%s1 + $0x24] sm:$0xf]
  %v189 = vld [vmem:[%s1 + $0x28] sm:$0xf]
  %v190 = vld [vmem:[%s1 + $0x2c] sm:$0xf]
  %v191 = vld [vmem:[%s1 + $0x30] sm:$0xf]
  %v192 = vld [vmem:[%s1 + $0x34] sm:$0xf]
  %v193 = vld [vmem:[%s1 + $0x38] sm:$0xf]
  %v194 = vld [vmem:[%s1 + $0x3c] sm:$0xf]
  %v339 = vunpack.c.l.b16 %v35
  %v340 = vunpack.c.l.b16 %v36
  %v341 = vunpack.c.l.b16 %v37
  %v342 = vunpack.c.l.b16 %v38
  %v343 = vunpack.c.l.b16 %v39
  %v344 = vunpack.c.l.b16 %v40
  %v345 = vunpack.c.l.b16 %v41
  %v346 = vunpack.c.l.b16 %v42
  %v347 = vunpack.c.l.b16 %v43
  %v348 = vunpack.c.l.b16 %v44
  %v349 = vunpack.c.l.b16 %v45
  %v350 = vunpack.c.l.b16 %v46
  %v351 = vunpack.c.l.b16 %v47
  %v352 = vunpack.c.l.b16 %v48
  %v353 = vunpack.c.l.b16 %v49
  %v354 = vunpack.c.l.b16 %v50
  %v355 = vunpack.c.l.b16 %v51
  %v356 = vunpack.c.l.b16 %v52
  %v357 = vunpack.c.l.b16 %v53
  %v358 = vunpack.c.l.b16 %v54
  %v359 = vunpack.c.l.b16 %v55
  %v360 = vunpack.c.l.b16 %v56
  %v361 = vunpack.c.l.b16 %v57
  %v362 = vunpack.c.l.b16 %v58
  %v363 = vunpack.c.l.b16 %v59
  %v364 = vunpack.c.l.b16 %v60
  %v365 = vunpack.c.l.b16 %v61
  %v366 = vunpack.c.l.b16 %v62
  %v367 = vunpack.c.l.b16 %v63
  %v368 = vunpack.c.l.b16 %v64
  %v369 = vunpack.c.l.b16 %v65
  %v370 = vunpack.c.l.b16 %v66
  %v371 = vunpack.c.l.b16 %v67
  %v372 = vunpack.c.l.b16 %v68
  %v373 = vunpack.c.l.b16 %v69
  %v374 = vunpack.c.l.b16 %v70
  %v375 = vunpack.c.l.b16 %v71
  %v376 = vunpack.c.l.b16 %v72
  %v377 = vunpack.c.l.b16 %v73
  %v378 = vunpack.c.l.b16 %v74
  %v379 = vunpack.c.l.b16 %v75
  %v380 = vunpack.c.l.b16 %v76
  %v381 = vunpack.c.l.b16 %v77
  %v382 = vunpack.c.l.b16 %v78
  %v383 = vunpack.c.l.b16 %v79
  %v384 = vunpack.c.l.b16 %v80
  %v385 = vunpack.c.l.b16 %v81
  %v386 = vunpack.c.l.b16 %v82
  %v387 = vunpack.c.l.b16 %v83
  %v388 = vunpack.c.l.b16 %v84
  %v389 = vunpack.c.l.b16 %v85
  %v390 = vunpack.c.l.b16 %v86
  %v391 = vunpack.c.l.b16 %v87
  %v392 = vunpack.c.l.b16 %v88
  %v393 = vunpack.c.l.b16 %v89
  %v394 = vunpack.c.l.b16 %v90
  %v395 = vunpack.c.l.b16 %v91
  %v396 = vunpack.c.l.b16 %v92
  %v397 = vunpack.c.l.b16 %v93
  %v398 = vunpack.c.l.b16 %v94
  %v399 = vunpack.c.l.b16 %v95
  %v400 = vunpack.c.l.b16 %v96
  %v401 = vunpack.c.l.b16 %v97
  %v402 = vunpack.c.l.b16 %v98
  %v403 = vunpack.c.l.b16 %v99
  %v404 = vunpack.c.l.b16 %v100
  %v405 = vunpack.c.l.b16 %v101
  %v406 = vunpack.c.l.b16 %v102
  %v407 = vunpack.c.l.b16 %v103
  %v408 = vunpack.c.l.b16 %v104
  %v409 = vunpack.c.l.b16 %v105
  %v410 = vunpack.c.l.b16 %v106
  %v411 = vunpack.c.l.b16 %v107
  %v412 = vunpack.c.l.b16 %v108
  %v413 = vunpack.c.l.b16 %v109
  %v414 = vunpack.c.l.b16 %v110
  %v415 = vunpack.c.l.b16 %v111
  %v416 = vunpack.c.l.b16 %v112
  %v417 = vunpack.c.l.b16 %v113
  %v418 = vunpack.c.l.b16 %v114
  %v419 = vunpack.c.l.b16 %v115
  %v420 = vunpack.c.l.b16 %v116
  %v421 = vunpack.c.l.b16 %v117
  %v422 = vunpack.c.l.b16 %v118
  %v423 = vunpack.c.l.b16 %v119
  %v424 = vunpack.c.l.b16 %v120
  %v425 = vunpack.c.l.b16 %v121
  %v426 = vunpack.c.l.b16 %v122
  %v427 = vunpack.c.l.b16 %v123
  %v428 = vunpack.c.l.b16 %v124
  %v429 = vunpack.c.l.b16 %v125
  %v430 = vunpack.c.l.b16 %v126
  %v431 = vunpack.c.l.b16 %v127
  %v432 = vunpack.c.l.b16 %v128
  %v433 = vunpack.c.l.b16 %v129
  %v434 = vunpack.c.l.b16 %v130
  %v435 = vunpack.c.l.b16 %v131
  %v436 = vunpack.c.l.b16 %v132
  %v437 = vunpack.c.l.b16 %v133
  %v438 = vunpack.c.l.b16 %v134
  %v439 = vunpack.c.l.b16 %v135
  %v440 = vunpack.c.l.b16 %v136
  %v441 = vunpack.c.l.b16 %v137
  %v442 = vunpack.c.l.b16 %v138
  %v443 = vunpack.c.l.b16 %v139
  %v444 = vunpack.c.l.b16 %v140
  %v445 = vunpack.c.l.b16 %v141
  %v446 = vunpack.c.l.b16 %v142
  %v447 = vunpack.c.l.b16 %v143
  %v448 = vunpack.c.l.b16 %v144
  %v449 = vunpack.c.l.b16 %v145
  %v450 = vunpack.c.l.b16 %v146
  %v451 = vunpack.c.l.b16 %v147
  %v452 = vunpack.c.l.b16 %v148
  %v453 = vunpack.c.l.b16 %v149
  %v454 = vunpack.c.l.b16 %v150
  %v455 = vunpack.c.l.b16 %v151
  %v456 = vunpack.c.l.b16 %v152
  %v457 = vunpack.c.l.b16 %v153
  %v458 = vunpack.c.l.b16 %v154
  %v459 = vunpack.c.l.b16 %v155
  %v460 = vunpack.c.l.b16 %v156
  %v461 = vunpack.c.l.b16 %v157
  %v462 = vunpack.c.l.b16 %v158
  %v463 = vunpack.c.l.b16 %v159
  %v464 = vunpack.c.l.b16 %v160
  %v465 = vunpack.c.l.b16 %v161
  %v466 = vunpack.c.l.b16 %v162
  %v467 = vunpack.c.l.b16 %v163
  %v468 = vunpack.c.l.b16 %v164
  %v469 = vunpack.c.l.b16 %v165
  %v470 = vunpack.c.l.b16 %v166
  %v471 = vunpack.c.l.b16 %v167
  %v472 = vunpack.c.l.b16 %v168
  %v473 = vunpack.c.l.b16 %v169
  %v474 = vunpack.c.l.b16 %v170
  %v475 = vunpack.c.l.b16 %v171
  %v476 = vunpack.c.l.b16 %v172
  %v477 = vunpack.c.l.b16 %v173
  %v478 = vunpack.c.l.b16 %v174
  %v479 = vunpack.c.l.b16 %v175
  %v480 = vunpack.c.l.b16 %v176
  %v481 = vunpack.c.l.b16 %v177
  %v482 = vunpack.c.l.b16 %v178
  %v483 = vpack.c.b16 %v340, %v339
  %v484 = vpack.c.b16 %v342, %v341
  %v485 = vpack.c.b16 %v344, %v343
  %v486 = vpack.c.b16 %v346, %v345
  %v487 = vpack.c.b16 %v348, %v347
  %v488 = vpack.c.b16 %v350, %v349
  %v489 = vpack.c.b16 %v352, %v351
  %v490 = vpack.c.b16 %v354, %v353
  %v491 = vpack.c.b16 %v356, %v355
  %v492 = vpack.c.b16 %v358, %v357
  %v493 = vpack.c.b16 %v360, %v359
  %v494 = vpack.c.b16 %v362, %v361
  %v495 = vpack.c.b16 %v364, %v363
  %v496 = vpack.c.b16 %v366, %v365
  %v497 = vpack.c.b16 %v368, %v367
  %v498 = vpack.c.b16 %v370, %v369
  %v499 = vpack.c.b16 %v372, %v371
  %v500 = vpack.c.b16 %v374, %v373
  %v501 = vpack.c.b16 %v376, %v375
  %v502 = vpack.c.b16 %v378, %v377
  %v503 = vpack.c.b16 %v380, %v379
  %v504 = vpack.c.b16 %v382, %v381
  %v505 = vpack.c.b16 %v384, %v383
  %v506 = vpack.c.b16 %v386, %v385
  %v507 = vpack.c.b16 %v388, %v387
  %v508 = vpack.c.b16 %v390, %v389
  %v509 = vpack.c.b16 %v392, %v391
  %v510 = vpack.c.b16 %v394, %v393
  %v511 = vpack.c.b16 %v396, %v395
  %v512 = vpack.c.b16 %v398, %v397
  %v513 = vpack.c.b16 %v400, %v399
  %v514 = vpack.c.b16 %v402, %v401
  %v515 = vpack.c.b16 %v404, %v403
  %v516 = vpack.c.b16 %v406, %v405
  %v517 = vpack.c.b16 %v408, %v407
  %v518 = vpack.c.b16 %v410, %v409
  %v519 = vpack.c.b16 %v412, %v411
  %v520 = vpack.c.b16 %v414, %v413
  %v521 = vpack.c.b16 %v416, %v415
  %v522 = vpack.c.b16 %v418, %v417
  %v523 = vpack.c.b16 %v420, %v419
  %v524 = vpack.c.b16 %v422, %v421
  %v525 = vpack.c.b16 %v424, %v423
  %v526 = vpack.c.b16 %v426, %v425
  %v527 = vpack.c.b16 %v428, %v427
  %v528 = vpack.c.b16 %v430, %v429
  %v529 = vpack.c.b16 %v432, %v431
  %v530 = vpack.c.b16 %v434, %v433
  %v531 = vpack.c.b16 %v436, %v435
  %v532 = vpack.c.b16 %v438, %v437
  %v533 = vpack.c.b16 %v440, %v439
  %v534 = vpack.c.b16 %v442, %v441
  %v535 = vpack.c.b16 %v444, %v443
  %v536 = vpack.c.b16 %v446, %v445
  %v537 = vpack.c.b16 %v448, %v447
  %v538 = vpack.c.b16 %v450, %v449
  %v539 = vpack.c.b16 %v452, %v451
  %v540 = vpack.c.b16 %v454, %v453
  %v541 = vpack.c.b16 %v456, %v455
  %v542 = vpack.c.b16 %v458, %v457
  %v543 = vpack.c.b16 %v460, %v459
  %v544 = vpack.c.b16 %v462, %v461
  %v545 = vpack.c.b16 %v464, %v463
  %v546 = vpack.c.b16 %v466, %v465
  %v547 = vpack.c.b16 %v468, %v467
  %v548 = vpack.c.b16 %v470, %v469
  %v549 = vpack.c.b16 %v472, %v471
  %v550 = vpack.c.b16 %v474, %v473
  %v551 = vpack.c.b16 %v476, %v475
  %v552 = vpack.c.b16 %v478, %v477
  %v553 = vpack.c.b16 %v480, %v479
  %v554 = vpack.c.b16 %v482, %v481
  %v643 = vunpack.c.l.b16 %v179
  %v644 = vunpack.c.l.b16 %v180
  %v645 = vunpack.c.l.b16 %v181
  %v646 = vunpack.c.l.b16 %v182
  %v647 = vunpack.c.l.b16 %v183
  %v648 = vunpack.c.l.b16 %v184
  %v649 = vunpack.c.l.b16 %v185
  %v650 = vunpack.c.l.b16 %v186
  %v651 = vunpack.c.l.b16 %v187
  %v652 = vunpack.c.l.b16 %v188
  %v653 = vunpack.c.l.b16 %v189
  %v654 = vunpack.c.l.b16 %v190
  %v655 = vunpack.c.l.b16 %v191
  %v656 = vunpack.c.l.b16 %v192
  %v657 = vunpack.c.l.b16 %v193
  %v658 = vunpack.c.l.b16 %v194
  %v659 = vpack.c.b16 %v644, %v643
  %v660 = vpack.c.b16 %v646, %v645
  %v661 = vpack.c.b16 %v648, %v647
  %v662 = vpack.c.b16 %v650, %v649
  %v663 = vpack.c.b16 %v652, %v651
  %v664 = vpack.c.b16 %v654, %v653
  %v665 = vpack.c.b16 %v656, %v655
  %v666 = vpack.c.b16 %v658, %v657
  %675 = vmatpush.bf16.msra.mxu0 %v666
  %676 = vmatpush.bf16.msra.mxu0 %v665
  %677 = vmatpush.bf16.msra.mxu0 %v664
  %678 = vmatpush.bf16.msra.mxu0 %v663
  %679 = vmatpush.bf16.msra.mxu0 %v662
  %680 = vmatpush.bf16.msra.mxu0 %v661
  %681 = vmatpush.bf16.msra.mxu0 %v660
  %682 = vmatpush.bf16.msra.mxu0 %v659
  %683 = vmatmul.bf16.gmra.mxu0 %v483
  %v684 = vpop.f32.mrf.mxu0
  %v685 = vadd.f32 0.0, %v684
  %v686 = vpop.f32.mrf.mxu0
  %v687 = vadd.f32 0.0, %v686
  %688 = vmatmul.bf16.gmra.mxu0 %v484
  %v689 = vpop.f32.mrf.mxu0
  %v690 = vadd.f32 0.0, %v689
  %v691 = vpop.f32.mrf.mxu0
  %v692 = vadd.f32 0.0, %v691
  %693 = vmatmul.bf16.gmra.mxu0 %v485
  %v694 = vpop.f32.mrf.mxu0
  %v695 = vadd.f32 0.0, %v694
  %v696 = vpop.f32.mrf.mxu0
  %v697 = vadd.f32 0.0, %v696
  %698 = vmatmul.bf16.gmra.mxu0 %v486
  %v699 = vpop.f32.mrf.mxu0
  %v700 = vadd.f32 0.0, %v699
  %v701 = vpop.f32.mrf.mxu0
  %v702 = vadd.f32 0.0, %v701
  %703 = vmatmul.bf16.gmra.mxu0 %v487
  %v704 = vpop.f32.mrf.mxu0
  %v705 = vadd.f32 0.0, %v704
  %v706 = vpop.f32.mrf.mxu0
  %v707 = vadd.f32 0.0, %v706
  %708 = vmatmul.bf16.gmra.mxu0 %v488
  %v709 = vpop.f32.mrf.mxu0
  %v710 = vadd.f32 0.0, %v709
  %v711 = vpop.f32.mrf.mxu0
  %v712 = vadd.f32 0.0, %v711
  %713 = vmatmul.bf16.gmra.mxu0 %v489
  %v714 = vpop.f32.mrf.mxu0
  %v715 = vadd.f32 0.0, %v714
  %v716 = vpop.f32.mrf.mxu0
  %v717 = vadd.f32 0.0, %v716
  %718 = vmatmul.bf16.gmra.mxu0 %v490
  %v719 = vpop.f32.mrf.mxu0
  %v720 = vadd.f32 0.0, %v719
  %v721 = vpop.f32.mrf.mxu0
  %v722 = vadd.f32 0.0, %v721
  %723 = vmatmul.bf16.gmra.mxu0 %v491
  %v724 = vpop.f32.mrf.mxu0
  %v725 = vadd.f32 0.0, %v724
  %v726 = vpop.f32.mrf.mxu0
  %v727 = vadd.f32 0.0, %v726
  %728 = vmatmul.bf16.gmra.mxu0 %v492
  %v729 = vpop.f32.mrf.mxu0
  %v730 = vadd.f32 0.0, %v729
  %v731 = vpop.f32.mrf.mxu0
  %v732 = vadd.f32 0.0, %v731
  %733 = vmatmul.bf16.gmra.mxu0 %v493
  %v734 = vpop.f32.mrf.mxu0
  %v735 = vadd.f32 0.0, %v734
  %v736 = vpop.f32.mrf.mxu0
  %v737 = vadd.f32 0.0, %v736
  %738 = vmatmul.bf16.gmra.mxu0 %v494
  %v739 = vpop.f32.mrf.mxu0
  %v740 = vadd.f32 0.0, %v739
  %v741 = vpop.f32.mrf.mxu0
  %v742 = vadd.f32 0.0, %v741
  %743 = vmatmul.bf16.gmra.mxu0 %v495
  %v744 = vpop.f32.mrf.mxu0
  %v745 = vadd.f32 0.0, %v744
  %v746 = vpop.f32.mrf.mxu0
  %v747 = vadd.f32 0.0, %v746
  %748 = vmatmul.bf16.gmra.mxu0 %v496
  %v749 = vpop.f32.mrf.mxu0
  %v750 = vadd.f32 0.0, %v749
  %v751 = vpop.f32.mrf.mxu0
  %v752 = vadd.f32 0.0, %v751
  %753 = vmatmul.bf16.gmra.mxu0 %v497
  %v754 = vpop.f32.mrf.mxu0
  %v755 = vadd.f32 0.0, %v754
  %v756 = vpop.f32.mrf.mxu0
  %v757 = vadd.f32 0.0, %v756
  %758 = vmatmul.bf16.gmra.mxu0 %v498
  %v759 = vpop.f32.mrf.mxu0
  %v760 = vadd.f32 0.0, %v759
  %v761 = vpop.f32.mrf.mxu0
  %v762 = vadd.f32 0.0, %v761
  %763 = vmatmul.bf16.gmra.mxu0 %v499
  %v764 = vpop.f32.mrf.mxu0
  %v765 = vadd.f32 0.0, %v764
  %v766 = vpop.f32.mrf.mxu0
  %v767 = vadd.f32 0.0, %v766
  %768 = vmatmul.bf16.gmra.mxu0 %v500
  %v769 = vpop.f32.mrf.mxu0
  %v770 = vadd.f32 0.0, %v769
  %v771 = vpop.f32.mrf.mxu0
  %v772 = vadd.f32 0.0, %v771
  %773 = vmatmul.bf16.gmra.mxu0 %v501
  %v774 = vpop.f32.mrf.mxu0
  %v775 = vadd.f32 0.0, %v774
  %v776 = vpop.f32.mrf.mxu0
  %v777 = vadd.f32 0.0, %v776
  %778 = vmatmul.bf16.gmra.mxu0 %v502
  %v779 = vpop.f32.mrf.mxu0
  %v780 = vadd.f32 0.0, %v779
  %v781 = vpop.f32.mrf.mxu0
  %v782 = vadd.f32 0.0, %v781
  %783 = vmatmul.bf16.gmra.mxu0 %v503
  %v784 = vpop.f32.mrf.mxu0
  %v785 = vadd.f32 0.0, %v784
  %v786 = vpop.f32.mrf.mxu0
  %v787 = vadd.f32 0.0, %v786
  %788 = vmatmul.bf16.gmra.mxu0 %v504
  %v789 = vpop.f32.mrf.mxu0
  %v790 = vadd.f32 0.0, %v789
  %v791 = vpop.f32.mrf.mxu0
  %v792 = vadd.f32 0.0, %v791
  %793 = vmatmul.bf16.gmra.mxu0 %v505
  %v794 = vpop.f32.mrf.mxu0
  %v795 = vadd.f32 0.0, %v794
  %v796 = vpop.f32.mrf.mxu0
  %v797 = vadd.f32 0.0, %v796
  %798 = vmatmul.bf16.gmra.mxu0 %v506
  %v799 = vpop.f32.mrf.mxu0
  %v800 = vadd.f32 0.0, %v799
  %v801 = vpop.f32.mrf.mxu0
  %v802 = vadd.f32 0.0, %v801
  %803 = vmatmul.bf16.gmra.mxu0 %v507
  %v804 = vpop.f32.mrf.mxu0
  %v805 = vadd.f32 0.0, %v804
  %v806 = vpop.f32.mrf.mxu0
  %v807 = vadd.f32 0.0, %v806
  %808 = vmatmul.bf16.gmra.mxu0 %v508
  %v809 = vpop.f32.mrf.mxu0
  %v810 = vadd.f32 0.0, %v809
  %v811 = vpop.f32.mrf.mxu0
  %v812 = vadd.f32 0.0, %v811
  %813 = vmatmul.bf16.gmra.mxu0 %v509
  %v814 = vpop.f32.mrf.mxu0
  %v815 = vadd.f32 0.0, %v814
  %v816 = vpop.f32.mrf.mxu0
  %v817 = vadd.f32 0.0, %v816
  %818 = vmatmul.bf16.gmra.mxu0 %v510
  %v819 = vpop.f32.mrf.mxu0
  %v820 = vadd.f32 0.0, %v819
  %v821 = vpop.f32.mrf.mxu0
  %v822 = vadd.f32 0.0, %v821
  %823 = vmatmul.bf16.gmra.mxu0 %v511
  %v824 = vpop.f32.mrf.mxu0
  %v825 = vadd.f32 0.0, %v824
  %v826 = vpop.f32.mrf.mxu0
  %v827 = vadd.f32 0.0, %v826
  %828 = vmatmul.bf16.gmra.mxu0 %v512
  %v829 = vpop.f32.mrf.mxu0
  %v830 = vadd.f32 0.0, %v829
  %v831 = vpop.f32.mrf.mxu0
  %v832 = vadd.f32 0.0, %v831
  %833 = vmatmul.bf16.gmra.mxu0 %v513
  %v834 = vpop.f32.mrf.mxu0
  %v835 = vadd.f32 0.0, %v834
  %v836 = vpop.f32.mrf.mxu0
  %v837 = vadd.f32 0.0, %v836
  %838 = vmatmul.bf16.gmra.mxu0 %v514
  %v839 = vpop.f32.mrf.mxu0
  %v840 = vadd.f32 0.0, %v839
  %v841 = vpop.f32.mrf.mxu0
  %v842 = vadd.f32 0.0, %v841
  %843 = vmatmul.bf16.gmra.mxu0 %v515
  %v844 = vpop.f32.mrf.mxu0
  %v845 = vadd.f32 0.0, %v844
  %v846 = vpop.f32.mrf.mxu0
  %v847 = vadd.f32 0.0, %v846
  %848 = vmatmul.bf16.gmra.mxu0 %v516
  %v849 = vpop.f32.mrf.mxu0
  %v850 = vadd.f32 0.0, %v849
  %v851 = vpop.f32.mrf.mxu0
  %v852 = vadd.f32 0.0, %v851
  %853 = vmatmul.bf16.gmra.mxu0 %v517
  %v854 = vpop.f32.mrf.mxu0
  %v855 = vadd.f32 0.0, %v854
  %v856 = vpop.f32.mrf.mxu0
  %v857 = vadd.f32 0.0, %v856
  %858 = vmatmul.bf16.gmra.mxu0 %v518
  %v859 = vpop.f32.mrf.mxu0
  %v860 = vadd.f32 0.0, %v859
  %v861 = vpop.f32.mrf.mxu0
  %v862 = vadd.f32 0.0, %v861
  %863 = vmatmul.bf16.gmra.mxu0 %v519
  %v864 = vpop.f32.mrf.mxu0
  %v865 = vadd.f32 0.0, %v864
  %v866 = vpop.f32.mrf.mxu0
  %v867 = vadd.f32 0.0, %v866
  %868 = vmatmul.bf16.gmra.mxu0 %v520
  %v869 = vpop.f32.mrf.mxu0
  %v870 = vadd.f32 0.0, %v869
  %v871 = vpop.f32.mrf.mxu0
  %v872 = vadd.f32 0.0, %v871
  %873 = vmatmul.bf16.gmra.mxu0 %v521
  %v874 = vpop.f32.mrf.mxu0
  %v875 = vadd.f32 0.0, %v874
  %v876 = vpop.f32.mrf.mxu0
  %v877 = vadd.f32 0.0, %v876
  %878 = vmatmul.bf16.gmra.mxu0 %v522
  %v879 = vpop.f32.mrf.mxu0
  %v880 = vadd.f32 0.0, %v879
  %v881 = vpop.f32.mrf.mxu0
  %v882 = vadd.f32 0.0, %v881
  %883 = vmatmul.bf16.gmra.mxu0 %v523
  %v884 = vpop.f32.mrf.mxu0
  %v885 = vadd.f32 0.0, %v884
  %v886 = vpop.f32.mrf.mxu0
  %v887 = vadd.f32 0.0, %v886
  %888 = vmatmul.bf16.gmra.mxu0 %v524
  %v889 = vpop.f32.mrf.mxu0
  %v890 = vadd.f32 0.0, %v889
  %v891 = vpop.f32.mrf.mxu0
  %v892 = vadd.f32 0.0, %v891
  %893 = vmatmul.bf16.gmra.mxu0 %v525
  %v894 = vpop.f32.mrf.mxu0
  %v895 = vadd.f32 0.0, %v894
  %v896 = vpop.f32.mrf.mxu0
  %v897 = vadd.f32 0.0, %v896
  %898 = vmatmul.bf16.gmra.mxu0 %v526
  %v899 = vpop.f32.mrf.mxu0
  %v900 = vadd.f32 0.0, %v899
  %v901 = vpop.f32.mrf.mxu0
  %v902 = vadd.f32 0.0, %v901
  %903 = vmatmul.bf16.gmra.mxu0 %v527
  %v904 = vpop.f32.mrf.mxu0
  %v905 = vadd.f32 0.0, %v904
  %v906 = vpop.f32.mrf.mxu0
  %v907 = vadd.f32 0.0, %v906
  %908 = vmatmul.bf16.gmra.mxu0 %v528
  %v909 = vpop.f32.mrf.mxu0
  %v910 = vadd.f32 0.0, %v909
  %v911 = vpop.f32.mrf.mxu0
  %v912 = vadd.f32 0.0, %v911
  %913 = vmatmul.bf16.gmra.mxu0 %v529
  %v914 = vpop.f32.mrf.mxu0
  %v915 = vadd.f32 0.0, %v914
  %v916 = vpop.f32.mrf.mxu0
  %v917 = vadd.f32 0.0, %v916
  %918 = vmatmul.bf16.gmra.mxu0 %v530
  %v919 = vpop.f32.mrf.mxu0
  %v920 = vadd.f32 0.0, %v919
  %v921 = vpop.f32.mrf.mxu0
  %v922 = vadd.f32 0.0, %v921
  %923 = vmatmul.bf16.gmra.mxu0 %v531
  %v924 = vpop.f32.mrf.mxu0
  %v925 = vadd.f32 0.0, %v924
  %v926 = vpop.f32.mrf.mxu0
  %v927 = vadd.f32 0.0, %v926
  %928 = vmatmul.bf16.gmra.mxu0 %v532
  %v929 = vpop.f32.mrf.mxu0
  %v930 = vadd.f32 0.0, %v929
  %v931 = vpop.f32.mrf.mxu0
  %v932 = vadd.f32 0.0, %v931
  %933 = vmatmul.bf16.gmra.mxu0 %v533
  %v934 = vpop.f32.mrf.mxu0
  %v935 = vadd.f32 0.0, %v934
  %v936 = vpop.f32.mrf.mxu0
  %v937 = vadd.f32 0.0, %v936
  %938 = vmatmul.bf16.gmra.mxu0 %v534
  %v939 = vpop.f32.mrf.mxu0
  %v940 = vadd.f32 0.0, %v939
  %v941 = vpop.f32.mrf.mxu0
  %v942 = vadd.f32 0.0, %v941
  %943 = vmatmul.bf16.gmra.mxu0 %v535
  %v944 = vpop.f32.mrf.mxu0
  %v945 = vadd.f32 0.0, %v944
  %v946 = vpop.f32.mrf.mxu0
  %v947 = vadd.f32 0.0, %v946
  %948 = vmatmul.bf16.gmra.mxu0 %v536
  %v949 = vpop.f32.mrf.mxu0
  %v950 = vadd.f32 0.0, %v949
  %v951 = vpop.f32.mrf.mxu0
  %v952 = vadd.f32 0.0, %v951
  %953 = vmatmul.bf16.gmra.mxu0 %v537
  %v954 = vpop.f32.mrf.mxu0
  %v955 = vadd.f32 0.0, %v954
  %v956 = vpop.f32.mrf.mxu0
  %v957 = vadd.f32 0.0, %v956
  %958 = vmatmul.bf16.gmra.mxu0 %v538
  %v959 = vpop.f32.mrf.mxu0
  %v960 = vadd.f32 0.0, %v959
  %v961 = vpop.f32.mrf.mxu0
  %v962 = vadd.f32 0.0, %v961
  %963 = vmatmul.bf16.gmra.mxu0 %v539
  %v964 = vpop.f32.mrf.mxu0
  %v965 = vadd.f32 0.0, %v964
  %v966 = vpop.f32.mrf.mxu0
  %v967 = vadd.f32 0.0, %v966
  %968 = vmatmul.bf16.gmra.mxu0 %v540
  %v969 = vpop.f32.mrf.mxu0
  %v970 = vadd.f32 0.0, %v969
  %v971 = vpop.f32.mrf.mxu0
  %v972 = vadd.f32 0.0, %v971
  %973 = vmatmul.bf16.gmra.mxu0 %v541
  %v974 = vpop.f32.mrf.mxu0
  %v975 = vadd.f32 0.0, %v974
  %v976 = vpop.f32.mrf.mxu0
  %v977 = vadd.f32 0.0, %v976
  %978 = vmatmul.bf16.gmra.mxu0 %v542
  %v979 = vpop.f32.mrf.mxu0
  %v980 = vadd.f32 0.0, %v979
  %v981 = vpop.f32.mrf.mxu0
  %v982 = vadd.f32 0.0, %v981
  %983 = vmatmul.bf16.gmra.mxu0 %v543
  %v984 = vpop.f32.mrf.mxu0
  %v985 = vadd.f32 0.0, %v984
  %v986 = vpop.f32.mrf.mxu0
  %v987 = vadd.f32 0.0, %v986
  %988 = vmatmul.bf16.gmra.mxu0 %v544
  %v989 = vpop.f32.mrf.mxu0
  %v990 = vadd.f32 0.0, %v989
  %v991 = vpop.f32.mrf.mxu0
  %v992 = vadd.f32 0.0, %v991
  %993 = vmatmul.bf16.gmra.mxu0 %v545
  %v994 = vpop.f32.mrf.mxu0
  %v995 = vadd.f32 0.0, %v994
  %v996 = vpop.f32.mrf.mxu0
  %v997 = vadd.f32 0.0, %v996
  %998 = vmatmul.bf16.gmra.mxu0 %v546
  %v999 = vpop.f32.mrf.mxu0
  %v1000 = vadd.f32 0.0, %v999
  %v1001 = vpop.f32.mrf.mxu0
  %v1002 = vadd.f32 0.0, %v1001
  %1003 = vmatmul.bf16.gmra.mxu0 %v547
  %v1004 = vpop.f32.mrf.mxu0
  %v1005 = vadd.f32 0.0, %v1004
  %v1006 = vpop.f32.mrf.mxu0
  %v1007 = vadd.f32 0.0, %v1006
  %1008 = vmatmul.bf16.gmra.mxu0 %v548
  %v1009 = vpop.f32.mrf.mxu0
  %v1010 = vadd.f32 0.0, %v1009
  %v1011 = vpop.f32.mrf.mxu0
  %v1012 = vadd.f32 0.0, %v1011
  %1013 = vmatmul.bf16.gmra.mxu0 %v549
  %v1014 = vpop.f32.mrf.mxu0
  %v1015 = vadd.f32 0.0, %v1014
  %v1016 = vpop.f32.mrf.mxu0
  %v1017 = vadd.f32 0.0, %v1016
  %1018 = vmatmul.bf16.gmra.mxu0 %v550
  %v1019 = vpop.f32.mrf.mxu0
  %v1020 = vadd.f32 0.0, %v1019
  %v1021 = vpop.f32.mrf.mxu0
  %v1022 = vadd.f32 0.0, %v1021
  %1023 = vmatmul.bf16.gmra.mxu0 %v551
  %v1024 = vpop.f32.mrf.mxu0
  %v1025 = vadd.f32 0.0, %v1024
  %v1026 = vpop.f32.mrf.mxu0
  %v1027 = vadd.f32 0.0, %v1026
  %1028 = vmatmul.bf16.gmra.mxu0 %v552
  %v1029 = vpop.f32.mrf.mxu0
  %v1030 = vadd.f32 0.0, %v1029
  %v1031 = vpop.f32.mrf.mxu0
  %v1032 = vadd.f32 0.0, %v1031
  %1033 = vmatmul.bf16.gmra.mxu0 %v553
  %v1034 = vpop.f32.mrf.mxu0
  %v1035 = vadd.f32 0.0, %v1034
  %v1036 = vpop.f32.mrf.mxu0
  %v1037 = vadd.f32 0.0, %v1036
  %1038 = vmatmul.bf16.gmra.mxu0 %v554
  %v1039 = vpop.f32.mrf.mxu0
  %v1040 = vadd.f32 0.0, %v1039
  %v1041 = vpop.f32.mrf.mxu0
  %v1042 = vadd.f32 0.0, %v1041
  %1043 = vdwg.mxu0
  %1044 = vrot.lane.b32.xlu0 %v685, 124
  %v1045 = vpop.permute.xlu0 %1044
  %1046 = vrot.lane.b32.xlu0 %v687, 124
  %v1047 = vpop.permute.xlu0 %1046
  %1048 = vrot.lane.b32.xlu0 %v690, 124
  %v1049 = vpop.permute.xlu0 %1048
  %1050 = vrot.lane.b32.xlu0 %v692, 124
  %v1051 = vpop.permute.xlu0 %1050
  %1052 = vrot.lane.b32.xlu0 %v695, 124
  %v1053 = vpop.permute.xlu0 %1052
  %1054 = vrot.lane.b32.xlu0 %v697, 124
  %v1055 = vpop.permute.xlu0 %1054
  %1056 = vrot.lane.b32.xlu0 %v700, 124
  %v1057 = vpop.permute.xlu0 %1056
  %1058 = vrot.lane.b32.xlu0 %v702, 124
  %v1059 = vpop.permute.xlu0 %1058
  %1060 = vrot.lane.b32.xlu0 %v705, 124
  %v1061 = vpop.permute.xlu0 %1060
  %1062 = vrot.lane.b32.xlu0 %v707, 124
  %v1063 = vpop.permute.xlu0 %1062
  %1064 = vrot.lane.b32.xlu0 %v710, 124
  %v1065 = vpop.permute.xlu0 %1064
  %1066 = vrot.lane.b32.xlu0 %v712, 124
  %v1067 = vpop.permute.xlu0 %1066
  %1068 = vrot.lane.b32.xlu0 %v715, 124
  %v1069 = vpop.permute.xlu0 %1068
  %1070 = vrot.lane.b32.xlu0 %v717, 124
  %v1071 = vpop.permute.xlu0 %1070
  %1072 = vrot.lane.b32.xlu0 %v720, 124
  %v1073 = vpop.permute.xlu0 %1072
  %1074 = vrot.lane.b32.xlu0 %v722, 124
  %v1075 = vpop.permute.xlu0 %1074
  %1076 = vrot.lane.b32.xlu0 %v725, 124
  %v1077 = vpop.permute.xlu0 %1076
  %1078 = vrot.lane.b32.xlu0 %v727, 124
  %v1079 = vpop.permute.xlu0 %1078
  %1080 = vrot.lane.b32.xlu0 %v730, 124
  %v1081 = vpop.permute.xlu0 %1080
  %1082 = vrot.lane.b32.xlu0 %v732, 124
  %v1083 = vpop.permute.xlu0 %1082
  %1084 = vrot.lane.b32.xlu0 %v735, 124
  %v1085 = vpop.permute.xlu0 %1084
  %1086 = vrot.lane.b32.xlu0 %v737, 124
  %v1087 = vpop.permute.xlu0 %1086
  %1088 = vrot.lane.b32.xlu0 %v740, 124
  %v1089 = vpop.permute.xlu0 %1088
  %1090 = vrot.lane.b32.xlu0 %v742, 124
  %v1091 = vpop.permute.xlu0 %1090
  %1092 = vrot.lane.b32.xlu0 %v745, 124
  %v1093 = vpop.permute.xlu0 %1092
  %1094 = vrot.lane.b32.xlu0 %v747, 124
  %v1095 = vpop.permute.xlu0 %1094
  %1096 = vrot.lane.b32.xlu0 %v750, 124
  %v1097 = vpop.permute.xlu0 %1096
  %1098 = vrot.lane.b32.xlu0 %v752, 124
  %v1099 = vpop.permute.xlu0 %1098
  %1100 = vrot.lane.b32.xlu0 %v755, 124
  %v1101 = vpop.permute.xlu0 %1100
  %1102 = vrot.lane.b32.xlu0 %v757, 124
  %v1103 = vpop.permute.xlu0 %1102
  %1104 = vrot.lane.b32.xlu0 %v760, 124
  %v1105 = vpop.permute.xlu0 %1104
  %1106 = vrot.lane.b32.xlu0 %v762, 124
  %v1107 = vpop.permute.xlu0 %1106
  %1108 = vrot.lane.b32.xlu0 %v765, 124
  %v1109 = vpop.permute.xlu0 %1108
  %1110 = vrot.lane.b32.xlu0 %v767, 124
  %v1111 = vpop.permute.xlu0 %1110
  %1112 = vrot.lane.b32.xlu0 %v770, 124
  %v1113 = vpop.permute.xlu0 %1112
  %1114 = vrot.lane.b32.xlu0 %v772, 124
  %v1115 = vpop.permute.xlu0 %1114
  %1116 = vrot.lane.b32.xlu0 %v775, 124
  %v1117 = vpop.permute.xlu0 %1116
  %1118 = vrot.lane.b32.xlu0 %v777, 124
  %v1119 = vpop.permute.xlu0 %1118
  %1120 = vrot.lane.b32.xlu0 %v780, 124
  %v1121 = vpop.permute.xlu0 %1120
  %1122 = vrot.lane.b32.xlu0 %v782, 124
  %v1123 = vpop.permute.xlu0 %1122
  %1124 = vrot.lane.b32.xlu0 %v785, 124
  %v1125 = vpop.permute.xlu0 %1124
  %1126 = vrot.lane.b32.xlu0 %v787, 124
  %v1127 = vpop.permute.xlu0 %1126
  %1128 = vrot.lane.b32.xlu0 %v790, 124
  %v1129 = vpop.permute.xlu0 %1128
  %1130 = vrot.lane.b32.xlu0 %v792, 124
  %v1131 = vpop.permute.xlu0 %1130
  %1132 = vrot.lane.b32.xlu0 %v795, 124
  %v1133 = vpop.permute.xlu0 %1132
  %1134 = vrot.lane.b32.xlu0 %v797, 124
  %v1135 = vpop.permute.xlu0 %1134
  %1136 = vrot.lane.b32.xlu0 %v800, 124
  %v1137 = vpop.permute.xlu0 %1136
  %1138 = vrot.lane.b32.xlu0 %v802, 124
  %v1139 = vpop.permute.xlu0 %1138
  %1140 = vrot.lane.b32.xlu0 %v805, 124
  %v1141 = vpop.permute.xlu0 %1140
  %1142 = vrot.lane.b32.xlu0 %v807, 124
  %v1143 = vpop.permute.xlu0 %1142
  %1144 = vrot.lane.b32.xlu0 %v810, 124
  %v1145 = vpop.permute.xlu0 %1144
  %1146 = vrot.lane.b32.xlu0 %v812, 124
  %v1147 = vpop.permute.xlu0 %1146
  %1148 = vrot.lane.b32.xlu0 %v815, 124
  %v1149 = vpop.permute.xlu0 %1148
  %1150 = vrot.lane.b32.xlu0 %v817, 124
  %v1151 = vpop.permute.xlu0 %1150
  %1152 = vrot.lane.b32.xlu0 %v820, 124
  %v1153 = vpop.permute.xlu0 %1152
  %1154 = vrot.lane.b32.xlu0 %v822, 124
  %v1155 = vpop.permute.xlu0 %1154
  %1156 = vrot.lane.b32.xlu0 %v825, 124
  %v1157 = vpop.permute.xlu0 %1156
  %1158 = vrot.lane.b32.xlu0 %v827, 124
  %v1159 = vpop.permute.xlu0 %1158
  %1160 = vrot.lane.b32.xlu0 %v830, 124
  %v1161 = vpop.permute.xlu0 %1160
  %1162 = vrot.lane.b32.xlu0 %v832, 124
  %v1163 = vpop.permute.xlu0 %1162
  %1164 = vrot.lane.b32.xlu0 %v835, 124
  %v1165 = vpop.permute.xlu0 %1164
  %1166 = vrot.lane.b32.xlu0 %v837, 124
  %v1167 = vpop.permute.xlu0 %1166
  %1168 = vrot.lane.b32.xlu0 %v840, 124
  %v1169 = vpop.permute.xlu0 %1168
  %1170 = vrot.lane.b32.xlu0 %v842, 124
  %v1171 = vpop.permute.xlu0 %1170
  %1172 = vrot.lane.b32.xlu0 %v845, 124
  %v1173 = vpop.permute.xlu0 %1172
  %1174 = vrot.lane.b32.xlu0 %v847, 124
  %v1175 = vpop.permute.xlu0 %1174
  %1176 = vrot.lane.b32.xlu0 %v850, 124
  %v1177 = vpop.permute.xlu0 %1176
  %1178 = vrot.lane.b32.xlu0 %v852, 124
  %v1179 = vpop.permute.xlu0 %1178
  %1180 = vrot.lane.b32.xlu0 %v855, 124
  %v1181 = vpop.permute.xlu0 %1180
  %1182 = vrot.lane.b32.xlu0 %v857, 124
  %v1183 = vpop.permute.xlu0 %1182
  %1184 = vrot.lane.b32.xlu0 %v860, 124
  %v1185 = vpop.permute.xlu0 %1184
  %1186 = vrot.lane.b32.xlu0 %v862, 124
  %v1187 = vpop.permute.xlu0 %1186
  %1188 = vrot.lane.b32.xlu0 %v865, 124
  %v1189 = vpop.permute.xlu0 %1188
  %1190 = vrot.lane.b32.xlu0 %v867, 124
  %v1191 = vpop.permute.xlu0 %1190
  %1192 = vrot.lane.b32.xlu0 %v870, 124
  %v1193 = vpop.permute.xlu0 %1192
  %1194 = vrot.lane.b32.xlu0 %v872, 124
  %v1195 = vpop.permute.xlu0 %1194
  %1196 = vrot.lane.b32.xlu0 %v875, 124
  %v1197 = vpop.permute.xlu0 %1196
  %1198 = vrot.lane.b32.xlu0 %v877, 124
  %v1199 = vpop.permute.xlu0 %1198
  %1200 = vrot.lane.b32.xlu0 %v880, 124
  %v1201 = vpop.permute.xlu0 %1200
  %1202 = vrot.lane.b32.xlu0 %v882, 124
  %v1203 = vpop.permute.xlu0 %1202
  %1204 = vrot.lane.b32.xlu0 %v885, 124
  %v1205 = vpop.permute.xlu0 %1204
  %1206 = vrot.lane.b32.xlu0 %v887, 124
  %v1207 = vpop.permute.xlu0 %1206
  %1208 = vrot.lane.b32.xlu0 %v890, 124
  %v1209 = vpop.permute.xlu0 %1208
  %1210 = vrot.lane.b32.xlu0 %v892, 124
  %v1211 = vpop.permute.xlu0 %1210
  %1212 = vrot.lane.b32.xlu0 %v895, 124
  %v1213 = vpop.permute.xlu0 %1212
  %1214 = vrot.lane.b32.xlu0 %v897, 124
  %v1215 = vpop.permute.xlu0 %1214
  %1216 = vrot.lane.b32.xlu0 %v900, 124
  %v1217 = vpop.permute.xlu0 %1216
  %1218 = vrot.lane.b32.xlu0 %v902, 124
  %v1219 = vpop.permute.xlu0 %1218
  %1220 = vrot.lane.b32.xlu0 %v905, 124
  %v1221 = vpop.permute.xlu0 %1220
  %1222 = vrot.lane.b32.xlu0 %v907, 124
  %v1223 = vpop.permute.xlu0 %1222
  %1224 = vrot.lane.b32.xlu0 %v910, 124
  %v1225 = vpop.permute.xlu0 %1224
  %1226 = vrot.lane.b32.xlu0 %v912, 124
  %v1227 = vpop.permute.xlu0 %1226
  %1228 = vrot.lane.b32.xlu0 %v915, 124
  %v1229 = vpop.permute.xlu0 %1228
  %1230 = vrot.lane.b32.xlu0 %v917, 124
  %v1231 = vpop.permute.xlu0 %1230
  %1232 = vrot.lane.b32.xlu0 %v920, 124
  %v1233 = vpop.permute.xlu0 %1232
  %1234 = vrot.lane.b32.xlu0 %v922, 124
  %v1235 = vpop.permute.xlu0 %1234
  %1236 = vrot.lane.b32.xlu0 %v925, 124
  %v1237 = vpop.permute.xlu0 %1236
  %1238 = vrot.lane.b32.xlu0 %v927, 124
  %v1239 = vpop.permute.xlu0 %1238
  %1240 = vrot.lane.b32.xlu0 %v930, 124
  %v1241 = vpop.permute.xlu0 %1240
  %1242 = vrot.lane.b32.xlu0 %v932, 124
  %v1243 = vpop.permute.xlu0 %1242
  %1244 = vrot.lane.b32.xlu0 %v935, 124
  %v1245 = vpop.permute.xlu0 %1244
  %1246 = vrot.lane.b32.xlu0 %v937, 124
  %v1247 = vpop.permute.xlu0 %1246
  %1248 = vrot.lane.b32.xlu0 %v940, 124
  %v1249 = vpop.permute.xlu0 %1248
  %1250 = vrot.lane.b32.xlu0 %v942, 124
  %v1251 = vpop.permute.xlu0 %1250
  %1252 = vrot.lane.b32.xlu0 %v945, 124
  %v1253 = vpop.permute.xlu0 %1252
  %1254 = vrot.lane.b32.xlu0 %v947, 124
  %v1255 = vpop.permute.xlu0 %1254
  %1256 = vrot.lane.b32.xlu0 %v950, 124
  %v1257 = vpop.permute.xlu0 %1256
  %1258 = vrot.lane.b32.xlu0 %v952, 124
  %v1259 = vpop.permute.xlu0 %1258
  %1260 = vrot.lane.b32.xlu0 %v955, 124
  %v1261 = vpop.permute.xlu0 %1260
  %1262 = vrot.lane.b32.xlu0 %v957, 124
  %v1263 = vpop.permute.xlu0 %1262
  %1264 = vrot.lane.b32.xlu0 %v960, 124
  %v1265 = vpop.permute.xlu0 %1264
  %1266 = vrot.lane.b32.xlu0 %v962, 124
  %v1267 = vpop.permute.xlu0 %1266
  %1268 = vrot.lane.b32.xlu0 %v965, 124
  %v1269 = vpop.permute.xlu0 %1268
  %1270 = vrot.lane.b32.xlu0 %v967, 124
  %v1271 = vpop.permute.xlu0 %1270
  %1272 = vrot.lane.b32.xlu0 %v970, 124
  %v1273 = vpop.permute.xlu0 %1272
  %1274 = vrot.lane.b32.xlu0 %v972, 124
  %v1275 = vpop.permute.xlu0 %1274
  %1276 = vrot.lane.b32.xlu0 %v975, 124
  %v1277 = vpop.permute.xlu0 %1276
  %1278 = vrot.lane.b32.xlu0 %v977, 124
  %v1279 = vpop.permute.xlu0 %1278
  %1280 = vrot.lane.b32.xlu0 %v980, 124
  %v1281 = vpop.permute.xlu0 %1280
  %1282 = vrot.lane.b32.xlu0 %v982, 124
  %v1283 = vpop.permute.xlu0 %1282
  %1284 = vrot.lane.b32.xlu0 %v985, 124
  %v1285 = vpop.permute.xlu0 %1284
  %1286 = vrot.lane.b32.xlu0 %v987, 124
  %v1287 = vpop.permute.xlu0 %1286
  %1288 = vrot.lane.b32.xlu0 %v990, 124
  %v1289 = vpop.permute.xlu0 %1288
  %1290 = vrot.lane.b32.xlu0 %v992, 124
  %v1291 = vpop.permute.xlu0 %1290
  %1292 = vrot.lane.b32.xlu0 %v995, 124
  %v1293 = vpop.permute.xlu0 %1292
  %1294 = vrot.lane.b32.xlu0 %v997, 124
  %v1295 = vpop.permute.xlu0 %1294
  %1296 = vrot.lane.b32.xlu0 %v1000, 124
  %v1297 = vpop.permute.xlu0 %1296
  %1298 = vrot.lane.b32.xlu0 %v1002, 124
  %v1299 = vpop.permute.xlu0 %1298
  %1300 = vrot.lane.b32.xlu0 %v1005, 124
  %v1301 = vpop.permute.xlu0 %1300
  %1302 = vrot.lane.b32.xlu0 %v1007, 124
  %v1303 = vpop.permute.xlu0 %1302
  %1304 = vrot.lane.b32.xlu0 %v1010, 124
  %v1305 = vpop.permute.xlu0 %1304
  %1306 = vrot.lane.b32.xlu0 %v1012, 124
  %v1307 = vpop.permute.xlu0 %1306
  %1308 = vrot.lane.b32.xlu0 %v1015, 124
  %v1309 = vpop.permute.xlu0 %1308
  %1310 = vrot.lane.b32.xlu0 %v1017, 124
  %v1311 = vpop.permute.xlu0 %1310
  %1312 = vrot.lane.b32.xlu0 %v1020, 124
  %v1313 = vpop.permute.xlu0 %1312
  %1314 = vrot.lane.b32.xlu0 %v1022, 124
  %v1315 = vpop.permute.xlu0 %1314
  %1316 = vrot.lane.b32.xlu0 %v1025, 124
  %v1317 = vpop.permute.xlu0 %1316
  %1318 = vrot.lane.b32.xlu0 %v1027, 124
  %v1319 = vpop.permute.xlu0 %1318
  %1320 = vrot.lane.b32.xlu0 %v1030, 124
  %v1321 = vpop.permute.xlu0 %1320
  %1322 = vrot.lane.b32.xlu0 %v1032, 124
  %v1323 = vpop.permute.xlu0 %1322
  %1324 = vrot.lane.b32.xlu0 %v1035, 124
  %v1325 = vpop.permute.xlu0 %1324
  %1326 = vrot.lane.b32.xlu0 %v1037, 124
  %v1327 = vpop.permute.xlu0 %1326
  %1328 = vrot.lane.b32.xlu0 %v1040, 124
  %v1329 = vpop.permute.xlu0 %1328
  %1330 = vrot.lane.b32.xlu0 %v1042, 124
  %v1331 = vpop.permute.xlu0 %1330
  %v1332 = vmax.f32 %v685, %v1045
  %v1333 = vmax.f32 %v687, %v1047
  %v1334 = vmax.f32 %v690, %v1049
  %v1335 = vmax.f32 %v692, %v1051
  %v1336 = vmax.f32 %v695, %v1053
  %v1337 = vmax.f32 %v697, %v1055
  %v1338 = vmax.f32 %v700, %v1057
  %v1339 = vmax.f32 %v702, %v1059
  %v1340 = vmax.f32 %v705, %v1061
  %v1341 = vmax.f32 %v707, %v1063
  %v1342 = vmax.f32 %v710, %v1065
  %v1343 = vmax.f32 %v712, %v1067
  %v1344 = vmax.f32 %v715, %v1069
  %v1345 = vmax.f32 %v717, %v1071
  %v1346 = vmax.f32 %v720, %v1073
  %v1347 = vmax.f32 %v722, %v1075
  %v1348 = vmax.f32 %v725, %v1077
  %v1349 = vmax.f32 %v727, %v1079
  %v1350 = vmax.f32 %v730, %v1081
  %v1351 = vmax.f32 %v732, %v1083
  %v1352 = vmax.f32 %v735, %v1085
  %v1353 = vmax.f32 %v737, %v1087
  %v1354 = vmax.f32 %v740, %v1089
  %v1355 = vmax.f32 %v742, %v1091
  %v1356 = vmax.f32 %v745, %v1093
  %v1357 = vmax.f32 %v747, %v1095
  %v1358 = vmax.f32 %v750, %v1097
  %v1359 = vmax.f32 %v752, %v1099
  %v1360 = vmax.f32 %v755, %v1101
  %v1361 = vmax.f32 %v757, %v1103
  %v1362 = vmax.f32 %v760, %v1105
  %v1363 = vmax.f32 %v762, %v1107
  %v1364 = vmax.f32 %v765, %v1109
  %v1365 = vmax.f32 %v767, %v1111
  %v1366 = vmax.f32 %v770, %v1113
  %v1367 = vmax.f32 %v772, %v1115
  %v1368 = vmax.f32 %v775, %v1117
  %v1369 = vmax.f32 %v777, %v1119
  %v1370 = vmax.f32 %v780, %v1121
  %v1371 = vmax.f32 %v782, %v1123
  %v1372 = vmax.f32 %v785, %v1125
  %v1373 = vmax.f32 %v787, %v1127
  %v1374 = vmax.f32 %v790, %v1129
  %v1375 = vmax.f32 %v792, %v1131
  %v1376 = vmax.f32 %v795, %v1133
  %v1377 = vmax.f32 %v797, %v1135
  %v1378 = vmax.f32 %v800, %v1137
  %v1379 = vmax.f32 %v802, %v1139
  %v1380 = vmax.f32 %v805, %v1141
  %v1381 = vmax.f32 %v807, %v1143
  %v1382 = vmax.f32 %v810, %v1145
  %v1383 = vmax.f32 %v812, %v1147
  %v1384 = vmax.f32 %v815, %v1149
  %v1385 = vmax.f32 %v817, %v1151
  %v1386 = vmax.f32 %v820, %v1153
  %v1387 = vmax.f32 %v822, %v1155
  %v1388 = vmax.f32 %v825, %v1157
  %v1389 = vmax.f32 %v827, %v1159
  %v1390 = vmax.f32 %v830, %v1161
  %v1391 = vmax.f32 %v832, %v1163
  %v1392 = vmax.f32 %v835, %v1165
  %v1393 = vmax.f32 %v837, %v1167
  %v1394 = vmax.f32 %v840, %v1169
  %v1395 = vmax.f32 %v842, %v1171
  %v1396 = vmax.f32 %v845, %v1173
  %v1397 = vmax.f32 %v847, %v1175
  %v1398 = vmax.f32 %v850, %v1177
  %v1399 = vmax.f32 %v852, %v1179
  %v1400 = vmax.f32 %v855, %v1181
  %v1401 = vmax.f32 %v857, %v1183
  %v1402 = vmax.f32 %v860, %v1185
  %v1403 = vmax.f32 %v862, %v1187
  %v1404 = vmax.f32 %v865, %v1189
  %v1405 = vmax.f32 %v867, %v1191
  %v1406 = vmax.f32 %v870, %v1193
  %v1407 = vmax.f32 %v872, %v1195
  %v1408 = vmax.f32 %v875, %v1197
  %v1409 = vmax.f32 %v877, %v1199
  %v1410 = vmax.f32 %v880, %v1201
  %v1411 = vmax.f32 %v882, %v1203
  %v1412 = vmax.f32 %v885, %v1205
  %v1413 = vmax.f32 %v887, %v1207
  %v1414 = vmax.f32 %v890, %v1209
  %v1415 = vmax.f32 %v892, %v1211
  %v1416 = vmax.f32 %v895, %v1213
  %v1417 = vmax.f32 %v897, %v1215
  %v1418 = vmax.f32 %v900, %v1217
  %v1419 = vmax.f32 %v902, %v1219
  %v1420 = vmax.f32 %v905, %v1221
  %v1421 = vmax.f32 %v907, %v1223
  %v1422 = vmax.f32 %v910, %v1225
  %v1423 = vmax.f32 %v912, %v1227
  %v1424 = vmax.f32 %v915, %v1229
  %v1425 = vmax.f32 %v917, %v1231
  %v1426 = vmax.f32 %v920, %v1233
  %v1427 = vmax.f32 %v922, %v1235
  %v1428 = vmax.f32 %v925, %v1237
  %v1429 = vmax.f32 %v927, %v1239
  %v1430 = vmax.f32 %v930, %v1241
  %v1431 = vmax.f32 %v932, %v1243
  %v1432 = vmax.f32 %v935, %v1245
  %v1433 = vmax.f32 %v937, %v1247
  %v1434 = vmax.f32 %v940, %v1249
  %v1435 = vmax.f32 %v942, %v1251
  %v1436 = vmax.f32 %v945, %v1253
  %v1437 = vmax.f32 %v947, %v1255
  %v1438 = vmax.f32 %v950, %v1257
  %v1439 = vmax.f32 %v952, %v1259
  %v1440 = vmax.f32 %v955, %v1261
  %v1441 = vmax.f32 %v957, %v1263
  %v1442 = vmax.f32 %v960, %v1265
  %v1443 = vmax.f32 %v962, %v1267
  %v1444 = vmax.f32 %v965, %v1269
  %v1445 = vmax.f32 %v967, %v1271
  %v1446 = vmax.f32 %v970, %v1273
  %v1447 = vmax.f32 %v972, %v1275
  %v1448 = vmax.f32 %v975, %v1277
  %v1449 = vmax.f32 %v977, %v1279
  %v1450 = vmax.f32 %v980, %v1281
  %v1451 = vmax.f32 %v982, %v1283
  %v1452 = vmax.f32 %v985, %v1285
  %v1453 = vmax.f32 %v987, %v1287
  %v1454 = vmax.f32 %v990, %v1289
  %v1455 = vmax.f32 %v992, %v1291
  %v1456 = vmax.f32 %v995, %v1293
  %v1457 = vmax.f32 %v997, %v1295
  %v1458 = vmax.f32 %v1000, %v1297
  %v1459 = vmax.f32 %v1002, %v1299
  %v1460 = vmax.f32 %v1005, %v1301
  %v1461 = vmax.f32 %v1007, %v1303
  %v1462 = vmax.f32 %v1010, %v1305
  %v1463 = vmax.f32 %v1012, %v1307
  %v1464 = vmax.f32 %v1015, %v1309
  %v1465 = vmax.f32 %v1017, %v1311
  %v1466 = vmax.f32 %v1020, %v1313
  %v1467 = vmax.f32 %v1022, %v1315
  %v1468 = vmax.f32 %v1025, %v1317
  %v1469 = vmax.f32 %v1027, %v1319
  %v1470 = vmax.f32 %v1030, %v1321
  %v1471 = vmax.f32 %v1032, %v1323
  %v1472 = vmax.f32 %v1035, %v1325
  %v1473 = vmax.f32 %v1037, %v1327
  %v1474 = vmax.f32 %v1040, %v1329
  %v1475 = vmax.f32 %v1042, %v1331
  %1476 = vrot.lane.b32.xlu0 %v685, 120
  %v1477 = vpop.permute.xlu0 %1476
  %1478 = vrot.lane.b32.xlu0 %v687, 120
  %v1479 = vpop.permute.xlu0 %1478
  %1480 = vrot.lane.b32.xlu0 %v690, 120
  %v1481 = vpop.permute.xlu0 %1480
  %1482 = vrot.lane.b32.xlu0 %v692, 120
  %v1483 = vpop.permute.xlu0 %1482
  %1484 = vrot.lane.b32.xlu0 %v695, 120
  %v1485 = vpop.permute.xlu0 %1484
  %1486 = vrot.lane.b32.xlu0 %v697, 120
  %v1487 = vpop.permute.xlu0 %1486
  %1488 = vrot.lane.b32.xlu0 %v700, 120
  %v1489 = vpop.permute.xlu0 %1488
  %1490 = vrot.lane.b32.xlu0 %v702, 120
  %v1491 = vpop.permute.xlu0 %1490
  %1492 = vrot.lane.b32.xlu0 %v705, 120
  %v1493 = vpop.permute.xlu0 %1492
  %1494 = vrot.lane.b32.xlu0 %v707, 120
  %v1495 = vpop.permute.xlu0 %1494
  %1496 = vrot.lane.b32.xlu0 %v710, 120
  %v1497 = vpop.permute.xlu0 %1496
  %1498 = vrot.lane.b32.xlu0 %v712, 120
  %v1499 = vpop.permute.xlu0 %1498
  %1500 = vrot.lane.b32.xlu0 %v715, 120
  %v1501 = vpop.permute.xlu0 %1500
  %1502 = vrot.lane.b32.xlu0 %v717, 120
  %v1503 = vpop.permute.xlu0 %1502
  %1504 = vrot.lane.b32.xlu0 %v720, 120
  %v1505 = vpop.permute.xlu0 %1504
  %1506 = vrot.lane.b32.xlu0 %v722, 120
  %v1507 = vpop.permute.xlu0 %1506
  %1508 = vrot.lane.b32.xlu0 %v725, 120
  %v1509 = vpop.permute.xlu0 %1508
  %1510 = vrot.lane.b32.xlu0 %v727, 120
  %v1511 = vpop.permute.xlu0 %1510
  %1512 = vrot.lane.b32.xlu0 %v730, 120
  %v1513 = vpop.permute.xlu0 %1512
  %1514 = vrot.lane.b32.xlu0 %v732, 120
  %v1515 = vpop.permute.xlu0 %1514
  %1516 = vrot.lane.b32.xlu0 %v735, 120
  %v1517 = vpop.permute.xlu0 %1516
  %1518 = vrot.lane.b32.xlu0 %v737, 120
  %v1519 = vpop.permute.xlu0 %1518
  %1520 = vrot.lane.b32.xlu0 %v740, 120
  %v1521 = vpop.permute.xlu0 %1520
  %1522 = vrot.lane.b32.xlu0 %v742, 120
  %v1523 = vpop.permute.xlu0 %1522
  %1524 = vrot.lane.b32.xlu0 %v745, 120
  %v1525 = vpop.permute.xlu0 %1524
  %1526 = vrot.lane.b32.xlu0 %v747, 120
  %v1527 = vpop.permute.xlu0 %1526
  %1528 = vrot.lane.b32.xlu0 %v750, 120
  %v1529 = vpop.permute.xlu0 %1528
  %1530 = vrot.lane.b32.xlu0 %v752, 120
  %v1531 = vpop.permute.xlu0 %1530
  %1532 = vrot.lane.b32.xlu0 %v755, 120
  %v1533 = vpop.permute.xlu0 %1532
  %1534 = vrot.lane.b32.xlu0 %v757, 120
  %v1535 = vpop.permute.xlu0 %1534
  %1536 = vrot.lane.b32.xlu0 %v760, 120
  %v1537 = vpop.permute.xlu0 %1536
  %1538 = vrot.lane.b32.xlu0 %v762, 120
  %v1539 = vpop.permute.xlu0 %1538
  %1540 = vrot.lane.b32.xlu0 %v765, 120
  %v1541 = vpop.permute.xlu0 %1540
  %1542 = vrot.lane.b32.xlu0 %v767, 120
  %v1543 = vpop.permute.xlu0 %1542
  %1544 = vrot.lane.b32.xlu0 %v770, 120
  %v1545 = vpop.permute.xlu0 %1544
  %1546 = vrot.lane.b32.xlu0 %v772, 120
  %v1547 = vpop.permute.xlu0 %1546
  %1548 = vrot.lane.b32.xlu0 %v775, 120
  %v1549 = vpop.permute.xlu0 %1548
  %1550 = vrot.lane.b32.xlu0 %v777, 120
  %v1551 = vpop.permute.xlu0 %1550
  %1552 = vrot.lane.b32.xlu0 %v780, 120
  %v1553 = vpop.permute.xlu0 %1552
  %1554 = vrot.lane.b32.xlu0 %v782, 120
  %v1555 = vpop.permute.xlu0 %1554
  %1556 = vrot.lane.b32.xlu0 %v785, 120
  %v1557 = vpop.permute.xlu0 %1556
  %1558 = vrot.lane.b32.xlu0 %v787, 120
  %v1559 = vpop.permute.xlu0 %1558
  %1560 = vrot.lane.b32.xlu0 %v790, 120
  %v1561 = vpop.permute.xlu0 %1560
  %1562 = vrot.lane.b32.xlu0 %v792, 120
  %v1563 = vpop.permute.xlu0 %1562
  %1564 = vrot.lane.b32.xlu0 %v795, 120
  %v1565 = vpop.permute.xlu0 %1564
  %1566 = vrot.lane.b32.xlu0 %v797, 120
  %v1567 = vpop.permute.xlu0 %1566
  %1568 = vrot.lane.b32.xlu0 %v800, 120
  %v1569 = vpop.permute.xlu0 %1568
  %1570 = vrot.lane.b32.xlu0 %v802, 120
  %v1571 = vpop.permute.xlu0 %1570
  %1572 = vrot.lane.b32.xlu0 %v805, 120
  %v1573 = vpop.permute.xlu0 %1572
  %1574 = vrot.lane.b32.xlu0 %v807, 120
  %v1575 = vpop.permute.xlu0 %1574
  %1576 = vrot.lane.b32.xlu0 %v810, 120
  %v1577 = vpop.permute.xlu0 %1576
  %1578 = vrot.lane.b32.xlu0 %v812, 120
  %v1579 = vpop.permute.xlu0 %1578
  %1580 = vrot.lane.b32.xlu0 %v815, 120
  %v1581 = vpop.permute.xlu0 %1580
  %1582 = vrot.lane.b32.xlu0 %v817, 120
  %v1583 = vpop.permute.xlu0 %1582
  %1584 = vrot.lane.b32.xlu0 %v820, 120
  %v1585 = vpop.permute.xlu0 %1584
  %1586 = vrot.lane.b32.xlu0 %v822, 120
  %v1587 = vpop.permute.xlu0 %1586
  %1588 = vrot.lane.b32.xlu0 %v825, 120
  %v1589 = vpop.permute.xlu0 %1588
  %1590 = vrot.lane.b32.xlu0 %v827, 120
  %v1591 = vpop.permute.xlu0 %1590
  %1592 = vrot.lane.b32.xlu0 %v830, 120
  %v1593 = vpop.permute.xlu0 %1592
  %1594 = vrot.lane.b32.xlu0 %v832, 120
  %v1595 = vpop.permute.xlu0 %1594
  %1596 = vrot.lane.b32.xlu0 %v835, 120
  %v1597 = vpop.permute.xlu0 %1596
  %1598 = vrot.lane.b32.xlu0 %v837, 120
  %v1599 = vpop.permute.xlu0 %1598
  %1600 = vrot.lane.b32.xlu0 %v840, 120
  %v1601 = vpop.permute.xlu0 %1600
  %1602 = vrot.lane.b32.xlu0 %v842, 120
  %v1603 = vpop.permute.xlu0 %1602
  %1604 = vrot.lane.b32.xlu0 %v845, 120
  %v1605 = vpop.permute.xlu0 %1604
  %1606 = vrot.lane.b32.xlu0 %v847, 120
  %v1607 = vpop.permute.xlu0 %1606
  %1608 = vrot.lane.b32.xlu0 %v850, 120
  %v1609 = vpop.permute.xlu0 %1608
  %1610 = vrot.lane.b32.xlu0 %v852, 120
  %v1611 = vpop.permute.xlu0 %1610
  %1612 = vrot.lane.b32.xlu0 %v855, 120
  %v1613 = vpop.permute.xlu0 %1612
  %1614 = vrot.lane.b32.xlu0 %v857, 120
  %v1615 = vpop.permute.xlu0 %1614
  %1616 = vrot.lane.b32.xlu0 %v860, 120
  %v1617 = vpop.permute.xlu0 %1616
  %1618 = vrot.lane.b32.xlu0 %v862, 120
  %v1619 = vpop.permute.xlu0 %1618
  %1620 = vrot.lane.b32.xlu0 %v865, 120
  %v1621 = vpop.permute.xlu0 %1620
  %1622 = vrot.lane.b32.xlu0 %v867, 120
  %v1623 = vpop.permute.xlu0 %1622
  %1624 = vrot.lane.b32.xlu0 %v870, 120
  %v1625 = vpop.permute.xlu0 %1624
  %1626 = vrot.lane.b32.xlu0 %v872, 120
  %v1627 = vpop.permute.xlu0 %1626
  %1628 = vrot.lane.b32.xlu0 %v875, 120
  %v1629 = vpop.permute.xlu0 %1628
  %1630 = vrot.lane.b32.xlu0 %v877, 120
  %v1631 = vpop.permute.xlu0 %1630
  %1632 = vrot.lane.b32.xlu0 %v880, 120
  %v1633 = vpop.permute.xlu0 %1632
  %1634 = vrot.lane.b32.xlu0 %v882, 120
  %v1635 = vpop.permute.xlu0 %1634
  %1636 = vrot.lane.b32.xlu0 %v885, 120
  %v1637 = vpop.permute.xlu0 %1636
  %1638 = vrot.lane.b32.xlu0 %v887, 120
  %v1639 = vpop.permute.xlu0 %1638
  %1640 = vrot.lane.b32.xlu0 %v890, 120
  %v1641 = vpop.permute.xlu0 %1640
  %1642 = vrot.lane.b32.xlu0 %v892, 120
  %v1643 = vpop.permute.xlu0 %1642
  %1644 = vrot.lane.b32.xlu0 %v895, 120
  %v1645 = vpop.permute.xlu0 %1644
  %1646 = vrot.lane.b32.xlu0 %v897, 120
  %v1647 = vpop.permute.xlu0 %1646
  %1648 = vrot.lane.b32.xlu0 %v900, 120
  %v1649 = vpop.permute.xlu0 %1648
  %1650 = vrot.lane.b32.xlu0 %v902, 120
  %v1651 = vpop.permute.xlu0 %1650
  %1652 = vrot.lane.b32.xlu0 %v905, 120
  %v1653 = vpop.permute.xlu0 %1652
  %1654 = vrot.lane.b32.xlu0 %v907, 120
  %v1655 = vpop.permute.xlu0 %1654
  %1656 = vrot.lane.b32.xlu0 %v910, 120
  %v1657 = vpop.permute.xlu0 %1656
  %1658 = vrot.lane.b32.xlu0 %v912, 120
  %v1659 = vpop.permute.xlu0 %1658
  %1660 = vrot.lane.b32.xlu0 %v915, 120
  %v1661 = vpop.permute.xlu0 %1660
  %1662 = vrot.lane.b32.xlu0 %v917, 120
  %v1663 = vpop.permute.xlu0 %1662
  %1664 = vrot.lane.b32.xlu0 %v920, 120
  %v1665 = vpop.permute.xlu0 %1664
  %1666 = vrot.lane.b32.xlu0 %v922, 120
  %v1667 = vpop.permute.xlu0 %1666
  %1668 = vrot.lane.b32.xlu0 %v925, 120
  %v1669 = vpop.permute.xlu0 %1668
  %1670 = vrot.lane.b32.xlu0 %v927, 120
  %v1671 = vpop.permute.xlu0 %1670
  %1672 = vrot.lane.b32.xlu0 %v930, 120
  %v1673 = vpop.permute.xlu0 %1672
  %1674 = vrot.lane.b32.xlu0 %v932, 120
  %v1675 = vpop.permute.xlu0 %1674
  %1676 = vrot.lane.b32.xlu0 %v935, 120
  %v1677 = vpop.permute.xlu0 %1676
  %1678 = vrot.lane.b32.xlu0 %v937, 120
  %v1679 = vpop.permute.xlu0 %1678
  %1680 = vrot.lane.b32.xlu0 %v940, 120
  %v1681 = vpop.permute.xlu0 %1680
  %1682 = vrot.lane.b32.xlu0 %v942, 120
  %v1683 = vpop.permute.xlu0 %1682
  %1684 = vrot.lane.b32.xlu0 %v945, 120
  %v1685 = vpop.permute.xlu0 %1684
  %1686 = vrot.lane.b32.xlu0 %v947, 120
  %v1687 = vpop.permute.xlu0 %1686
  %1688 = vrot.lane.b32.xlu0 %v950, 120
  %v1689 = vpop.permute.xlu0 %1688
  %1690 = vrot.lane.b32.xlu0 %v952, 120
  %v1691 = vpop.permute.xlu0 %1690
  %1692 = vrot.lane.b32.xlu0 %v955, 120
  %v1693 = vpop.permute.xlu0 %1692
  %1694 = vrot.lane.b32.xlu0 %v957, 120
  %v1695 = vpop.permute.xlu0 %1694
  %1696 = vrot.lane.b32.xlu0 %v960, 120
  %v1697 = vpop.permute.xlu0 %1696
  %1698 = vrot.lane.b32.xlu0 %v962, 120
  %v1699 = vpop.permute.xlu0 %1698
  %1700 = vrot.lane.b32.xlu0 %v965, 120
  %v1701 = vpop.permute.xlu0 %1700
  %1702 = vrot.lane.b32.xlu0 %v967, 120
  %v1703 = vpop.permute.xlu0 %1702
  %1704 = vrot.lane.b32.xlu0 %v970, 120
  %v1705 = vpop.permute.xlu0 %1704
  %1706 = vrot.lane.b32.xlu0 %v972, 120
  %v1707 = vpop.permute.xlu0 %1706
  %1708 = vrot.lane.b32.xlu0 %v975, 120
  %v1709 = vpop.permute.xlu0 %1708
  %1710 = vrot.lane.b32.xlu0 %v977, 120
  %v1711 = vpop.permute.xlu0 %1710
  %1712 = vrot.lane.b32.xlu0 %v980, 120
  %v1713 = vpop.permute.xlu0 %1712
  %1714 = vrot.lane.b32.xlu0 %v982, 120
  %v1715 = vpop.permute.xlu0 %1714
  %1716 = vrot.lane.b32.xlu0 %v985, 120
  %v1717 = vpop.permute.xlu0 %1716
  %1718 = vrot.lane.b32.xlu0 %v987, 120
  %v1719 = vpop.permute.xlu0 %1718
  %1720 = vrot.lane.b32.xlu0 %v990, 120
  %v1721 = vpop.permute.xlu0 %1720
  %1722 = vrot.lane.b32.xlu0 %v992, 120
  %v1723 = vpop.permute.xlu0 %1722
  %1724 = vrot.lane.b32.xlu0 %v995, 120
  %v1725 = vpop.permute.xlu0 %1724
  %1726 = vrot.lane.b32.xlu0 %v997, 120
  %v1727 = vpop.permute.xlu0 %1726
  %1728 = vrot.lane.b32.xlu0 %v1000, 120
  %v1729 = vpop.permute.xlu0 %1728
  %1730 = vrot.lane.b32.xlu0 %v1002, 120
  %v1731 = vpop.permute.xlu0 %1730
  %1732 = vrot.lane.b32.xlu0 %v1005, 120
  %v1733 = vpop.permute.xlu0 %1732
  %1734 = vrot.lane.b32.xlu0 %v1007, 120
  %v1735 = vpop.permute.xlu0 %1734
  %1736 = vrot.lane.b32.xlu0 %v1010, 120
  %v1737 = vpop.permute.xlu0 %1736
  %1738 = vrot.lane.b32.xlu0 %v1012, 120
  %v1739 = vpop.permute.xlu0 %1738
  %1740 = vrot.lane.b32.xlu0 %v1015, 120
  %v1741 = vpop.permute.xlu0 %1740
  %1742 = vrot.lane.b32.xlu0 %v1017, 120
  %v1743 = vpop.permute.xlu0 %1742
  %1744 = vrot.lane.b32.xlu0 %v1020, 120
  %v1745 = vpop.permute.xlu0 %1744
  %1746 = vrot.lane.b32.xlu0 %v1022, 120
  %v1747 = vpop.permute.xlu0 %1746
  %1748 = vrot.lane.b32.xlu0 %v1025, 120
  %v1749 = vpop.permute.xlu0 %1748
  %1750 = vrot.lane.b32.xlu0 %v1027, 120
  %v1751 = vpop.permute.xlu0 %1750
  %1752 = vrot.lane.b32.xlu0 %v1030, 120
  %v1753 = vpop.permute.xlu0 %1752
  %1754 = vrot.lane.b32.xlu0 %v1032, 120
  %v1755 = vpop.permute.xlu0 %1754
  %1756 = vrot.lane.b32.xlu0 %v1035, 120
  %v1757 = vpop.permute.xlu0 %1756
  %1758 = vrot.lane.b32.xlu0 %v1037, 120
  %v1759 = vpop.permute.xlu0 %1758
  %1760 = vrot.lane.b32.xlu0 %v1040, 120
  %v1761 = vpop.permute.xlu0 %1760
  %1762 = vrot.lane.b32.xlu0 %v1042, 120
  %v1763 = vpop.permute.xlu0 %1762
  %v1764 = vmax.f32 %v1332, %v1477
  %v1765 = vmax.f32 %v1333, %v1479
  %v1766 = vmax.f32 %v1334, %v1481
  %v1767 = vmax.f32 %v1335, %v1483
  %v1768 = vmax.f32 %v1336, %v1485
  %v1769 = vmax.f32 %v1337, %v1487
  %v1770 = vmax.f32 %v1338, %v1489
  %v1771 = vmax.f32 %v1339, %v1491
  %v1772 = vmax.f32 %v1340, %v1493
  %v1773 = vmax.f32 %v1341, %v1495
  %v1774 = vmax.f32 %v1342, %v1497
  %v1775 = vmax.f32 %v1343, %v1499
  %v1776 = vmax.f32 %v1344, %v1501
  %v1777 = vmax.f32 %v1345, %v1503
  %v1778 = vmax.f32 %v1346, %v1505
  %v1779 = vmax.f32 %v1347, %v1507
  %v1780 = vmax.f32 %v1348, %v1509
  %v1781 = vmax.f32 %v1349, %v1511
  %v1782 = vmax.f32 %v1350, %v1513
  %v1783 = vmax.f32 %v1351, %v1515
  %v1784 = vmax.f32 %v1352, %v1517
  %v1785 = vmax.f32 %v1353, %v1519
  %v1786 = vmax.f32 %v1354, %v1521
  %v1787 = vmax.f32 %v1355, %v1523
  %v1788 = vmax.f32 %v1356, %v1525
  %v1789 = vmax.f32 %v1357, %v1527
  %v1790 = vmax.f32 %v1358, %v1529
  %v1791 = vmax.f32 %v1359, %v1531
  %v1792 = vmax.f32 %v1360, %v1533
  %v1793 = vmax.f32 %v1361, %v1535
  %v1794 = vmax.f32 %v1362, %v1537
  %v1795 = vmax.f32 %v1363, %v1539
  %v1796 = vmax.f32 %v1364, %v1541
  %v1797 = vmax.f32 %v1365, %v1543
  %v1798 = vmax.f32 %v1366, %v1545
  %v1799 = vmax.f32 %v1367, %v1547
  %v1800 = vmax.f32 %v1368, %v1549
  %v1801 = vmax.f32 %v1369, %v1551
  %v1802 = vmax.f32 %v1370, %v1553
  %v1803 = vmax.f32 %v1371, %v1555
  %v1804 = vmax.f32 %v1372, %v1557
  %v1805 = vmax.f32 %v1373, %v1559
  %v1806 = vmax.f32 %v1374, %v1561
  %v1807 = vmax.f32 %v1375, %v1563
  %v1808 = vmax.f32 %v1376, %v1565
  %v1809 = vmax.f32 %v1377, %v1567
  %v1810 = vmax.f32 %v1378, %v1569
  %v1811 = vmax.f32 %v1379, %v1571
  %v1812 = vmax.f32 %v1380, %v1573
  %v1813 = vmax.f32 %v1381, %v1575
  %v1814 = vmax.f32 %v1382, %v1577
  %v1815 = vmax.f32 %v1383, %v1579
  %v1816 = vmax.f32 %v1384, %v1581
  %v1817 = vmax.f32 %v1385, %v1583
  %v1818 = vmax.f32 %v1386, %v1585
  %v1819 = vmax.f32 %v1387, %v1587
  %v1820 = vmax.f32 %v1388, %v1589
  %v1821 = vmax.f32 %v1389, %v1591
  %v1822 = vmax.f32 %v1390, %v1593
  %v1823 = vmax.f32 %v1391, %v1595
  %v1824 = vmax.f32 %v1392, %v1597
  %v1825 = vmax.f32 %v1393, %v1599
  %v1826 = vmax.f32 %v1394, %v1601
  %v1827 = vmax.f32 %v1395, %v1603
  %v1828 = vmax.f32 %v1396, %v1605
  %v1829 = vmax.f32 %v1397, %v1607
  %v1830 = vmax.f32 %v1398, %v1609
  %v1831 = vmax.f32 %v1399, %v1611
  %v1832 = vmax.f32 %v1400, %v1613
  %v1833 = vmax.f32 %v1401, %v1615
  %v1834 = vmax.f32 %v1402, %v1617
  %v1835 = vmax.f32 %v1403, %v1619
  %v1836 = vmax.f32 %v1404, %v1621
  %v1837 = vmax.f32 %v1405, %v1623
  %v1838 = vmax.f32 %v1406, %v1625
  %v1839 = vmax.f32 %v1407, %v1627
  %v1840 = vmax.f32 %v1408, %v1629
  %v1841 = vmax.f32 %v1409, %v1631
  %v1842 = vmax.f32 %v1410, %v1633
  %v1843 = vmax.f32 %v1411, %v1635
  %v1844 = vmax.f32 %v1412, %v1637
  %v1845 = vmax.f32 %v1413, %v1639
  %v1846 = vmax.f32 %v1414, %v1641
  %v1847 = vmax.f32 %v1415, %v1643
  %v1848 = vmax.f32 %v1416, %v1645
  %v1849 = vmax.f32 %v1417, %v1647
  %v1850 = vmax.f32 %v1418, %v1649
  %v1851 = vmax.f32 %v1419, %v1651
  %v1852 = vmax.f32 %v1420, %v1653
  %v1853 = vmax.f32 %v1421, %v1655
  %v1854 = vmax.f32 %v1422, %v1657
  %v1855 = vmax.f32 %v1423, %v1659
  %v1856 = vmax.f32 %v1424, %v1661
  %v1857 = vmax.f32 %v1425, %v1663
  %v1858 = vmax.f32 %v1426, %v1665
  %v1859 = vmax.f32 %v1427, %v1667
  %v1860 = vmax.f32 %v1428, %v1669
  %v1861 = vmax.f32 %v1429, %v1671
  %v1862 = vmax.f32 %v1430, %v1673
  %v1863 = vmax.f32 %v1431, %v1675
  %v1864 = vmax.f32 %v1432, %v1677
  %v1865 = vmax.f32 %v1433, %v1679
  %v1866 = vmax.f32 %v1434, %v1681
  %v1867 = vmax.f32 %v1435, %v1683
  %v1868 = vmax.f32 %v1436, %v1685
  %v1869 = vmax.f32 %v1437, %v1687
  %v1870 = vmax.f32 %v1438, %v1689
  %v1871 = vmax.f32 %v1439, %v1691
  %v1872 = vmax.f32 %v1440, %v1693
  %v1873 = vmax.f32 %v1441, %v1695
  %v1874 = vmax.f32 %v1442, %v1697
  %v1875 = vmax.f32 %v1443, %v1699
  %v1876 = vmax.f32 %v1444, %v1701
  %v1877 = vmax.f32 %v1445, %v1703
  %v1878 = vmax.f32 %v1446, %v1705
  %v1879 = vmax.f32 %v1447, %v1707
  %v1880 = vmax.f32 %v1448, %v1709
  %v1881 = vmax.f32 %v1449, %v1711
  %v1882 = vmax.f32 %v1450, %v1713
  %v1883 = vmax.f32 %v1451, %v1715
  %v1884 = vmax.f32 %v1452, %v1717
  %v1885 = vmax.f32 %v1453, %v1719
  %v1886 = vmax.f32 %v1454, %v1721
  %v1887 = vmax.f32 %v1455, %v1723
  %v1888 = vmax.f32 %v1456, %v1725
  %v1889 = vmax.f32 %v1457, %v1727
  %v1890 = vmax.f32 %v1458, %v1729
  %v1891 = vmax.f32 %v1459, %v1731
  %v1892 = vmax.f32 %v1460, %v1733
  %v1893 = vmax.f32 %v1461, %v1735
  %v1894 = vmax.f32 %v1462, %v1737
  %v1895 = vmax.f32 %v1463, %v1739
  %v1896 = vmax.f32 %v1464, %v1741
  %v1897 = vmax.f32 %v1465, %v1743
  %v1898 = vmax.f32 %v1466, %v1745
  %v1899 = vmax.f32 %v1467, %v1747
  %v1900 = vmax.f32 %v1468, %v1749
  %v1901 = vmax.f32 %v1469, %v1751
  %v1902 = vmax.f32 %v1470, %v1753
  %v1903 = vmax.f32 %v1471, %v1755
  %v1904 = vmax.f32 %v1472, %v1757
  %v1905 = vmax.f32 %v1473, %v1759
  %v1906 = vmax.f32 %v1474, %v1761
  %v1907 = vmax.f32 %v1475, %v1763
  %1908 = vrot.lane.b32.xlu0 %v685, 116
  %v1909 = vpop.permute.xlu0 %1908
  %1910 = vrot.lane.b32.xlu0 %v687, 116
  %v1911 = vpop.permute.xlu0 %1910
  %1912 = vrot.lane.b32.xlu0 %v690, 116
  %v1913 = vpop.permute.xlu0 %1912
  %1914 = vrot.lane.b32.xlu0 %v692, 116
  %v1915 = vpop.permute.xlu0 %1914
  %1916 = vrot.lane.b32.xlu0 %v695, 116
  %v1917 = vpop.permute.xlu0 %1916
  %1918 = vrot.lane.b32.xlu0 %v697, 116
  %v1919 = vpop.permute.xlu0 %1918
  %1920 = vrot.lane.b32.xlu0 %v700, 116
  %v1921 = vpop.permute.xlu0 %1920
  %1922 = vrot.lane.b32.xlu0 %v702, 116
  %v1923 = vpop.permute.xlu0 %1922
  %1924 = vrot.lane.b32.xlu0 %v705, 116
  %v1925 = vpop.permute.xlu0 %1924
  %1926 = vrot.lane.b32.xlu0 %v707, 116
  %v1927 = vpop.permute.xlu0 %1926
  %1928 = vrot.lane.b32.xlu0 %v710, 116
  %v1929 = vpop.permute.xlu0 %1928
  %1930 = vrot.lane.b32.xlu0 %v712, 116
  %v1931 = vpop.permute.xlu0 %1930
  %1932 = vrot.lane.b32.xlu0 %v715, 116
  %v1933 = vpop.permute.xlu0 %1932
  %1934 = vrot.lane.b32.xlu0 %v717, 116
  %v1935 = vpop.permute.xlu0 %1934
  %1936 = vrot.lane.b32.xlu0 %v720, 116
  %v1937 = vpop.permute.xlu0 %1936
  %1938 = vrot.lane.b32.xlu0 %v722, 116
  %v1939 = vpop.permute.xlu0 %1938
  %1940 = vrot.lane.b32.xlu0 %v725, 116
  %v1941 = vpop.permute.xlu0 %1940
  %1942 = vrot.lane.b32.xlu0 %v727, 116
  %v1943 = vpop.permute.xlu0 %1942
  %1944 = vrot.lane.b32.xlu0 %v730, 116
  %v1945 = vpop.permute.xlu0 %1944
  %1946 = vrot.lane.b32.xlu0 %v732, 116
  %v1947 = vpop.permute.xlu0 %1946
  %1948 = vrot.lane.b32.xlu0 %v735, 116
  %v1949 = vpop.permute.xlu0 %1948
  %1950 = vrot.lane.b32.xlu0 %v737, 116
  %v1951 = vpop.permute.xlu0 %1950
  %1952 = vrot.lane.b32.xlu0 %v740, 116
  %v1953 = vpop.permute.xlu0 %1952
  %1954 = vrot.lane.b32.xlu0 %v742, 116
  %v1955 = vpop.permute.xlu0 %1954
  %1956 = vrot.lane.b32.xlu0 %v745, 116
  %v1957 = vpop.permute.xlu0 %1956
  %1958 = vrot.lane.b32.xlu0 %v747, 116
  %v1959 = vpop.permute.xlu0 %1958
  %1960 = vrot.lane.b32.xlu0 %v750, 116
  %v1961 = vpop.permute.xlu0 %1960
  %1962 = vrot.lane.b32.xlu0 %v752, 116
  %v1963 = vpop.permute.xlu0 %1962
  %1964 = vrot.lane.b32.xlu0 %v755, 116
  %v1965 = vpop.permute.xlu0 %1964
  %1966 = vrot.lane.b32.xlu0 %v757, 116
  %v1967 = vpop.permute.xlu0 %1966
  %1968 = vrot.lane.b32.xlu0 %v760, 116
  %v1969 = vpop.permute.xlu0 %1968
  %1970 = vrot.lane.b32.xlu0 %v762, 116
  %v1971 = vpop.permute.xlu0 %1970
  %1972 = vrot.lane.b32.xlu0 %v765, 116
  %v1973 = vpop.permute.xlu0 %1972
  %1974 = vrot.lane.b32.xlu0 %v767, 116
  %v1975 = vpop.permute.xlu0 %1974
  %1976 = vrot.lane.b32.xlu0 %v770, 116
  %v1977 = vpop.permute.xlu0 %1976
  %1978 = vrot.lane.b32.xlu0 %v772, 116
  %v1979 = vpop.permute.xlu0 %1978
  %1980 = vrot.lane.b32.xlu0 %v775, 116
  %v1981 = vpop.permute.xlu0 %1980
  %1982 = vrot.lane.b32.xlu0 %v777, 116
  %v1983 = vpop.permute.xlu0 %1982
  %1984 = vrot.lane.b32.xlu0 %v780, 116
  %v1985 = vpop.permute.xlu0 %1984
  %1986 = vrot.lane.b32.xlu0 %v782, 116
  %v1987 = vpop.permute.xlu0 %1986
  %1988 = vrot.lane.b32.xlu0 %v785, 116
  %v1989 = vpop.permute.xlu0 %1988
  %1990 = vrot.lane.b32.xlu0 %v787, 116
  %v1991 = vpop.permute.xlu0 %1990
  %1992 = vrot.lane.b32.xlu0 %v790, 116
  %v1993 = vpop.permute.xlu0 %1992
  %1994 = vrot.lane.b32.xlu0 %v792, 116
  %v1995 = vpop.permute.xlu0 %1994
  %1996 = vrot.lane.b32.xlu0 %v795, 116
  %v1997 = vpop.permute.xlu0 %1996
  %1998 = vrot.lane.b32.xlu0 %v797, 116
  %v1999 = vpop.permute.xlu0 %1998
  %2000 = vrot.lane.b32.xlu0 %v800, 116
  %v2001 = vpop.permute.xlu0 %2000
  %2002 = vrot.lane.b32.xlu0 %v802, 116
  %v2003 = vpop.permute.xlu0 %2002
  %2004 = vrot.lane.b32.xlu0 %v805, 116
  %v2005 = vpop.permute.xlu0 %2004
  %2006 = vrot.lane.b32.xlu0 %v807, 116
  %v2007 = vpop.permute.xlu0 %2006
  %2008 = vrot.lane.b32.xlu0 %v810, 116
  %v2009 = vpop.permute.xlu0 %2008
  %2010 = vrot.lane.b32.xlu0 %v812, 116
  %v2011 = vpop.permute.xlu0 %2010
  %2012 = vrot.lane.b32.xlu0 %v815, 116
  %v2013 = vpop.permute.xlu0 %2012
  %2014 = vrot.lane.b32.xlu0 %v817, 116
  %v2015 = vpop.permute.xlu0 %2014
  %2016 = vrot.lane.b32.xlu0 %v820, 116
  %v2017 = vpop.permute.xlu0 %2016
  %2018 = vrot.lane.b32.xlu0 %v822, 116
  %v2019 = vpop.permute.xlu0 %2018
  %2020 = vrot.lane.b32.xlu0 %v825, 116
  %v2021 = vpop.permute.xlu0 %2020
  %2022 = vrot.lane.b32.xlu0 %v827, 116
  %v2023 = vpop.permute.xlu0 %2022
  %2024 = vrot.lane.b32.xlu0 %v830, 116
  %v2025 = vpop.permute.xlu0 %2024
  %2026 = vrot.lane.b32.xlu0 %v832, 116
  %v2027 = vpop.permute.xlu0 %2026
  %2028 = vrot.lane.b32.xlu0 %v835, 116
  %v2029 = vpop.permute.xlu0 %2028
  %2030 = vrot.lane.b32.xlu0 %v837, 116
  %v2031 = vpop.permute.xlu0 %2030
  %2032 = vrot.lane.b32.xlu0 %v840, 116
  %v2033 = vpop.permute.xlu0 %2032
  %2034 = vrot.lane.b32.xlu0 %v842, 116
  %v2035 = vpop.permute.xlu0 %2034
  %2036 = vrot.lane.b32.xlu0 %v845, 116
  %v2037 = vpop.permute.xlu0 %2036
  %2038 = vrot.lane.b32.xlu0 %v847, 116
  %v2039 = vpop.permute.xlu0 %2038
  %2040 = vrot.lane.b32.xlu0 %v850, 116
  %v2041 = vpop.permute.xlu0 %2040
  %2042 = vrot.lane.b32.xlu0 %v852, 116
  %v2043 = vpop.permute.xlu0 %2042
  %2044 = vrot.lane.b32.xlu0 %v855, 116
  %v2045 = vpop.permute.xlu0 %2044
  %2046 = vrot.lane.b32.xlu0 %v857, 116
  %v2047 = vpop.permute.xlu0 %2046
  %2048 = vrot.lane.b32.xlu0 %v860, 116
  %v2049 = vpop.permute.xlu0 %2048
  %2050 = vrot.lane.b32.xlu0 %v862, 116
  %v2051 = vpop.permute.xlu0 %2050
  %2052 = vrot.lane.b32.xlu0 %v865, 116
  %v2053 = vpop.permute.xlu0 %2052
  %2054 = vrot.lane.b32.xlu0 %v867, 116
  %v2055 = vpop.permute.xlu0 %2054
  %2056 = vrot.lane.b32.xlu0 %v870, 116
  %v2057 = vpop.permute.xlu0 %2056
  %2058 = vrot.lane.b32.xlu0 %v872, 116
  %v2059 = vpop.permute.xlu0 %2058
  %2060 = vrot.lane.b32.xlu0 %v875, 116
  %v2061 = vpop.permute.xlu0 %2060
  %2062 = vrot.lane.b32.xlu0 %v877, 116
  %v2063 = vpop.permute.xlu0 %2062
  %2064 = vrot.lane.b32.xlu0 %v880, 116
  %v2065 = vpop.permute.xlu0 %2064
  %2066 = vrot.lane.b32.xlu0 %v882, 116
  %v2067 = vpop.permute.xlu0 %2066
  %2068 = vrot.lane.b32.xlu0 %v885, 116
  %v2069 = vpop.permute.xlu0 %2068
  %2070 = vrot.lane.b32.xlu0 %v887, 116
  %v2071 = vpop.permute.xlu0 %2070
  %2072 = vrot.lane.b32.xlu0 %v890, 116
  %v2073 = vpop.permute.xlu0 %2072
  %2074 = vrot.lane.b32.xlu0 %v892, 116
  %v2075 = vpop.permute.xlu0 %2074
  %2076 = vrot.lane.b32.xlu0 %v895, 116
  %v2077 = vpop.permute.xlu0 %2076
  %2078 = vrot.lane.b32.xlu0 %v897, 116
  %v2079 = vpop.permute.xlu0 %2078
  %2080 = vrot.lane.b32.xlu0 %v900, 116
  %v2081 = vpop.permute.xlu0 %2080
  %2082 = vrot.lane.b32.xlu0 %v902, 116
  %v2083 = vpop.permute.xlu0 %2082
  %2084 = vrot.lane.b32.xlu0 %v905, 116
  %v2085 = vpop.permute.xlu0 %2084
  %2086 = vrot.lane.b32.xlu0 %v907, 116
  %v2087 = vpop.permute.xlu0 %2086
  %2088 = vrot.lane.b32.xlu0 %v910, 116
  %v2089 = vpop.permute.xlu0 %2088
  %2090 = vrot.lane.b32.xlu0 %v912, 116
  %v2091 = vpop.permute.xlu0 %2090
  %2092 = vrot.lane.b32.xlu0 %v915, 116
  %v2093 = vpop.permute.xlu0 %2092
  %2094 = vrot.lane.b32.xlu0 %v917, 116
  %v2095 = vpop.permute.xlu0 %2094
  %2096 = vrot.lane.b32.xlu0 %v920, 116
  %v2097 = vpop.permute.xlu0 %2096
  %2098 = vrot.lane.b32.xlu0 %v922, 116
  %v2099 = vpop.permute.xlu0 %2098
  %2100 = vrot.lane.b32.xlu0 %v925, 116
  %v2101 = vpop.permute.xlu0 %2100
  %2102 = vrot.lane.b32.xlu0 %v927, 116
  %v2103 = vpop.permute.xlu0 %2102
  %2104 = vrot.lane.b32.xlu0 %v930, 116
  %v2105 = vpop.permute.xlu0 %2104
  %2106 = vrot.lane.b32.xlu0 %v932, 116
  %v2107 = vpop.permute.xlu0 %2106
  %2108 = vrot.lane.b32.xlu0 %v935, 116
  %v2109 = vpop.permute.xlu0 %2108
  %2110 = vrot.lane.b32.xlu0 %v937, 116
  %v2111 = vpop.permute.xlu0 %2110
  %2112 = vrot.lane.b32.xlu0 %v940, 116
  %v2113 = vpop.permute.xlu0 %2112
  %2114 = vrot.lane.b32.xlu0 %v942, 116
  %v2115 = vpop.permute.xlu0 %2114
  %2116 = vrot.lane.b32.xlu0 %v945, 116
  %v2117 = vpop.permute.xlu0 %2116
  %2118 = vrot.lane.b32.xlu0 %v947, 116
  %v2119 = vpop.permute.xlu0 %2118
  %2120 = vrot.lane.b32.xlu0 %v950, 116
  %v2121 = vpop.permute.xlu0 %2120
  %2122 = vrot.lane.b32.xlu0 %v952, 116
  %v2123 = vpop.permute.xlu0 %2122
  %2124 = vrot.lane.b32.xlu0 %v955, 116
  %v2125 = vpop.permute.xlu0 %2124
  %2126 = vrot.lane.b32.xlu0 %v957, 116
  %v2127 = vpop.permute.xlu0 %2126
  %2128 = vrot.lane.b32.xlu0 %v960, 116
  %v2129 = vpop.permute.xlu0 %2128
  %2130 = vrot.lane.b32.xlu0 %v962, 116
  %v2131 = vpop.permute.xlu0 %2130
  %2132 = vrot.lane.b32.xlu0 %v965, 116
  %v2133 = vpop.permute.xlu0 %2132
  %2134 = vrot.lane.b32.xlu0 %v967, 116
  %v2135 = vpop.permute.xlu0 %2134
  %2136 = vrot.lane.b32.xlu0 %v970, 116
  %v2137 = vpop.permute.xlu0 %2136
  %2138 = vrot.lane.b32.xlu0 %v972, 116
  %v2139 = vpop.permute.xlu0 %2138
  %2140 = vrot.lane.b32.xlu0 %v975, 116
  %v2141 = vpop.permute.xlu0 %2140
  %2142 = vrot.lane.b32.xlu0 %v977, 116
  %v2143 = vpop.permute.xlu0 %2142
  %2144 = vrot.lane.b32.xlu0 %v980, 116
  %v2145 = vpop.permute.xlu0 %2144
  %2146 = vrot.lane.b32.xlu0 %v982, 116
  %v2147 = vpop.permute.xlu0 %2146
  %2148 = vrot.lane.b32.xlu0 %v985, 116
  %v2149 = vpop.permute.xlu0 %2148
  %2150 = vrot.lane.b32.xlu0 %v987, 116
  %v2151 = vpop.permute.xlu0 %2150
  %2152 = vrot.lane.b32.xlu0 %v990, 116
  %v2153 = vpop.permute.xlu0 %2152
  %2154 = vrot.lane.b32.xlu0 %v992, 116
  %v2155 = vpop.permute.xlu0 %2154
  %2156 = vrot.lane.b32.xlu0 %v995, 116
  %v2157 = vpop.permute.xlu0 %2156
  %2158 = vrot.lane.b32.xlu0 %v997, 116
  %v2159 = vpop.permute.xlu0 %2158
  %2160 = vrot.lane.b32.xlu0 %v1000, 116
  %v2161 = vpop.permute.xlu0 %2160
  %2162 = vrot.lane.b32.xlu0 %v1002, 116
  %v2163 = vpop.permute.xlu0 %2162
  %2164 = vrot.lane.b32.xlu0 %v1005, 116
  %v2165 = vpop.permute.xlu0 %2164
  %2166 = vrot.lane.b32.xlu0 %v1007, 116
  %v2167 = vpop.permute.xlu0 %2166
  %2168 = vrot.lane.b32.xlu0 %v1010, 116
  %v2169 = vpop.permute.xlu0 %2168
  %2170 = vrot.lane.b32.xlu0 %v1012, 116
  %v2171 = vpop.permute.xlu0 %2170
  %2172 = vrot.lane.b32.xlu0 %v1015, 116
  %v2173 = vpop.permute.xlu0 %2172
  %2174 = vrot.lane.b32.xlu0 %v1017, 116
  %v2175 = vpop.permute.xlu0 %2174
  %2176 = vrot.lane.b32.xlu0 %v1020, 116
  %v2177 = vpop.permute.xlu0 %2176
  %2178 = vrot.lane.b32.xlu0 %v1022, 116
  %v2179 = vpop.permute.xlu0 %2178
  %2180 = vrot.lane.b32.xlu0 %v1025, 116
  %v2181 = vpop.permute.xlu0 %2180
  %2182 = vrot.lane.b32.xlu0 %v1027, 116
  %v2183 = vpop.permute.xlu0 %2182
  %2184 = vrot.lane.b32.xlu0 %v1030, 116
  %v2185 = vpop.permute.xlu0 %2184
  %2186 = vrot.lane.b32.xlu0 %v1032, 116
  %v2187 = vpop.permute.xlu0 %2186
  %2188 = vrot.lane.b32.xlu0 %v1035, 116
  %v2189 = vpop.permute.xlu0 %2188
  %2190 = vrot.lane.b32.xlu0 %v1037, 116
  %v2191 = vpop.permute.xlu0 %2190
  %2192 = vrot.lane.b32.xlu0 %v1040, 116
  %v2193 = vpop.permute.xlu0 %2192
  %2194 = vrot.lane.b32.xlu0 %v1042, 116
  %v2195 = vpop.permute.xlu0 %2194
  %v2196 = vmax.f32 %v1764, %v1909
  %v2197 = vmax.f32 %v1765, %v1911
  %v2198 = vmax.f32 %v1766, %v1913
  %v2199 = vmax.f32 %v1767, %v1915
  %v2200 = vmax.f32 %v1768, %v1917
  %v2201 = vmax.f32 %v1769, %v1919
  %v2202 = vmax.f32 %v1770, %v1921
  %v2203 = vmax.f32 %v1771, %v1923
  %v2204 = vmax.f32 %v1772, %v1925
  %v2205 = vmax.f32 %v1773, %v1927
  %v2206 = vmax.f32 %v1774, %v1929
  %v2207 = vmax.f32 %v1775, %v1931
  %v2208 = vmax.f32 %v1776, %v1933
  %v2209 = vmax.f32 %v1777, %v1935
  %v2210 = vmax.f32 %v1778, %v1937
  %v2211 = vmax.f32 %v1779, %v1939
  %v2212 = vmax.f32 %v1780, %v1941
  %v2213 = vmax.f32 %v1781, %v1943
  %v2214 = vmax.f32 %v1782, %v1945
  %v2215 = vmax.f32 %v1783, %v1947
  %v2216 = vmax.f32 %v1784, %v1949
  %v2217 = vmax.f32 %v1785, %v1951
  %v2218 = vmax.f32 %v1786, %v1953
  %v2219 = vmax.f32 %v1787, %v1955
  %v2220 = vmax.f32 %v1788, %v1957
  %v2221 = vmax.f32 %v1789, %v1959
  %v2222 = vmax.f32 %v1790, %v1961
  %v2223 = vmax.f32 %v1791, %v1963
  %v2224 = vmax.f32 %v1792, %v1965
  %v2225 = vmax.f32 %v1793, %v1967
  %v2226 = vmax.f32 %v1794, %v1969
  %v2227 = vmax.f32 %v1795, %v1971
  %v2228 = vmax.f32 %v1796, %v1973
  %v2229 = vmax.f32 %v1797, %v1975
  %v2230 = vmax.f32 %v1798, %v1977
  %v2231 = vmax.f32 %v1799, %v1979
  %v2232 = vmax.f32 %v1800, %v1981
  %v2233 = vmax.f32 %v1801, %v1983
  %v2234 = vmax.f32 %v1802, %v1985
  %v2235 = vmax.f32 %v1803, %v1987
  %v2236 = vmax.f32 %v1804, %v1989
  %v2237 = vmax.f32 %v1805, %v1991
  %v2238 = vmax.f32 %v1806, %v1993
  %v2239 = vmax.f32 %v1807, %v1995
  %v2240 = vmax.f32 %v1808, %v1997
  %v2241 = vmax.f32 %v1809, %v1999
  %v2242 = vmax.f32 %v1810, %v2001
  %v2243 = vmax.f32 %v1811, %v2003
  %v2244 = vmax.f32 %v1812, %v2005
  %v2245 = vmax.f32 %v1813, %v2007
  %v2246 = vmax.f32 %v1814, %v2009
  %v2247 = vmax.f32 %v1815, %v2011
  %v2248 = vmax.f32 %v1816, %v2013
  %v2249 = vmax.f32 %v1817, %v2015
  %v2250 = vmax.f32 %v1818, %v2017
  %v2251 = vmax.f32 %v1819, %v2019
  %v2252 = vmax.f32 %v1820, %v2021
  %v2253 = vmax.f32 %v1821, %v2023
  %v2254 = vmax.f32 %v1822, %v2025
  %v2255 = vmax.f32 %v1823, %v2027
  %v2256 = vmax.f32 %v1824, %v2029
  %v2257 = vmax.f32 %v1825, %v2031
  %v2258 = vmax.f32 %v1826, %v2033
  %v2259 = vmax.f32 %v1827, %v2035
  %v2260 = vmax.f32 %v1828, %v2037
  %v2261 = vmax.f32 %v1829, %v2039
  %v2262 = vmax.f32 %v1830, %v2041
  %v2263 = vmax.f32 %v1831, %v2043
  %v2264 = vmax.f32 %v1832, %v2045
  %v2265 = vmax.f32 %v1833, %v2047
  %v2266 = vmax.f32 %v1834, %v2049
  %v2267 = vmax.f32 %v1835, %v2051
  %v2268 = vmax.f32 %v1836, %v2053
  %v2269 = vmax.f32 %v1837, %v2055
  %v2270 = vmax.f32 %v1838, %v2057
  %v2271 = vmax.f32 %v1839, %v2059
  %v2272 = vmax.f32 %v1840, %v2061
  %v2273 = vmax.f32 %v1841, %v2063
  %v2274 = vmax.f32 %v1842, %v2065
  %v2275 = vmax.f32 %v1843, %v2067
  %v2276 = vmax.f32 %v1844, %v2069
  %v2277 = vmax.f32 %v1845, %v2071
  %v2278 = vmax.f32 %v1846, %v2073
  %v2279 = vmax.f32 %v1847, %v2075
  %v2280 = vmax.f32 %v1848, %v2077
  %v2281 = vmax.f32 %v1849, %v2079
  %v2282 = vmax.f32 %v1850, %v2081
  %v2283 = vmax.f32 %v1851, %v2083
  %v2284 = vmax.f32 %v1852, %v2085
  %v2285 = vmax.f32 %v1853, %v2087
  %v2286 = vmax.f32 %v1854, %v2089
  %v2287 = vmax.f32 %v1855, %v2091
  %v2288 = vmax.f32 %v1856, %v2093
  %v2289 = vmax.f32 %v1857, %v2095
  %v2290 = vmax.f32 %v1858, %v2097
  %v2291 = vmax.f32 %v1859, %v2099
  %v2292 = vmax.f32 %v1860, %v2101
  %v2293 = vmax.f32 %v1861, %v2103
  %v2294 = vmax.f32 %v1862, %v2105
  %v2295 = vmax.f32 %v1863, %v2107
  %v2296 = vmax.f32 %v1864, %v2109
  %v2297 = vmax.f32 %v1865, %v2111
  %v2298 = vmax.f32 %v1866, %v2113
  %v2299 = vmax.f32 %v1867, %v2115
  %v2300 = vmax.f32 %v1868, %v2117
  %v2301 = vmax.f32 %v1869, %v2119
  %v2302 = vmax.f32 %v1870, %v2121
  %v2303 = vmax.f32 %v1871, %v2123
  %v2304 = vmax.f32 %v1872, %v2125
  %v2305 = vmax.f32 %v1873, %v2127
  %v2306 = vmax.f32 %v1874, %v2129
  %v2307 = vmax.f32 %v1875, %v2131
  %v2308 = vmax.f32 %v1876, %v2133
  %v2309 = vmax.f32 %v1877, %v2135
  %v2310 = vmax.f32 %v1878, %v2137
  %v2311 = vmax.f32 %v1879, %v2139
  %v2312 = vmax.f32 %v1880, %v2141
  %v2313 = vmax.f32 %v1881, %v2143
  %v2314 = vmax.f32 %v1882, %v2145
  %v2315 = vmax.f32 %v1883, %v2147
  %v2316 = vmax.f32 %v1884, %v2149
  %v2317 = vmax.f32 %v1885, %v2151
  %v2318 = vmax.f32 %v1886, %v2153
  %v2319 = vmax.f32 %v1887, %v2155
  %v2320 = vmax.f32 %v1888, %v2157
  %v2321 = vmax.f32 %v1889, %v2159
  %v2322 = vmax.f32 %v1890, %v2161
  %v2323 = vmax.f32 %v1891, %v2163
  %v2324 = vmax.f32 %v1892, %v2165
  %v2325 = vmax.f32 %v1893, %v2167
  %v2326 = vmax.f32 %v1894, %v2169
  %v2327 = vmax.f32 %v1895, %v2171
  %v2328 = vmax.f32 %v1896, %v2173
  %v2329 = vmax.f32 %v1897, %v2175
  %v2330 = vmax.f32 %v1898, %v2177
  %v2331 = vmax.f32 %v1899, %v2179
  %v2332 = vmax.f32 %v1900, %v2181
  %v2333 = vmax.f32 %v1901, %v2183
  %v2334 = vmax.f32 %v1902, %v2185
  %v2335 = vmax.f32 %v1903, %v2187
  %v2336 = vmax.f32 %v1904, %v2189
  %v2337 = vmax.f32 %v1905, %v2191
  %v2338 = vmax.f32 %v1906, %v2193
  %v2339 = vmax.f32 %v1907, %v2195
  %v2340 = vlaneseq
  %v2341 = vand.u32 %v2340, 127
  %vm2342 = vcmp.lt.s32.totalorder %v2341, 4
  %v2343 = vsel %vm2342, 1, 0
  %v2344 = vcvt.s32.f32 %v2343
  %v2345 = vld [vmem:[%s2] sm:$0x1]
  %v2347 = vperm.slane %v2345, 0
  %v2349 = vadd.f32 %v2196, %v2347
  %v2350 = vadd.f32 %v2197, %v2347
  %v2351 = vadd.f32 %v2198, %v2347
  %v2352 = vadd.f32 %v2199, %v2347
  %v2353 = vadd.f32 %v2200, %v2347
  %v2354 = vadd.f32 %v2201, %v2347
  %v2355 = vadd.f32 %v2202, %v2347
  %v2356 = vadd.f32 %v2203, %v2347
  %v2357 = vadd.f32 %v2204, %v2347
  %v2358 = vadd.f32 %v2205, %v2347
  %v2359 = vadd.f32 %v2206, %v2347
  %v2360 = vadd.f32 %v2207, %v2347
  %v2361 = vadd.f32 %v2208, %v2347
  %v2362 = vadd.f32 %v2209, %v2347
  %v2363 = vadd.f32 %v2210, %v2347
  %v2364 = vadd.f32 %v2211, %v2347
  %v2365 = vadd.f32 %v2212, %v2347
  %v2366 = vadd.f32 %v2213, %v2347
  %v2367 = vadd.f32 %v2214, %v2347
  %v2368 = vadd.f32 %v2215, %v2347
  %v2369 = vadd.f32 %v2216, %v2347
  %v2370 = vadd.f32 %v2217, %v2347
  %v2371 = vadd.f32 %v2218, %v2347
  %v2372 = vadd.f32 %v2219, %v2347
  %v2373 = vadd.f32 %v2220, %v2347
  %v2374 = vadd.f32 %v2221, %v2347
  %v2375 = vadd.f32 %v2222, %v2347
  %v2376 = vadd.f32 %v2223, %v2347
  %v2377 = vadd.f32 %v2224, %v2347
  %v2378 = vadd.f32 %v2225, %v2347
  %v2379 = vadd.f32 %v2226, %v2347
  %v2380 = vadd.f32 %v2227, %v2347
  %v2381 = vadd.f32 %v2228, %v2347
  %v2382 = vadd.f32 %v2229, %v2347
  %v2383 = vadd.f32 %v2230, %v2347
  %v2384 = vadd.f32 %v2231, %v2347
  %v2385 = vadd.f32 %v2232, %v2347
  %v2386 = vadd.f32 %v2233, %v2347
  %v2387 = vadd.f32 %v2234, %v2347
  %v2388 = vadd.f32 %v2235, %v2347
  %v2389 = vadd.f32 %v2236, %v2347
  %v2390 = vadd.f32 %v2237, %v2347
  %v2391 = vadd.f32 %v2238, %v2347
  %v2392 = vadd.f32 %v2239, %v2347
  %v2393 = vadd.f32 %v2240, %v2347
  %v2394 = vadd.f32 %v2241, %v2347
  %v2395 = vadd.f32 %v2242, %v2347
  %v2396 = vadd.f32 %v2243, %v2347
  %v2397 = vadd.f32 %v2244, %v2347
  %v2398 = vadd.f32 %v2245, %v2347
  %v2399 = vadd.f32 %v2246, %v2347
  %v2400 = vadd.f32 %v2247, %v2347
  %v2401 = vadd.f32 %v2248, %v2347
  %v2402 = vadd.f32 %v2249, %v2347
  %v2403 = vadd.f32 %v2250, %v2347
  %v2404 = vadd.f32 %v2251, %v2347
  %v2405 = vadd.f32 %v2252, %v2347
  %v2406 = vadd.f32 %v2253, %v2347
  %v2407 = vadd.f32 %v2254, %v2347
  %v2408 = vadd.f32 %v2255, %v2347
  %v2409 = vadd.f32 %v2256, %v2347
  %v2410 = vadd.f32 %v2257, %v2347
  %v2411 = vadd.f32 %v2258, %v2347
  %v2412 = vadd.f32 %v2259, %v2347
  %v2413 = vadd.f32 %v2260, %v2347
  %v2414 = vadd.f32 %v2261, %v2347
  %v2415 = vadd.f32 %v2262, %v2347
  %v2416 = vadd.f32 %v2263, %v2347
  %v2417 = vadd.f32 %v2264, %v2347
  %v2418 = vadd.f32 %v2265, %v2347
  %v2419 = vadd.f32 %v2266, %v2347
  %v2420 = vadd.f32 %v2267, %v2347
  %v2421 = vadd.f32 %v2268, %v2347
  %v2422 = vadd.f32 %v2269, %v2347
  %v2423 = vadd.f32 %v2270, %v2347
  %v2424 = vadd.f32 %v2271, %v2347
  %v2425 = vadd.f32 %v2272, %v2347
  %v2426 = vadd.f32 %v2273, %v2347
  %v2427 = vadd.f32 %v2274, %v2347
  %v2428 = vadd.f32 %v2275, %v2347
  %v2429 = vadd.f32 %v2276, %v2347
  %v2430 = vadd.f32 %v2277, %v2347
  %v2431 = vadd.f32 %v2278, %v2347
  %v2432 = vadd.f32 %v2279, %v2347
  %v2433 = vadd.f32 %v2280, %v2347
  %v2434 = vadd.f32 %v2281, %v2347
  %v2435 = vadd.f32 %v2282, %v2347
  %v2436 = vadd.f32 %v2283, %v2347
  %v2437 = vadd.f32 %v2284, %v2347
  %v2438 = vadd.f32 %v2285, %v2347
  %v2439 = vadd.f32 %v2286, %v2347
  %v2440 = vadd.f32 %v2287, %v2347
  %v2441 = vadd.f32 %v2288, %v2347
  %v2442 = vadd.f32 %v2289, %v2347
  %v2443 = vadd.f32 %v2290, %v2347
  %v2444 = vadd.f32 %v2291, %v2347
  %v2445 = vadd.f32 %v2292, %v2347
  %v2446 = vadd.f32 %v2293, %v2347
  %v2447 = vadd.f32 %v2294, %v2347
  %v2448 = vadd.f32 %v2295, %v2347
  %v2449 = vadd.f32 %v2296, %v2347
  %v2450 = vadd.f32 %v2297, %v2347
  %v2451 = vadd.f32 %v2298, %v2347
  %v2452 = vadd.f32 %v2299, %v2347
  %v2453 = vadd.f32 %v2300, %v2347
  %v2454 = vadd.f32 %v2301, %v2347
  %v2455 = vadd.f32 %v2302, %v2347
  %v2456 = vadd.f32 %v2303, %v2347
  %v2457 = vadd.f32 %v2304, %v2347
  %v2458 = vadd.f32 %v2305, %v2347
  %v2459 = vadd.f32 %v2306, %v2347
  %v2460 = vadd.f32 %v2307, %v2347
  %v2461 = vadd.f32 %v2308, %v2347
  %v2462 = vadd.f32 %v2309, %v2347
  %v2463 = vadd.f32 %v2310, %v2347
  %v2464 = vadd.f32 %v2311, %v2347
  %v2465 = vadd.f32 %v2312, %v2347
  %v2466 = vadd.f32 %v2313, %v2347
  %v2467 = vadd.f32 %v2314, %v2347
  %v2468 = vadd.f32 %v2315, %v2347
  %v2469 = vadd.f32 %v2316, %v2347
  %v2470 = vadd.f32 %v2317, %v2347
  %v2471 = vadd.f32 %v2318, %v2347
  %v2472 = vadd.f32 %v2319, %v2347
  %v2473 = vadd.f32 %v2320, %v2347
  %v2474 = vadd.f32 %v2321, %v2347
  %v2475 = vadd.f32 %v2322, %v2347
  %v2476 = vadd.f32 %v2323, %v2347
  %v2477 = vadd.f32 %v2324, %v2347
  %v2478 = vadd.f32 %v2325, %v2347
  %v2479 = vadd.f32 %v2326, %v2347
  %v2480 = vadd.f32 %v2327, %v2347
  %v2481 = vadd.f32 %v2328, %v2347
  %v2482 = vadd.f32 %v2329, %v2347
  %v2483 = vadd.f32 %v2330, %v2347
  %v2484 = vadd.f32 %v2331, %v2347
  %v2485 = vadd.f32 %v2332, %v2347
  %v2486 = vadd.f32 %v2333, %v2347
  %v2487 = vadd.f32 %v2334, %v2347
  %v2488 = vadd.f32 %v2335, %v2347
  %v2489 = vadd.f32 %v2336, %v2347
  %v2490 = vadd.f32 %v2337, %v2347
  %v2491 = vadd.f32 %v2338, %v2347
  %v2492 = vadd.f32 %v2339, %v2347
  %v2493 = vmax.f32 %v2349, 0.0
  %v2494 = vmax.f32 %v2350, 0.0
  %v2495 = vmax.f32 %v2351, 0.0
  %v2496 = vmax.f32 %v2352, 0.0
  %v2497 = vmax.f32 %v2353, 0.0
  %v2498 = vmax.f32 %v2354, 0.0
  %v2499 = vmax.f32 %v2355, 0.0
  %v2500 = vmax.f32 %v2356, 0.0
  %v2501 = vmax.f32 %v2357, 0.0
  %v2502 = vmax.f32 %v2358, 0.0
  %v2503 = vmax.f32 %v2359, 0.0
  %v2504 = vmax.f32 %v2360, 0.0
  %v2505 = vmax.f32 %v2361, 0.0
  %v2506 = vmax.f32 %v2362, 0.0
  %v2507 = vmax.f32 %v2363, 0.0
  %v2508 = vmax.f32 %v2364, 0.0
  %v2509 = vmax.f32 %v2365, 0.0
  %v2510 = vmax.f32 %v2366, 0.0
  %v2511 = vmax.f32 %v2367, 0.0
  %v2512 = vmax.f32 %v2368, 0.0
  %v2513 = vmax.f32 %v2369, 0.0
  %v2514 = vmax.f32 %v2370, 0.0
  %v2515 = vmax.f32 %v2371, 0.0
  %v2516 = vmax.f32 %v2372, 0.0
  %v2517 = vmax.f32 %v2373, 0.0
  %v2518 = vmax.f32 %v2374, 0.0
  %v2519 = vmax.f32 %v2375, 0.0
  %v2520 = vmax.f32 %v2376, 0.0
  %v2521 = vmax.f32 %v2377, 0.0
  %v2522 = vmax.f32 %v2378, 0.0
  %v2523 = vmax.f32 %v2379, 0.0
  %v2524 = vmax.f32 %v2380, 0.0
  %v2525 = vmax.f32 %v2381, 0.0
  %v2526 = vmax.f32 %v2382, 0.0
  %v2527 = vmax.f32 %v2383, 0.0
  %v2528 = vmax.f32 %v2384, 0.0
  %v2529 = vmax.f32 %v2385, 0.0
  %v2530 = vmax.f32 %v2386, 0.0
  %v2531 = vmax.f32 %v2387, 0.0
  %v2532 = vmax.f32 %v2388, 0.0
  %v2533 = vmax.f32 %v2389, 0.0
  %v2534 = vmax.f32 %v2390, 0.0
  %v2535 = vmax.f32 %v2391, 0.0
  %v2536 = vmax.f32 %v2392, 0.0
  %v2537 = vmax.f32 %v2393, 0.0
  %v2538 = vmax.f32 %v2394, 0.0
  %v2539 = vmax.f32 %v2395, 0.0
  %v2540 = vmax.f32 %v2396, 0.0
  %v2541 = vmax.f32 %v2397, 0.0
  %v2542 = vmax.f32 %v2398, 0.0
  %v2543 = vmax.f32 %v2399, 0.0
  %v2544 = vmax.f32 %v2400, 0.0
  %v2545 = vmax.f32 %v2401, 0.0
  %v2546 = vmax.f32 %v2402, 0.0
  %v2547 = vmax.f32 %v2403, 0.0
  %v2548 = vmax.f32 %v2404, 0.0
  %v2549 = vmax.f32 %v2405, 0.0
  %v2550 = vmax.f32 %v2406, 0.0
  %v2551 = vmax.f32 %v2407, 0.0
  %v2552 = vmax.f32 %v2408, 0.0
  %v2553 = vmax.f32 %v2409, 0.0
  %v2554 = vmax.f32 %v2410, 0.0
  %v2555 = vmax.f32 %v2411, 0.0
  %v2556 = vmax.f32 %v2412, 0.0
  %v2557 = vmax.f32 %v2413, 0.0
  %v2558 = vmax.f32 %v2414, 0.0
  %v2559 = vmax.f32 %v2415, 0.0
  %v2560 = vmax.f32 %v2416, 0.0
  %v2561 = vmax.f32 %v2417, 0.0
  %v2562 = vmax.f32 %v2418, 0.0
  %v2563 = vmax.f32 %v2419, 0.0
  %v2564 = vmax.f32 %v2420, 0.0
  %v2565 = vmax.f32 %v2421, 0.0
  %v2566 = vmax.f32 %v2422, 0.0
  %v2567 = vmax.f32 %v2423, 0.0
  %v2568 = vmax.f32 %v2424, 0.0
  %v2569 = vmax.f32 %v2425, 0.0
  %v2570 = vmax.f32 %v2426, 0.0
  %v2571 = vmax.f32 %v2427, 0.0
  %v2572 = vmax.f32 %v2428, 0.0
  %v2573 = vmax.f32 %v2429, 0.0
  %v2574 = vmax.f32 %v2430, 0.0
  %v2575 = vmax.f32 %v2431, 0.0
  %v2576 = vmax.f32 %v2432, 0.0
  %v2577 = vmax.f32 %v2433, 0.0
  %v2578 = vmax.f32 %v2434, 0.0
  %v2579 = vmax.f32 %v2435, 0.0
  %v2580 = vmax.f32 %v2436, 0.0
  %v2581 = vmax.f32 %v2437, 0.0
  %v2582 = vmax.f32 %v2438, 0.0
  %v2583 = vmax.f32 %v2439, 0.0
  %v2584 = vmax.f32 %v2440, 0.0
  %v2585 = vmax.f32 %v2441, 0.0
  %v2586 = vmax.f32 %v2442, 0.0
  %v2587 = vmax.f32 %v2443, 0.0
  %v2588 = vmax.f32 %v2444, 0.0
  %v2589 = vmax.f32 %v2445, 0.0
  %v2590 = vmax.f32 %v2446, 0.0
  %v2591 = vmax.f32 %v2447, 0.0
  %v2592 = vmax.f32 %v2448, 0.0
  %v2593 = vmax.f32 %v2449, 0.0
  %v2594 = vmax.f32 %v2450, 0.0
  %v2595 = vmax.f32 %v2451, 0.0
  %v2596 = vmax.f32 %v2452, 0.0
  %v2597 = vmax.f32 %v2453, 0.0
  %v2598 = vmax.f32 %v2454, 0.0
  %v2599 = vmax.f32 %v2455, 0.0
  %v2600 = vmax.f32 %v2456, 0.0
  %v2601 = vmax.f32 %v2457, 0.0
  %v2602 = vmax.f32 %v2458, 0.0
  %v2603 = vmax.f32 %v2459, 0.0
  %v2604 = vmax.f32 %v2460, 0.0
  %v2605 = vmax.f32 %v2461, 0.0
  %v2606 = vmax.f32 %v2462, 0.0
  %v2607 = vmax.f32 %v2463, 0.0
  %v2608 = vmax.f32 %v2464, 0.0
  %v2609 = vmax.f32 %v2465, 0.0
  %v2610 = vmax.f32 %v2466, 0.0
  %v2611 = vmax.f32 %v2467, 0.0
  %v2612 = vmax.f32 %v2468, 0.0
  %v2613 = vmax.f32 %v2469, 0.0
  %v2614 = vmax.f32 %v2470, 0.0
  %v2615 = vmax.f32 %v2471, 0.0
  %v2616 = vmax.f32 %v2472, 0.0
  %v2617 = vmax.f32 %v2473, 0.0
  %v2618 = vmax.f32 %v2474, 0.0
  %v2619 = vmax.f32 %v2475, 0.0
  %v2620 = vmax.f32 %v2476, 0.0
  %v2621 = vmax.f32 %v2477, 0.0
  %v2622 = vmax.f32 %v2478, 0.0
  %v2623 = vmax.f32 %v2479, 0.0
  %v2624 = vmax.f32 %v2480, 0.0
  %v2625 = vmax.f32 %v2481, 0.0
  %v2626 = vmax.f32 %v2482, 0.0
  %v2627 = vmax.f32 %v2483, 0.0
  %v2628 = vmax.f32 %v2484, 0.0
  %v2629 = vmax.f32 %v2485, 0.0
  %v2630 = vmax.f32 %v2486, 0.0
  %v2631 = vmax.f32 %v2487, 0.0
  %v2632 = vmax.f32 %v2488, 0.0
  %v2633 = vmax.f32 %v2489, 0.0
  %v2634 = vmax.f32 %v2490, 0.0
  %v2635 = vmax.f32 %v2491, 0.0
  %v2636 = vmax.f32 %v2492, 0.0
  %v2637 = vmul.f32 %v2493, %v2344
  %v2638 = vmul.f32 %v2494, %v2344
  %v2639 = vmul.f32 %v2495, %v2344
  %v2640 = vmul.f32 %v2496, %v2344
  %v2641 = vmul.f32 %v2497, %v2344
  %v2642 = vmul.f32 %v2498, %v2344
  %v2643 = vmul.f32 %v2499, %v2344
  %v2644 = vmul.f32 %v2500, %v2344
  %v2645 = vmul.f32 %v2501, %v2344
  %v2646 = vmul.f32 %v2502, %v2344
  %v2647 = vmul.f32 %v2503, %v2344
  %v2648 = vmul.f32 %v2504, %v2344
  %v2649 = vmul.f32 %v2505, %v2344
  %v2650 = vmul.f32 %v2506, %v2344
  %v2651 = vmul.f32 %v2507, %v2344
  %v2652 = vmul.f32 %v2508, %v2344
  %v2653 = vmul.f32 %v2509, %v2344
  %v2654 = vmul.f32 %v2510, %v2344
  %v2655 = vmul.f32 %v2511, %v2344
  %v2656 = vmul.f32 %v2512, %v2344
  %v2657 = vmul.f32 %v2513, %v2344
  %v2658 = vmul.f32 %v2514, %v2344
  %v2659 = vmul.f32 %v2515, %v2344
  %v2660 = vmul.f32 %v2516, %v2344
  %v2661 = vmul.f32 %v2517, %v2344
  %v2662 = vmul.f32 %v2518, %v2344
  %v2663 = vmul.f32 %v2519, %v2344
  %v2664 = vmul.f32 %v2520, %v2344
  %v2665 = vmul.f32 %v2521, %v2344
  %v2666 = vmul.f32 %v2522, %v2344
  %v2667 = vmul.f32 %v2523, %v2344
  %v2668 = vmul.f32 %v2524, %v2344
  %v2669 = vmul.f32 %v2525, %v2344
  %v2670 = vmul.f32 %v2526, %v2344
  %v2671 = vmul.f32 %v2527, %v2344
  %v2672 = vmul.f32 %v2528, %v2344
  %v2673 = vmul.f32 %v2529, %v2344
  %v2674 = vmul.f32 %v2530, %v2344
  %v2675 = vmul.f32 %v2531, %v2344
  %v2676 = vmul.f32 %v2532, %v2344
  %v2677 = vmul.f32 %v2533, %v2344
  %v2678 = vmul.f32 %v2534, %v2344
  %v2679 = vmul.f32 %v2535, %v2344
  %v2680 = vmul.f32 %v2536, %v2344
  %v2681 = vmul.f32 %v2537, %v2344
  %v2682 = vmul.f32 %v2538, %v2344
  %v2683 = vmul.f32 %v2539, %v2344
  %v2684 = vmul.f32 %v2540, %v2344
  %v2685 = vmul.f32 %v2541, %v2344
  %v2686 = vmul.f32 %v2542, %v2344
  %v2687 = vmul.f32 %v2543, %v2344
  %v2688 = vmul.f32 %v2544, %v2344
  %v2689 = vmul.f32 %v2545, %v2344
  %v2690 = vmul.f32 %v2546, %v2344
  %v2691 = vmul.f32 %v2547, %v2344
  %v2692 = vmul.f32 %v2548, %v2344
  %v2693 = vmul.f32 %v2549, %v2344
  %v2694 = vmul.f32 %v2550, %v2344
  %v2695 = vmul.f32 %v2551, %v2344
  %v2696 = vmul.f32 %v2552, %v2344
  %v2697 = vmul.f32 %v2553, %v2344
  %v2698 = vmul.f32 %v2554, %v2344
  %v2699 = vmul.f32 %v2555, %v2344
  %v2700 = vmul.f32 %v2556, %v2344
  %v2701 = vmul.f32 %v2557, %v2344
  %v2702 = vmul.f32 %v2558, %v2344
  %v2703 = vmul.f32 %v2559, %v2344
  %v2704 = vmul.f32 %v2560, %v2344
  %v2705 = vmul.f32 %v2561, %v2344
  %v2706 = vmul.f32 %v2562, %v2344
  %v2707 = vmul.f32 %v2563, %v2344
  %v2708 = vmul.f32 %v2564, %v2344
  %v2709 = vmul.f32 %v2565, %v2344
  %v2710 = vmul.f32 %v2566, %v2344
  %v2711 = vmul.f32 %v2567, %v2344
  %v2712 = vmul.f32 %v2568, %v2344
  %v2713 = vmul.f32 %v2569, %v2344
  %v2714 = vmul.f32 %v2570, %v2344
  %v2715 = vmul.f32 %v2571, %v2344
  %v2716 = vmul.f32 %v2572, %v2344
  %v2717 = vmul.f32 %v2573, %v2344
  %v2718 = vmul.f32 %v2574, %v2344
  %v2719 = vmul.f32 %v2575, %v2344
  %v2720 = vmul.f32 %v2576, %v2344
  %v2721 = vmul.f32 %v2577, %v2344
  %v2722 = vmul.f32 %v2578, %v2344
  %v2723 = vmul.f32 %v2579, %v2344
  %v2724 = vmul.f32 %v2580, %v2344
  %v2725 = vmul.f32 %v2581, %v2344
  %v2726 = vmul.f32 %v2582, %v2344
  %v2727 = vmul.f32 %v2583, %v2344
  %v2728 = vmul.f32 %v2584, %v2344
  %v2729 = vmul.f32 %v2585, %v2344
  %v2730 = vmul.f32 %v2586, %v2344
  %v2731 = vmul.f32 %v2587, %v2344
  %v2732 = vmul.f32 %v2588, %v2344
  %v2733 = vmul.f32 %v2589, %v2344
  %v2734 = vmul.f32 %v2590, %v2344
  %v2735 = vmul.f32 %v2591, %v2344
  %v2736 = vmul.f32 %v2592, %v2344
  %v2737 = vmul.f32 %v2593, %v2344
  %v2738 = vmul.f32 %v2594, %v2344
  %v2739 = vmul.f32 %v2595, %v2344
  %v2740 = vmul.f32 %v2596, %v2344
  %v2741 = vmul.f32 %v2597, %v2344
  %v2742 = vmul.f32 %v2598, %v2344
  %v2743 = vmul.f32 %v2599, %v2344
  %v2744 = vmul.f32 %v2600, %v2344
  %v2745 = vmul.f32 %v2601, %v2344
  %v2746 = vmul.f32 %v2602, %v2344
  %v2747 = vmul.f32 %v2603, %v2344
  %v2748 = vmul.f32 %v2604, %v2344
  %v2749 = vmul.f32 %v2605, %v2344
  %v2750 = vmul.f32 %v2606, %v2344
  %v2751 = vmul.f32 %v2607, %v2344
  %v2752 = vmul.f32 %v2608, %v2344
  %v2753 = vmul.f32 %v2609, %v2344
  %v2754 = vmul.f32 %v2610, %v2344
  %v2755 = vmul.f32 %v2611, %v2344
  %v2756 = vmul.f32 %v2612, %v2344
  %v2757 = vmul.f32 %v2613, %v2344
  %v2758 = vmul.f32 %v2614, %v2344
  %v2759 = vmul.f32 %v2615, %v2344
  %v2760 = vmul.f32 %v2616, %v2344
  %v2761 = vmul.f32 %v2617, %v2344
  %v2762 = vmul.f32 %v2618, %v2344
  %v2763 = vmul.f32 %v2619, %v2344
  %v2764 = vmul.f32 %v2620, %v2344
  %v2765 = vmul.f32 %v2621, %v2344
  %v2766 = vmul.f32 %v2622, %v2344
  %v2767 = vmul.f32 %v2623, %v2344
  %v2768 = vmul.f32 %v2624, %v2344
  %v2769 = vmul.f32 %v2625, %v2344
  %v2770 = vmul.f32 %v2626, %v2344
  %v2771 = vmul.f32 %v2627, %v2344
  %v2772 = vmul.f32 %v2628, %v2344
  %v2773 = vmul.f32 %v2629, %v2344
  %v2774 = vmul.f32 %v2630, %v2344
  %v2775 = vmul.f32 %v2631, %v2344
  %v2776 = vmul.f32 %v2632, %v2344
  %v2777 = vmul.f32 %v2633, %v2344
  %v2778 = vmul.f32 %v2634, %v2344
  %v2779 = vmul.f32 %v2635, %v2344
  %v2780 = vmul.f32 %v2636, %v2344
  %2781 = vrot.lane.b32.xlu0 %v2638, 4
  %v2782 = vpop.permute.xlu0 %2781
  %2783 = vrot.lane.b32.xlu0 %v2639, 4
  %v2784 = vpop.permute.xlu0 %2783
  %2785 = vrot.lane.b32.xlu0 %v2640, 4
  %v2786 = vpop.permute.xlu0 %2785
  %2787 = vrot.lane.b32.xlu0 %v2641, 4
  %v2788 = vpop.permute.xlu0 %2787
  %2789 = vrot.lane.b32.xlu0 %v2642, 4
  %v2790 = vpop.permute.xlu0 %2789
  %2791 = vrot.lane.b32.xlu0 %v2643, 4
  %v2792 = vpop.permute.xlu0 %2791
  %2793 = vrot.lane.b32.xlu0 %v2644, 4
  %v2794 = vpop.permute.xlu0 %2793
  %2795 = vrot.lane.b32.xlu0 %v2645, 4
  %v2796 = vpop.permute.xlu0 %2795
  %2797 = vrot.lane.b32.xlu0 %v2650, 4
  %v2798 = vpop.permute.xlu0 %2797
  %2799 = vrot.lane.b32.xlu0 %v2651, 4
  %v2800 = vpop.permute.xlu0 %2799
  %2801 = vrot.lane.b32.xlu0 %v2652, 4
  %v2802 = vpop.permute.xlu0 %2801
  %2803 = vrot.lane.b32.xlu0 %v2653, 4
  %v2804 = vpop.permute.xlu0 %2803
  %2805 = vrot.lane.b32.xlu0 %v2654, 4
  %v2806 = vpop.permute.xlu0 %2805
  %2807 = vrot.lane.b32.xlu0 %v2655, 4
  %v2808 = vpop.permute.xlu0 %2807
  %2809 = vrot.lane.b32.xlu0 %v2656, 4
  %v2810 = vpop.permute.xlu0 %2809
  %2811 = vrot.lane.b32.xlu0 %v2657, 4
  %v2812 = vpop.permute.xlu0 %2811
  %2813 = vrot.lane.b32.xlu0 %v2662, 4
  %v2814 = vpop.permute.xlu0 %2813
  %2815 = vrot.lane.b32.xlu0 %v2663, 4
  %v2816 = vpop.permute.xlu0 %2815
  %2817 = vrot.lane.b32.xlu0 %v2664, 4
  %v2818 = vpop.permute.xlu0 %2817
  %2819 = vrot.lane.b32.xlu0 %v2665, 4
  %v2820 = vpop.permute.xlu0 %2819
  %2821 = vrot.lane.b32.xlu0 %v2666, 4
  %v2822 = vpop.permute.xlu0 %2821
  %2823 = vrot.lane.b32.xlu0 %v2667, 4
  %v2824 = vpop.permute.xlu0 %2823
  %2825 = vrot.lane.b32.xlu0 %v2668, 4
  %v2826 = vpop.permute.xlu0 %2825
  %2827 = vrot.lane.b32.xlu0 %v2669, 4
  %v2828 = vpop.permute.xlu0 %2827
  %2829 = vrot.lane.b32.xlu0 %v2674, 4
  %v2830 = vpop.permute.xlu0 %2829
  %2831 = vrot.lane.b32.xlu0 %v2675, 4
  %v2832 = vpop.permute.xlu0 %2831
  %2833 = vrot.lane.b32.xlu0 %v2676, 4
  %v2834 = vpop.permute.xlu0 %2833
  %2835 = vrot.lane.b32.xlu0 %v2677, 4
  %v2836 = vpop.permute.xlu0 %2835
  %2837 = vrot.lane.b32.xlu0 %v2678, 4
  %v2838 = vpop.permute.xlu0 %2837
  %2839 = vrot.lane.b32.xlu0 %v2679, 4
  %v2840 = vpop.permute.xlu0 %2839
  %2841 = vrot.lane.b32.xlu0 %v2680, 4
  %v2842 = vpop.permute.xlu0 %2841
  %2843 = vrot.lane.b32.xlu0 %v2681, 4
  %v2844 = vpop.permute.xlu0 %2843
  %2845 = vrot.lane.b32.xlu0 %v2686, 4
  %v2846 = vpop.permute.xlu0 %2845
  %2847 = vrot.lane.b32.xlu0 %v2687, 4
  %v2848 = vpop.permute.xlu0 %2847
  %2849 = vrot.lane.b32.xlu0 %v2688, 4
  %v2850 = vpop.permute.xlu0 %2849
  %2851 = vrot.lane.b32.xlu0 %v2689, 4
  %v2852 = vpop.permute.xlu0 %2851
  %2853 = vrot.lane.b32.xlu0 %v2690, 4
  %v2854 = vpop.permute.xlu0 %2853
  %2855 = vrot.lane.b32.xlu0 %v2691, 4
  %v2856 = vpop.permute.xlu0 %2855
  %2857 = vrot.lane.b32.xlu0 %v2692, 4
  %v2858 = vpop.permute.xlu0 %2857
  %2859 = vrot.lane.b32.xlu0 %v2693, 4
  %v2860 = vpop.permute.xlu0 %2859
  %2861 = vrot.lane.b32.xlu0 %v2698, 4
  %v2862 = vpop.permute.xlu0 %2861
  %2863 = vrot.lane.b32.xlu0 %v2699, 4
  %v2864 = vpop.permute.xlu0 %2863
  %2865 = vrot.lane.b32.xlu0 %v2700, 4
  %v2866 = vpop.permute.xlu0 %2865
  %2867 = vrot.lane.b32.xlu0 %v2701, 4
  %v2868 = vpop.permute.xlu0 %2867
  %2869 = vrot.lane.b32.xlu0 %v2702, 4
  %v2870 = vpop.permute.xlu0 %2869
  %2871 = vrot.lane.b32.xlu0 %v2703, 4
  %v2872 = vpop.permute.xlu0 %2871
  %2873 = vrot.lane.b32.xlu0 %v2704, 4
  %v2874 = vpop.permute.xlu0 %2873
  %2875 = vrot.lane.b32.xlu0 %v2705, 4
  %v2876 = vpop.permute.xlu0 %2875
  %2877 = vrot.lane.b32.xlu0 %v2710, 4
  %v2878 = vpop.permute.xlu0 %2877
  %2879 = vrot.lane.b32.xlu0 %v2711, 4
  %v2880 = vpop.permute.xlu0 %2879
  %2881 = vrot.lane.b32.xlu0 %v2712, 4
  %v2882 = vpop.permute.xlu0 %2881
  %2883 = vrot.lane.b32.xlu0 %v2713, 4
  %v2884 = vpop.permute.xlu0 %2883
  %2885 = vrot.lane.b32.xlu0 %v2714, 4
  %v2886 = vpop.permute.xlu0 %2885
  %2887 = vrot.lane.b32.xlu0 %v2715, 4
  %v2888 = vpop.permute.xlu0 %2887
  %2889 = vrot.lane.b32.xlu0 %v2716, 4
  %v2890 = vpop.permute.xlu0 %2889
  %2891 = vrot.lane.b32.xlu0 %v2717, 4
  %v2892 = vpop.permute.xlu0 %2891
  %2893 = vrot.lane.b32.xlu0 %v2722, 4
  %v2894 = vpop.permute.xlu0 %2893
  %2895 = vrot.lane.b32.xlu0 %v2723, 4
  %v2896 = vpop.permute.xlu0 %2895
  %2897 = vrot.lane.b32.xlu0 %v2724, 4
  %v2898 = vpop.permute.xlu0 %2897
  %2899 = vrot.lane.b32.xlu0 %v2725, 4
  %v2900 = vpop.permute.xlu0 %2899
  %2901 = vrot.lane.b32.xlu0 %v2726, 4
  %v2902 = vpop.permute.xlu0 %2901
  %2903 = vrot.lane.b32.xlu0 %v2727, 4
  %v2904 = vpop.permute.xlu0 %2903
  %2905 = vrot.lane.b32.xlu0 %v2728, 4
  %v2906 = vpop.permute.xlu0 %2905
  %2907 = vrot.lane.b32.xlu0 %v2729, 4
  %v2908 = vpop.permute.xlu0 %2907
  %2909 = vrot.lane.b32.xlu0 %v2734, 4
  %v2910 = vpop.permute.xlu0 %2909
  %2911 = vrot.lane.b32.xlu0 %v2735, 4
  %v2912 = vpop.permute.xlu0 %2911
  %2913 = vrot.lane.b32.xlu0 %v2736, 4
  %v2914 = vpop.permute.xlu0 %2913
  %2915 = vrot.lane.b32.xlu0 %v2737, 4
  %v2916 = vpop.permute.xlu0 %2915
  %2917 = vrot.lane.b32.xlu0 %v2738, 4
  %v2918 = vpop.permute.xlu0 %2917
  %2919 = vrot.lane.b32.xlu0 %v2739, 4
  %v2920 = vpop.permute.xlu0 %2919
  %2921 = vrot.lane.b32.xlu0 %v2740, 4
  %v2922 = vpop.permute.xlu0 %2921
  %2923 = vrot.lane.b32.xlu0 %v2741, 4
  %v2924 = vpop.permute.xlu0 %2923
  %2925 = vrot.lane.b32.xlu0 %v2746, 4
  %v2926 = vpop.permute.xlu0 %2925
  %2927 = vrot.lane.b32.xlu0 %v2747, 4
  %v2928 = vpop.permute.xlu0 %2927
  %2929 = vrot.lane.b32.xlu0 %v2748, 4
  %v2930 = vpop.permute.xlu0 %2929
  %2931 = vrot.lane.b32.xlu0 %v2749, 4
  %v2932 = vpop.permute.xlu0 %2931
  %2933 = vrot.lane.b32.xlu0 %v2750, 4
  %v2934 = vpop.permute.xlu0 %2933
  %2935 = vrot.lane.b32.xlu0 %v2751, 4
  %v2936 = vpop.permute.xlu0 %2935
  %2937 = vrot.lane.b32.xlu0 %v2752, 4
  %v2938 = vpop.permute.xlu0 %2937
  %2939 = vrot.lane.b32.xlu0 %v2753, 4
  %v2940 = vpop.permute.xlu0 %2939
  %2941 = vrot.lane.b32.xlu0 %v2758, 4
  %v2942 = vpop.permute.xlu0 %2941
  %2943 = vrot.lane.b32.xlu0 %v2759, 4
  %v2944 = vpop.permute.xlu0 %2943
  %2945 = vrot.lane.b32.xlu0 %v2760, 4
  %v2946 = vpop.permute.xlu0 %2945
  %2947 = vrot.lane.b32.xlu0 %v2761, 4
  %v2948 = vpop.permute.xlu0 %2947
  %2949 = vrot.lane.b32.xlu0 %v2762, 4
  %v2950 = vpop.permute.xlu0 %2949
  %2951 = vrot.lane.b32.xlu0 %v2763, 4
  %v2952 = vpop.permute.xlu0 %2951
  %2953 = vrot.lane.b32.xlu0 %v2764, 4
  %v2954 = vpop.permute.xlu0 %2953
  %2955 = vrot.lane.b32.xlu0 %v2765, 4
  %v2956 = vpop.permute.xlu0 %2955
  %2957 = vrot.lane.b32.xlu0 %v2770, 4
  %v2958 = vpop.permute.xlu0 %2957
  %2959 = vrot.lane.b32.xlu0 %v2771, 4
  %v2960 = vpop.permute.xlu0 %2959
  %2961 = vrot.lane.b32.xlu0 %v2772, 4
  %v2962 = vpop.permute.xlu0 %2961
  %2963 = vrot.lane.b32.xlu0 %v2773, 4
  %v2964 = vpop.permute.xlu0 %2963
  %2965 = vrot.lane.b32.xlu0 %v2774, 4
  %v2966 = vpop.permute.xlu0 %2965
  %2967 = vrot.lane.b32.xlu0 %v2775, 4
  %v2968 = vpop.permute.xlu0 %2967
  %2969 = vrot.lane.b32.xlu0 %v2776, 4
  %v2970 = vpop.permute.xlu0 %2969
  %2971 = vrot.lane.b32.xlu0 %v2777, 4
  %v2972 = vpop.permute.xlu0 %2971
  %v2973 = vadd.f32 %v2637, %v2782
  %v2974 = vadd.f32 %v2638, %v2784
  %v2975 = vadd.f32 %v2639, %v2786
  %v2976 = vadd.f32 %v2640, %v2788
  %v2977 = vadd.f32 %v2641, %v2790
  %v2978 = vadd.f32 %v2642, %v2792
  %v2979 = vadd.f32 %v2643, %v2794
  %v2980 = vadd.f32 %v2644, %v2796
  %v2981 = vadd.f32 %v2649, %v2798
  %v2982 = vadd.f32 %v2650, %v2800
  %v2983 = vadd.f32 %v2651, %v2802
  %v2984 = vadd.f32 %v2652, %v2804
  %v2985 = vadd.f32 %v2653, %v2806
  %v2986 = vadd.f32 %v2654, %v2808
  %v2987 = vadd.f32 %v2655, %v2810
  %v2988 = vadd.f32 %v2656, %v2812
  %v2989 = vadd.f32 %v2661, %v2814
  %v2990 = vadd.f32 %v2662, %v2816
  %v2991 = vadd.f32 %v2663, %v2818
  %v2992 = vadd.f32 %v2664, %v2820
  %v2993 = vadd.f32 %v2665, %v2822
  %v2994 = vadd.f32 %v2666, %v2824
  %v2995 = vadd.f32 %v2667, %v2826
  %v2996 = vadd.f32 %v2668, %v2828
  %v2997 = vadd.f32 %v2673, %v2830
  %v2998 = vadd.f32 %v2674, %v2832
  %v2999 = vadd.f32 %v2675, %v2834
  %v3000 = vadd.f32 %v2676, %v2836
  %v3001 = vadd.f32 %v2677, %v2838
  %v3002 = vadd.f32 %v2678, %v2840
  %v3003 = vadd.f32 %v2679, %v2842
  %v3004 = vadd.f32 %v2680, %v2844
  %v3005 = vadd.f32 %v2685, %v2846
  %v3006 = vadd.f32 %v2686, %v2848
  %v3007 = vadd.f32 %v2687, %v2850
  %v3008 = vadd.f32 %v2688, %v2852
  %v3009 = vadd.f32 %v2689, %v2854
  %v3010 = vadd.f32 %v2690, %v2856
  %v3011 = vadd.f32 %v2691, %v2858
  %v3012 = vadd.f32 %v2692, %v2860
  %v3013 = vadd.f32 %v2697, %v2862
  %v3014 = vadd.f32 %v2698, %v2864
  %v3015 = vadd.f32 %v2699, %v2866
  %v3016 = vadd.f32 %v2700, %v2868
  %v3017 = vadd.f32 %v2701, %v2870
  %v3018 = vadd.f32 %v2702, %v2872
  %v3019 = vadd.f32 %v2703, %v2874
  %v3020 = vadd.f32 %v2704, %v2876
  %v3021 = vadd.f32 %v2709, %v2878
  %v3022 = vadd.f32 %v2710, %v2880
  %v3023 = vadd.f32 %v2711, %v2882
  %v3024 = vadd.f32 %v2712, %v2884
  %v3025 = vadd.f32 %v2713, %v2886
  %v3026 = vadd.f32 %v2714, %v2888
  %v3027 = vadd.f32 %v2715, %v2890
  %v3028 = vadd.f32 %v2716, %v2892
  %v3029 = vadd.f32 %v2721, %v2894
  %v3030 = vadd.f32 %v2722, %v2896
  %v3031 = vadd.f32 %v2723, %v2898
  %v3032 = vadd.f32 %v2724, %v2900
  %v3033 = vadd.f32 %v2725, %v2902
  %v3034 = vadd.f32 %v2726, %v2904
  %v3035 = vadd.f32 %v2727, %v2906
  %v3036 = vadd.f32 %v2728, %v2908
  %v3037 = vadd.f32 %v2733, %v2910
  %v3038 = vadd.f32 %v2734, %v2912
  %v3039 = vadd.f32 %v2735, %v2914
  %v3040 = vadd.f32 %v2736, %v2916
  %v3041 = vadd.f32 %v2737, %v2918
  %v3042 = vadd.f32 %v2738, %v2920
  %v3043 = vadd.f32 %v2739, %v2922
  %v3044 = vadd.f32 %v2740, %v2924
  %v3045 = vadd.f32 %v2745, %v2926
  %v3046 = vadd.f32 %v2746, %v2928
  %v3047 = vadd.f32 %v2747, %v2930
  %v3048 = vadd.f32 %v2748, %v2932
  %v3049 = vadd.f32 %v2749, %v2934
  %v3050 = vadd.f32 %v2750, %v2936
  %v3051 = vadd.f32 %v2751, %v2938
  %v3052 = vadd.f32 %v2752, %v2940
  %v3053 = vadd.f32 %v2757, %v2942
  %v3054 = vadd.f32 %v2758, %v2944
  %v3055 = vadd.f32 %v2759, %v2946
  %v3056 = vadd.f32 %v2760, %v2948
  %v3057 = vadd.f32 %v2761, %v2950
  %v3058 = vadd.f32 %v2762, %v2952
  %v3059 = vadd.f32 %v2763, %v2954
  %v3060 = vadd.f32 %v2764, %v2956
  %v3061 = vadd.f32 %v2769, %v2958
  %v3062 = vadd.f32 %v2770, %v2960
  %v3063 = vadd.f32 %v2771, %v2962
  %v3064 = vadd.f32 %v2772, %v2964
  %v3065 = vadd.f32 %v2773, %v2966
  %v3066 = vadd.f32 %v2774, %v2968
  %v3067 = vadd.f32 %v2775, %v2970
  %v3068 = vadd.f32 %v2776, %v2972
  %3069 = vrot.lane.b32.xlu0 %v2639, 8
  %v3070 = vpop.permute.xlu0 %3069
  %3071 = vrot.lane.b32.xlu0 %v2640, 8
  %v3072 = vpop.permute.xlu0 %3071
  %3073 = vrot.lane.b32.xlu0 %v2641, 8
  %v3074 = vpop.permute.xlu0 %3073
  %3075 = vrot.lane.b32.xlu0 %v2642, 8
  %v3076 = vpop.permute.xlu0 %3075
  %3077 = vrot.lane.b32.xlu0 %v2643, 8
  %v3078 = vpop.permute.xlu0 %3077
  %3079 = vrot.lane.b32.xlu0 %v2644, 8
  %v3080 = vpop.permute.xlu0 %3079
  %3081 = vrot.lane.b32.xlu0 %v2645, 8
  %v3082 = vpop.permute.xlu0 %3081
  %3083 = vrot.lane.b32.xlu0 %v2646, 8
  %v3084 = vpop.permute.xlu0 %3083
  %3085 = vrot.lane.b32.xlu0 %v2651, 8
  %v3086 = vpop.permute.xlu0 %3085
  %3087 = vrot.lane.b32.xlu0 %v2652, 8
  %v3088 = vpop.permute.xlu0 %3087
  %3089 = vrot.lane.b32.xlu0 %v2653, 8
  %v3090 = vpop.permute.xlu0 %3089
  %3091 = vrot.lane.b32.xlu0 %v2654, 8
  %v3092 = vpop.permute.xlu0 %3091
  %3093 = vrot.lane.b32.xlu0 %v2655, 8
  %v3094 = vpop.permute.xlu0 %3093
  %3095 = vrot.lane.b32.xlu0 %v2656, 8
  %v3096 = vpop.permute.xlu0 %3095
  %3097 = vrot.lane.b32.xlu0 %v2657, 8
  %v3098 = vpop.permute.xlu0 %3097
  %3099 = vrot.lane.b32.xlu0 %v2658, 8
  %v3100 = vpop.permute.xlu0 %3099
  %3101 = vrot.lane.b32.xlu0 %v2663, 8
  %v3102 = vpop.permute.xlu0 %3101
  %3103 = vrot.lane.b32.xlu0 %v2664, 8
  %v3104 = vpop.permute.xlu0 %3103
  %3105 = vrot.lane.b32.xlu0 %v2665, 8
  %v3106 = vpop.permute.xlu0 %3105
  %3107 = vrot.lane.b32.xlu0 %v2666, 8
  %v3108 = vpop.permute.xlu0 %3107
  %3109 = vrot.lane.b32.xlu0 %v2667, 8
  %v3110 = vpop.permute.xlu0 %3109
  %3111 = vrot.lane.b32.xlu0 %v2668, 8
  %v3112 = vpop.permute.xlu0 %3111
  %3113 = vrot.lane.b32.xlu0 %v2669, 8
  %v3114 = vpop.permute.xlu0 %3113
  %3115 = vrot.lane.b32.xlu0 %v2670, 8
  %v3116 = vpop.permute.xlu0 %3115
  %3117 = vrot.lane.b32.xlu0 %v2675, 8
  %v3118 = vpop.permute.xlu0 %3117
  %3119 = vrot.lane.b32.xlu0 %v2676, 8
  %v3120 = vpop.permute.xlu0 %3119
  %3121 = vrot.lane.b32.xlu0 %v2677, 8
  %v3122 = vpop.permute.xlu0 %3121
  %3123 = vrot.lane.b32.xlu0 %v2678, 8
  %v3124 = vpop.permute.xlu0 %3123
  %3125 = vrot.lane.b32.xlu0 %v2679, 8
  %v3126 = vpop.permute.xlu0 %3125
  %3127 = vrot.lane.b32.xlu0 %v2680, 8
  %v3128 = vpop.permute.xlu0 %3127
  %3129 = vrot.lane.b32.xlu0 %v2681, 8
  %v3130 = vpop.permute.xlu0 %3129
  %3131 = vrot.lane.b32.xlu0 %v2682, 8
  %v3132 = vpop.permute.xlu0 %3131
  %3133 = vrot.lane.b32.xlu0 %v2687, 8
  %v3134 = vpop.permute.xlu0 %3133
  %3135 = vrot.lane.b32.xlu0 %v2688, 8
  %v3136 = vpop.permute.xlu0 %3135
  %3137 = vrot.lane.b32.xlu0 %v2689, 8
  %v3138 = vpop.permute.xlu0 %3137
  %3139 = vrot.lane.b32.xlu0 %v2690, 8
  %v3140 = vpop.permute.xlu0 %3139
  %3141 = vrot.lane.b32.xlu0 %v2691, 8
  %v3142 = vpop.permute.xlu0 %3141
  %3143 = vrot.lane.b32.xlu0 %v2692, 8
  %v3144 = vpop.permute.xlu0 %3143
  %3145 = vrot.lane.b32.xlu0 %v2693, 8
  %v3146 = vpop.permute.xlu0 %3145
  %3147 = vrot.lane.b32.xlu0 %v2694, 8
  %v3148 = vpop.permute.xlu0 %3147
  %3149 = vrot.lane.b32.xlu0 %v2699, 8
  %v3150 = vpop.permute.xlu0 %3149
  %3151 = vrot.lane.b32.xlu0 %v2700, 8
  %v3152 = vpop.permute.xlu0 %3151
  %3153 = vrot.lane.b32.xlu0 %v2701, 8
  %v3154 = vpop.permute.xlu0 %3153
  %3155 = vrot.lane.b32.xlu0 %v2702, 8
  %v3156 = vpop.permute.xlu0 %3155
  %3157 = vrot.lane.b32.xlu0 %v2703, 8
  %v3158 = vpop.permute.xlu0 %3157
  %3159 = vrot.lane.b32.xlu0 %v2704, 8
  %v3160 = vpop.permute.xlu0 %3159
  %3161 = vrot.lane.b32.xlu0 %v2705, 8
  %v3162 = vpop.permute.xlu0 %3161
  %3163 = vrot.lane.b32.xlu0 %v2706, 8
  %v3164 = vpop.permute.xlu0 %3163
  %3165 = vrot.lane.b32.xlu0 %v2711, 8
  %v3166 = vpop.permute.xlu0 %3165
  %3167 = vrot.lane.b32.xlu0 %v2712, 8
  %v3168 = vpop.permute.xlu0 %3167
  %3169 = vrot.lane.b32.xlu0 %v2713, 8
  %v3170 = vpop.permute.xlu0 %3169
  %3171 = vrot.lane.b32.xlu0 %v2714, 8
  %v3172 = vpop.permute.xlu0 %3171
  %3173 = vrot.lane.b32.xlu0 %v2715, 8
  %v3174 = vpop.permute.xlu0 %3173
  %3175 = vrot.lane.b32.xlu0 %v2716, 8
  %v3176 = vpop.permute.xlu0 %3175
  %3177 = vrot.lane.b32.xlu0 %v2717, 8
  %v3178 = vpop.permute.xlu0 %3177
  %3179 = vrot.lane.b32.xlu0 %v2718, 8
  %v3180 = vpop.permute.xlu0 %3179
  %3181 = vrot.lane.b32.xlu0 %v2723, 8
  %v3182 = vpop.permute.xlu0 %3181
  %3183 = vrot.lane.b32.xlu0 %v2724, 8
  %v3184 = vpop.permute.xlu0 %3183
  %3185 = vrot.lane.b32.xlu0 %v2725, 8
  %v3186 = vpop.permute.xlu0 %3185
  %3187 = vrot.lane.b32.xlu0 %v2726, 8
  %v3188 = vpop.permute.xlu0 %3187
  %3189 = vrot.lane.b32.xlu0 %v2727, 8
  %v3190 = vpop.permute.xlu0 %3189
  %3191 = vrot.lane.b32.xlu0 %v2728, 8
  %v3192 = vpop.permute.xlu0 %3191
  %3193 = vrot.lane.b32.xlu0 %v2729, 8
  %v3194 = vpop.permute.xlu0 %3193
  %3195 = vrot.lane.b32.xlu0 %v2730, 8
  %v3196 = vpop.permute.xlu0 %3195
  %3197 = vrot.lane.b32.xlu0 %v2735, 8
  %v3198 = vpop.permute.xlu0 %3197
  %3199 = vrot.lane.b32.xlu0 %v2736, 8
  %v3200 = vpop.permute.xlu0 %3199
  %3201 = vrot.lane.b32.xlu0 %v2737, 8
  %v3202 = vpop.permute.xlu0 %3201
  %3203 = vrot.lane.b32.xlu0 %v2738, 8
  %v3204 = vpop.permute.xlu0 %3203
  %3205 = vrot.lane.b32.xlu0 %v2739, 8
  %v3206 = vpop.permute.xlu0 %3205
  %3207 = vrot.lane.b32.xlu0 %v2740, 8
  %v3208 = vpop.permute.xlu0 %3207
  %3209 = vrot.lane.b32.xlu0 %v2741, 8
  %v3210 = vpop.permute.xlu0 %3209
  %3211 = vrot.lane.b32.xlu0 %v2742, 8
  %v3212 = vpop.permute.xlu0 %3211
  %3213 = vrot.lane.b32.xlu0 %v2747, 8
  %v3214 = vpop.permute.xlu0 %3213
  %3215 = vrot.lane.b32.xlu0 %v2748, 8
  %v3216 = vpop.permute.xlu0 %3215
  %3217 = vrot.lane.b32.xlu0 %v2749, 8
  %v3218 = vpop.permute.xlu0 %3217
  %3219 = vrot.lane.b32.xlu0 %v2750, 8
  %v3220 = vpop.permute.xlu0 %3219
  %3221 = vrot.lane.b32.xlu0 %v2751, 8
  %v3222 = vpop.permute.xlu0 %3221
  %3223 = vrot.lane.b32.xlu0 %v2752, 8
  %v3224 = vpop.permute.xlu0 %3223
  %3225 = vrot.lane.b32.xlu0 %v2753, 8
  %v3226 = vpop.permute.xlu0 %3225
  %3227 = vrot.lane.b32.xlu0 %v2754, 8
  %v3228 = vpop.permute.xlu0 %3227
  %3229 = vrot.lane.b32.xlu0 %v2759, 8
  %v3230 = vpop.permute.xlu0 %3229
  %3231 = vrot.lane.b32.xlu0 %v2760, 8
  %v3232 = vpop.permute.xlu0 %3231
  %3233 = vrot.lane.b32.xlu0 %v2761, 8
  %v3234 = vpop.permute.xlu0 %3233
  %3235 = vrot.lane.b32.xlu0 %v2762, 8
  %v3236 = vpop.permute.xlu0 %3235
  %3237 = vrot.lane.b32.xlu0 %v2763, 8
  %v3238 = vpop.permute.xlu0 %3237
  %3239 = vrot.lane.b32.xlu0 %v2764, 8
  %v3240 = vpop.permute.xlu0 %3239
  %3241 = vrot.lane.b32.xlu0 %v2765, 8
  %v3242 = vpop.permute.xlu0 %3241
  %3243 = vrot.lane.b32.xlu0 %v2766, 8
  %v3244 = vpop.permute.xlu0 %3243
  %3245 = vrot.lane.b32.xlu0 %v2771, 8
  %v3246 = vpop.permute.xlu0 %3245
  %3247 = vrot.lane.b32.xlu0 %v2772, 8
  %v3248 = vpop.permute.xlu0 %3247
  %3249 = vrot.lane.b32.xlu0 %v2773, 8
  %v3250 = vpop.permute.xlu0 %3249
  %3251 = vrot.lane.b32.xlu0 %v2774, 8
  %v3252 = vpop.permute.xlu0 %3251
  %3253 = vrot.lane.b32.xlu0 %v2775, 8
  %v3254 = vpop.permute.xlu0 %3253
  %3255 = vrot.lane.b32.xlu0 %v2776, 8
  %v3256 = vpop.permute.xlu0 %3255
  %3257 = vrot.lane.b32.xlu0 %v2777, 8
  %v3258 = vpop.permute.xlu0 %3257
  %3259 = vrot.lane.b32.xlu0 %v2778, 8
  %v3260 = vpop.permute.xlu0 %3259
  %v3261 = vadd.f32 %v2973, %v3070
  %v3262 = vadd.f32 %v2974, %v3072
  %v3263 = vadd.f32 %v2975, %v3074
  %v3264 = vadd.f32 %v2976, %v3076
  %v3265 = vadd.f32 %v2977, %v3078
  %v3266 = vadd.f32 %v2978, %v3080
  %v3267 = vadd.f32 %v2979, %v3082
  %v3268 = vadd.f32 %v2980, %v3084
  %v3269 = vadd.f32 %v2981, %v3086
  %v3270 = vadd.f32 %v2982, %v3088
  %v3271 = vadd.f32 %v2983, %v3090
  %v3272 = vadd.f32 %v2984, %v3092
  %v3273 = vadd.f32 %v2985, %v3094
  %v3274 = vadd.f32 %v2986, %v3096
  %v3275 = vadd.f32 %v2987, %v3098
  %v3276 = vadd.f32 %v2988, %v3100
  %v3277 = vadd.f32 %v2989, %v3102
  %v3278 = vadd.f32 %v2990, %v3104
  %v3279 = vadd.f32 %v2991, %v3106
  %v3280 = vadd.f32 %v2992, %v3108
  %v3281 = vadd.f32 %v2993, %v3110
  %v3282 = vadd.f32 %v2994, %v3112
  %v3283 = vadd.f32 %v2995, %v3114
  %v3284 = vadd.f32 %v2996, %v3116
  %v3285 = vadd.f32 %v2997, %v3118
  %v3286 = vadd.f32 %v2998, %v3120
  %v3287 = vadd.f32 %v2999, %v3122
  %v3288 = vadd.f32 %v3000, %v3124
  %v3289 = vadd.f32 %v3001, %v3126
  %v3290 = vadd.f32 %v3002, %v3128
  %v3291 = vadd.f32 %v3003, %v3130
  %v3292 = vadd.f32 %v3004, %v3132
  %v3293 = vadd.f32 %v3005, %v3134
  %v3294 = vadd.f32 %v3006, %v3136
  %v3295 = vadd.f32 %v3007, %v3138
  %v3296 = vadd.f32 %v3008, %v3140
  %v3297 = vadd.f32 %v3009, %v3142
  %v3298 = vadd.f32 %v3010, %v3144
  %v3299 = vadd.f32 %v3011, %v3146
  %v3300 = vadd.f32 %v3012, %v3148
  %v3301 = vadd.f32 %v3013, %v3150
  %v3302 = vadd.f32 %v3014, %v3152
  %v3303 = vadd.f32 %v3015, %v3154
  %v3304 = vadd.f32 %v3016, %v3156
  %v3305 = vadd.f32 %v3017, %v3158
  %v3306 = vadd.f32 %v3018, %v3160
  %v3307 = vadd.f32 %v3019, %v3162
  %v3308 = vadd.f32 %v3020, %v3164
  %v3309 = vadd.f32 %v3021, %v3166
  %v3310 = vadd.f32 %v3022, %v3168
  %v3311 = vadd.f32 %v3023, %v3170
  %v3312 = vadd.f32 %v3024, %v3172
  %v3313 = vadd.f32 %v3025, %v3174
  %v3314 = vadd.f32 %v3026, %v3176
  %v3315 = vadd.f32 %v3027, %v3178
  %v3316 = vadd.f32 %v3028, %v3180
  %v3317 = vadd.f32 %v3029, %v3182
  %v3318 = vadd.f32 %v3030, %v3184
  %v3319 = vadd.f32 %v3031, %v3186
  %v3320 = vadd.f32 %v3032, %v3188
  %v3321 = vadd.f32 %v3033, %v3190
  %v3322 = vadd.f32 %v3034, %v3192
  %v3323 = vadd.f32 %v3035, %v3194
  %v3324 = vadd.f32 %v3036, %v3196
  %v3325 = vadd.f32 %v3037, %v3198
  %v3326 = vadd.f32 %v3038, %v3200
  %v3327 = vadd.f32 %v3039, %v3202
  %v3328 = vadd.f32 %v3040, %v3204
  %v3329 = vadd.f32 %v3041, %v3206
  %v3330 = vadd.f32 %v3042, %v3208
  %v3331 = vadd.f32 %v3043, %v3210
  %v3332 = vadd.f32 %v3044, %v3212
  %v3333 = vadd.f32 %v3045, %v3214
  %v3334 = vadd.f32 %v3046, %v3216
  %v3335 = vadd.f32 %v3047, %v3218
  %v3336 = vadd.f32 %v3048, %v3220
  %v3337 = vadd.f32 %v3049, %v3222
  %v3338 = vadd.f32 %v3050, %v3224
  %v3339 = vadd.f32 %v3051, %v3226
  %v3340 = vadd.f32 %v3052, %v3228
  %v3341 = vadd.f32 %v3053, %v3230
  %v3342 = vadd.f32 %v3054, %v3232
  %v3343 = vadd.f32 %v3055, %v3234
  %v3344 = vadd.f32 %v3056, %v3236
  %v3345 = vadd.f32 %v3057, %v3238
  %v3346 = vadd.f32 %v3058, %v3240
  %v3347 = vadd.f32 %v3059, %v3242
  %v3348 = vadd.f32 %v3060, %v3244
  %v3349 = vadd.f32 %v3061, %v3246
  %v3350 = vadd.f32 %v3062, %v3248
  %v3351 = vadd.f32 %v3063, %v3250
  %v3352 = vadd.f32 %v3064, %v3252
  %v3353 = vadd.f32 %v3065, %v3254
  %v3354 = vadd.f32 %v3066, %v3256
  %v3355 = vadd.f32 %v3067, %v3258
  %v3356 = vadd.f32 %v3068, %v3260
  %3357 = vrot.lane.b32.xlu0 %v2640, 12
  %v3358 = vpop.permute.xlu0 %3357
  %3359 = vrot.lane.b32.xlu0 %v2641, 12
  %v3360 = vpop.permute.xlu0 %3359
  %3361 = vrot.lane.b32.xlu0 %v2642, 12
  %v3362 = vpop.permute.xlu0 %3361
  %3363 = vrot.lane.b32.xlu0 %v2643, 12
  %v3364 = vpop.permute.xlu0 %3363
  %3365 = vrot.lane.b32.xlu0 %v2644, 12
  %v3366 = vpop.permute.xlu0 %3365
  %3367 = vrot.lane.b32.xlu0 %v2645, 12
  %v3368 = vpop.permute.xlu0 %3367
  %3369 = vrot.lane.b32.xlu0 %v2646, 12
  %v3370 = vpop.permute.xlu0 %3369
  %3371 = vrot.lane.b32.xlu0 %v2647, 12
  %v3372 = vpop.permute.xlu0 %3371
  %3373 = vrot.lane.b32.xlu0 %v2652, 12
  %v3374 = vpop.permute.xlu0 %3373
  %3375 = vrot.lane.b32.xlu0 %v2653, 12
  %v3376 = vpop.permute.xlu0 %3375
  %3377 = vrot.lane.b32.xlu0 %v2654, 12
  %v3378 = vpop.permute.xlu0 %3377
  %3379 = vrot.lane.b32.xlu0 %v2655, 12
  %v3380 = vpop.permute.xlu0 %3379
  %3381 = vrot.lane.b32.xlu0 %v2656, 12
  %v3382 = vpop.permute.xlu0 %3381
  %3383 = vrot.lane.b32.xlu0 %v2657, 12
  %v3384 = vpop.permute.xlu0 %3383
  %3385 = vrot.lane.b32.xlu0 %v2658, 12
  %v3386 = vpop.permute.xlu0 %3385
  %3387 = vrot.lane.b32.xlu0 %v2659, 12
  %v3388 = vpop.permute.xlu0 %3387
  %3389 = vrot.lane.b32.xlu0 %v2664, 12
  %v3390 = vpop.permute.xlu0 %3389
  %3391 = vrot.lane.b32.xlu0 %v2665, 12
  %v3392 = vpop.permute.xlu0 %3391
  %3393 = vrot.lane.b32.xlu0 %v2666, 12
  %v3394 = vpop.permute.xlu0 %3393
  %3395 = vrot.lane.b32.xlu0 %v2667, 12
  %v3396 = vpop.permute.xlu0 %3395
  %3397 = vrot.lane.b32.xlu0 %v2668, 12
  %v3398 = vpop.permute.xlu0 %3397
  %3399 = vrot.lane.b32.xlu0 %v2669, 12
  %v3400 = vpop.permute.xlu0 %3399
  %3401 = vrot.lane.b32.xlu0 %v2670, 12
  %v3402 = vpop.permute.xlu0 %3401
  %3403 = vrot.lane.b32.xlu0 %v2671, 12
  %v3404 = vpop.permute.xlu0 %3403
  %3405 = vrot.lane.b32.xlu0 %v2676, 12
  %v3406 = vpop.permute.xlu0 %3405
  %3407 = vrot.lane.b32.xlu0 %v2677, 12
  %v3408 = vpop.permute.xlu0 %3407
  %3409 = vrot.lane.b32.xlu0 %v2678, 12
  %v3410 = vpop.permute.xlu0 %3409
  %3411 = vrot.lane.b32.xlu0 %v2679, 12
  %v3412 = vpop.permute.xlu0 %3411
  %3413 = vrot.lane.b32.xlu0 %v2680, 12
  %v3414 = vpop.permute.xlu0 %3413
  %3415 = vrot.lane.b32.xlu0 %v2681, 12
  %v3416 = vpop.permute.xlu0 %3415
  %3417 = vrot.lane.b32.xlu0 %v2682, 12
  %v3418 = vpop.permute.xlu0 %3417
  %3419 = vrot.lane.b32.xlu0 %v2683, 12
  %v3420 = vpop.permute.xlu0 %3419
  %3421 = vrot.lane.b32.xlu0 %v2688, 12
  %v3422 = vpop.permute.xlu0 %3421
  %3423 = vrot.lane.b32.xlu0 %v2689, 12
  %v3424 = vpop.permute.xlu0 %3423
  %3425 = vrot.lane.b32.xlu0 %v2690, 12
  %v3426 = vpop.permute.xlu0 %3425
  %3427 = vrot.lane.b32.xlu0 %v2691, 12
  %v3428 = vpop.permute.xlu0 %3427
  %3429 = vrot.lane.b32.xlu0 %v2692, 12
  %v3430 = vpop.permute.xlu0 %3429
  %3431 = vrot.lane.b32.xlu0 %v2693, 12
  %v3432 = vpop.permute.xlu0 %3431
  %3433 = vrot.lane.b32.xlu0 %v2694, 12
  %v3434 = vpop.permute.xlu0 %3433
  %3435 = vrot.lane.b32.xlu0 %v2695, 12
  %v3436 = vpop.permute.xlu0 %3435
  %3437 = vrot.lane.b32.xlu0 %v2700, 12
  %v3438 = vpop.permute.xlu0 %3437
  %3439 = vrot.lane.b32.xlu0 %v2701, 12
  %v3440 = vpop.permute.xlu0 %3439
  %3441 = vrot.lane.b32.xlu0 %v2702, 12
  %v3442 = vpop.permute.xlu0 %3441
  %3443 = vrot.lane.b32.xlu0 %v2703, 12
  %v3444 = vpop.permute.xlu0 %3443
  %3445 = vrot.lane.b32.xlu0 %v2704, 12
  %v3446 = vpop.permute.xlu0 %3445
  %3447 = vrot.lane.b32.xlu0 %v2705, 12
  %v3448 = vpop.permute.xlu0 %3447
  %3449 = vrot.lane.b32.xlu0 %v2706, 12
  %v3450 = vpop.permute.xlu0 %3449
  %3451 = vrot.lane.b32.xlu0 %v2707, 12
  %v3452 = vpop.permute.xlu0 %3451
  %3453 = vrot.lane.b32.xlu0 %v2712, 12
  %v3454 = vpop.permute.xlu0 %3453
  %3455 = vrot.lane.b32.xlu0 %v2713, 12
  %v3456 = vpop.permute.xlu0 %3455
  %3457 = vrot.lane.b32.xlu0 %v2714, 12
  %v3458 = vpop.permute.xlu0 %3457
  %3459 = vrot.lane.b32.xlu0 %v2715, 12
  %v3460 = vpop.permute.xlu0 %3459
  %3461 = vrot.lane.b32.xlu0 %v2716, 12
  %v3462 = vpop.permute.xlu0 %3461
  %3463 = vrot.lane.b32.xlu0 %v2717, 12
  %v3464 = vpop.permute.xlu0 %3463
  %3465 = vrot.lane.b32.xlu0 %v2718, 12
  %v3466 = vpop.permute.xlu0 %3465
  %3467 = vrot.lane.b32.xlu0 %v2719, 12
  %v3468 = vpop.permute.xlu0 %3467
  %3469 = vrot.lane.b32.xlu0 %v2724, 12
  %v3470 = vpop.permute.xlu0 %3469
  %3471 = vrot.lane.b32.xlu0 %v2725, 12
  %v3472 = vpop.permute.xlu0 %3471
  %3473 = vrot.lane.b32.xlu0 %v2726, 12
  %v3474 = vpop.permute.xlu0 %3473
  %3475 = vrot.lane.b32.xlu0 %v2727, 12
  %v3476 = vpop.permute.xlu0 %3475
  %3477 = vrot.lane.b32.xlu0 %v2728, 12
  %v3478 = vpop.permute.xlu0 %3477
  %3479 = vrot.lane.b32.xlu0 %v2729, 12
  %v3480 = vpop.permute.xlu0 %3479
  %3481 = vrot.lane.b32.xlu0 %v2730, 12
  %v3482 = vpop.permute.xlu0 %3481
  %3483 = vrot.lane.b32.xlu0 %v2731, 12
  %v3484 = vpop.permute.xlu0 %3483
  %3485 = vrot.lane.b32.xlu0 %v2736, 12
  %v3486 = vpop.permute.xlu0 %3485
  %3487 = vrot.lane.b32.xlu0 %v2737, 12
  %v3488 = vpop.permute.xlu0 %3487
  %3489 = vrot.lane.b32.xlu0 %v2738, 12
  %v3490 = vpop.permute.xlu0 %3489
  %3491 = vrot.lane.b32.xlu0 %v2739, 12
  %v3492 = vpop.permute.xlu0 %3491
  %3493 = vrot.lane.b32.xlu0 %v2740, 12
  %v3494 = vpop.permute.xlu0 %3493
  %3495 = vrot.lane.b32.xlu0 %v2741, 12
  %v3496 = vpop.permute.xlu0 %3495
  %3497 = vrot.lane.b32.xlu0 %v2742, 12
  %v3498 = vpop.permute.xlu0 %3497
  %3499 = vrot.lane.b32.xlu0 %v2743, 12
  %v3500 = vpop.permute.xlu0 %3499
  %3501 = vrot.lane.b32.xlu0 %v2748, 12
  %v3502 = vpop.permute.xlu0 %3501
  %3503 = vrot.lane.b32.xlu0 %v2749, 12
  %v3504 = vpop.permute.xlu0 %3503
  %3505 = vrot.lane.b32.xlu0 %v2750, 12
  %v3506 = vpop.permute.xlu0 %3505
  %3507 = vrot.lane.b32.xlu0 %v2751, 12
  %v3508 = vpop.permute.xlu0 %3507
  %3509 = vrot.lane.b32.xlu0 %v2752, 12
  %v3510 = vpop.permute.xlu0 %3509
  %3511 = vrot.lane.b32.xlu0 %v2753, 12
  %v3512 = vpop.permute.xlu0 %3511
  %3513 = vrot.lane.b32.xlu0 %v2754, 12
  %v3514 = vpop.permute.xlu0 %3513
  %3515 = vrot.lane.b32.xlu0 %v2755, 12
  %v3516 = vpop.permute.xlu0 %3515
  %3517 = vrot.lane.b32.xlu0 %v2760, 12
  %v3518 = vpop.permute.xlu0 %3517
  %3519 = vrot.lane.b32.xlu0 %v2761, 12
  %v3520 = vpop.permute.xlu0 %3519
  %3521 = vrot.lane.b32.xlu0 %v2762, 12
  %v3522 = vpop.permute.xlu0 %3521
  %3523 = vrot.lane.b32.xlu0 %v2763, 12
  %v3524 = vpop.permute.xlu0 %3523
  %3525 = vrot.lane.b32.xlu0 %v2764, 12
  %v3526 = vpop.permute.xlu0 %3525
  %3527 = vrot.lane.b32.xlu0 %v2765, 12
  %v3528 = vpop.permute.xlu0 %3527
  %3529 = vrot.lane.b32.xlu0 %v2766, 12
  %v3530 = vpop.permute.xlu0 %3529
  %3531 = vrot.lane.b32.xlu0 %v2767, 12
  %v3532 = vpop.permute.xlu0 %3531
  %3533 = vrot.lane.b32.xlu0 %v2772, 12
  %v3534 = vpop.permute.xlu0 %3533
  %3535 = vrot.lane.b32.xlu0 %v2773, 12
  %v3536 = vpop.permute.xlu0 %3535
  %3537 = vrot.lane.b32.xlu0 %v2774, 12
  %v3538 = vpop.permute.xlu0 %3537
  %3539 = vrot.lane.b32.xlu0 %v2775, 12
  %v3540 = vpop.permute.xlu0 %3539
  %3541 = vrot.lane.b32.xlu0 %v2776, 12
  %v3542 = vpop.permute.xlu0 %3541
  %3543 = vrot.lane.b32.xlu0 %v2777, 12
  %v3544 = vpop.permute.xlu0 %3543
  %3545 = vrot.lane.b32.xlu0 %v2778, 12
  %v3546 = vpop.permute.xlu0 %3545
  %3547 = vrot.lane.b32.xlu0 %v2779, 12
  %v3548 = vpop.permute.xlu0 %3547
  %v3549 = vadd.f32 %v3261, %v3358
  %v3550 = vadd.f32 %v3262, %v3360
  %v3551 = vadd.f32 %v3263, %v3362
  %v3552 = vadd.f32 %v3264, %v3364
  %v3553 = vadd.f32 %v3265, %v3366
  %v3554 = vadd.f32 %v3266, %v3368
  %v3555 = vadd.f32 %v3267, %v3370
  %v3556 = vadd.f32 %v3268, %v3372
  %v3557 = vadd.f32 %v3269, %v3374
  %v3558 = vadd.f32 %v3270, %v3376
  %v3559 = vadd.f32 %v3271, %v3378
  %v3560 = vadd.f32 %v3272, %v3380
  %v3561 = vadd.f32 %v3273, %v3382
  %v3562 = vadd.f32 %v3274, %v3384
  %v3563 = vadd.f32 %v3275, %v3386
  %v3564 = vadd.f32 %v3276, %v3388
  %v3565 = vadd.f32 %v3277, %v3390
  %v3566 = vadd.f32 %v3278, %v3392
  %v3567 = vadd.f32 %v3279, %v3394
  %v3568 = vadd.f32 %v3280, %v3396
  %v3569 = vadd.f32 %v3281, %v3398
  %v3570 = vadd.f32 %v3282, %v3400
  %v3571 = vadd.f32 %v3283, %v3402
  %v3572 = vadd.f32 %v3284, %v3404
  %v3573 = vadd.f32 %v3285, %v3406
  %v3574 = vadd.f32 %v3286, %v3408
  %v3575 = vadd.f32 %v3287, %v3410
  %v3576 = vadd.f32 %v3288, %v3412
  %v3577 = vadd.f32 %v3289, %v3414
  %v3578 = vadd.f32 %v3290, %v3416
  %v3579 = vadd.f32 %v3291, %v3418
  %v3580 = vadd.f32 %v3292, %v3420
  %v3581 = vadd.f32 %v3293, %v3422
  %v3582 = vadd.f32 %v3294, %v3424
  %v3583 = vadd.f32 %v3295, %v3426
  %v3584 = vadd.f32 %v3296, %v3428
  %v3585 = vadd.f32 %v3297, %v3430
  %v3586 = vadd.f32 %v3298, %v3432
  %v3587 = vadd.f32 %v3299, %v3434
  %v3588 = vadd.f32 %v3300, %v3436
  %v3589 = vadd.f32 %v3301, %v3438
  %v3590 = vadd.f32 %v3302, %v3440
  %v3591 = vadd.f32 %v3303, %v3442
  %v3592 = vadd.f32 %v3304, %v3444
  %v3593 = vadd.f32 %v3305, %v3446
  %v3594 = vadd.f32 %v3306, %v3448
  %v3595 = vadd.f32 %v3307, %v3450
  %v3596 = vadd.f32 %v3308, %v3452
  %v3597 = vadd.f32 %v3309, %v3454
  %v3598 = vadd.f32 %v3310, %v3456
  %v3599 = vadd.f32 %v3311, %v3458
  %v3600 = vadd.f32 %v3312, %v3460
  %v3601 = vadd.f32 %v3313, %v3462
  %v3602 = vadd.f32 %v3314, %v3464
  %v3603 = vadd.f32 %v3315, %v3466
  %v3604 = vadd.f32 %v3316, %v3468
  %v3605 = vadd.f32 %v3317, %v3470
  %v3606 = vadd.f32 %v3318, %v3472
  %v3607 = vadd.f32 %v3319, %v3474
  %v3608 = vadd.f32 %v3320, %v3476
  %v3609 = vadd.f32 %v3321, %v3478
  %v3610 = vadd.f32 %v3322, %v3480
  %v3611 = vadd.f32 %v3323, %v3482
  %v3612 = vadd.f32 %v3324, %v3484
  %v3613 = vadd.f32 %v3325, %v3486
  %v3614 = vadd.f32 %v3326, %v3488
  %v3615 = vadd.f32 %v3327, %v3490
  %v3616 = vadd.f32 %v3328, %v3492
  %v3617 = vadd.f32 %v3329, %v3494
  %v3618 = vadd.f32 %v3330, %v3496
  %v3619 = vadd.f32 %v3331, %v3498
  %v3620 = vadd.f32 %v3332, %v3500
  %v3621 = vadd.f32 %v3333, %v3502
  %v3622 = vadd.f32 %v3334, %v3504
  %v3623 = vadd.f32 %v3335, %v3506
  %v3624 = vadd.f32 %v3336, %v3508
  %v3625 = vadd.f32 %v3337, %v3510
  %v3626 = vadd.f32 %v3338, %v3512
  %v3627 = vadd.f32 %v3339, %v3514
  %v3628 = vadd.f32 %v3340, %v3516
  %v3629 = vadd.f32 %v3341, %v3518
  %v3630 = vadd.f32 %v3342, %v3520
  %v3631 = vadd.f32 %v3343, %v3522
  %v3632 = vadd.f32 %v3344, %v3524
  %v3633 = vadd.f32 %v3345, %v3526
  %v3634 = vadd.f32 %v3346, %v3528
  %v3635 = vadd.f32 %v3347, %v3530
  %v3636 = vadd.f32 %v3348, %v3532
  %v3637 = vadd.f32 %v3349, %v3534
  %v3638 = vadd.f32 %v3350, %v3536
  %v3639 = vadd.f32 %v3351, %v3538
  %v3640 = vadd.f32 %v3352, %v3540
  %v3641 = vadd.f32 %v3353, %v3542
  %v3642 = vadd.f32 %v3354, %v3544
  %v3643 = vadd.f32 %v3355, %v3546
  %v3644 = vadd.f32 %v3356, %v3548
  %3645 = vrot.lane.b32.xlu0 %v2641, 16
  %v3646 = vpop.permute.xlu0 %3645
  %3647 = vrot.lane.b32.xlu0 %v2642, 16
  %v3648 = vpop.permute.xlu0 %3647
  %3649 = vrot.lane.b32.xlu0 %v2643, 16
  %v3650 = vpop.permute.xlu0 %3649
  %3651 = vrot.lane.b32.xlu0 %v2644, 16
  %v3652 = vpop.permute.xlu0 %3651
  %3653 = vrot.lane.b32.xlu0 %v2645, 16
  %v3654 = vpop.permute.xlu0 %3653
  %3655 = vrot.lane.b32.xlu0 %v2646, 16
  %v3656 = vpop.permute.xlu0 %3655
  %3657 = vrot.lane.b32.xlu0 %v2647, 16
  %v3658 = vpop.permute.xlu0 %3657
  %3659 = vrot.lane.b32.xlu0 %v2648, 16
  %v3660 = vpop.permute.xlu0 %3659
  %3661 = vrot.lane.b32.xlu0 %v2653, 16
  %v3662 = vpop.permute.xlu0 %3661
  %3663 = vrot.lane.b32.xlu0 %v2654, 16
  %v3664 = vpop.permute.xlu0 %3663
  %3665 = vrot.lane.b32.xlu0 %v2655, 16
  %v3666 = vpop.permute.xlu0 %3665
  %3667 = vrot.lane.b32.xlu0 %v2656, 16
  %v3668 = vpop.permute.xlu0 %3667
  %3669 = vrot.lane.b32.xlu0 %v2657, 16
  %v3670 = vpop.permute.xlu0 %3669
  %3671 = vrot.lane.b32.xlu0 %v2658, 16
  %v3672 = vpop.permute.xlu0 %3671
  %3673 = vrot.lane.b32.xlu0 %v2659, 16
  %v3674 = vpop.permute.xlu0 %3673
  %3675 = vrot.lane.b32.xlu0 %v2660, 16
  %v3676 = vpop.permute.xlu0 %3675
  %3677 = vrot.lane.b32.xlu0 %v2665, 16
  %v3678 = vpop.permute.xlu0 %3677
  %3679 = vrot.lane.b32.xlu0 %v2666, 16
  %v3680 = vpop.permute.xlu0 %3679
  %3681 = vrot.lane.b32.xlu0 %v2667, 16
  %v3682 = vpop.permute.xlu0 %3681
  %3683 = vrot.lane.b32.xlu0 %v2668, 16
  %v3684 = vpop.permute.xlu0 %3683
  %3685 = vrot.lane.b32.xlu0 %v2669, 16
  %v3686 = vpop.permute.xlu0 %3685
  %3687 = vrot.lane.b32.xlu0 %v2670, 16
  %v3688 = vpop.permute.xlu0 %3687
  %3689 = vrot.lane.b32.xlu0 %v2671, 16
  %v3690 = vpop.permute.xlu0 %3689
  %3691 = vrot.lane.b32.xlu0 %v2672, 16
  %v3692 = vpop.permute.xlu0 %3691
  %3693 = vrot.lane.b32.xlu0 %v2677, 16
  %v3694 = vpop.permute.xlu0 %3693
  %3695 = vrot.lane.b32.xlu0 %v2678, 16
  %v3696 = vpop.permute.xlu0 %3695
  %3697 = vrot.lane.b32.xlu0 %v2679, 16
  %v3698 = vpop.permute.xlu0 %3697
  %3699 = vrot.lane.b32.xlu0 %v2680, 16
  %v3700 = vpop.permute.xlu0 %3699
  %3701 = vrot.lane.b32.xlu0 %v2681, 16
  %v3702 = vpop.permute.xlu0 %3701
  %3703 = vrot.lane.b32.xlu0 %v2682, 16
  %v3704 = vpop.permute.xlu0 %3703
  %3705 = vrot.lane.b32.xlu0 %v2683, 16
  %v3706 = vpop.permute.xlu0 %3705
  %3707 = vrot.lane.b32.xlu0 %v2684, 16
  %v3708 = vpop.permute.xlu0 %3707
  %3709 = vrot.lane.b32.xlu0 %v2689, 16
  %v3710 = vpop.permute.xlu0 %3709
  %3711 = vrot.lane.b32.xlu0 %v2690, 16
  %v3712 = vpop.permute.xlu0 %3711
  %3713 = vrot.lane.b32.xlu0 %v2691, 16
  %v3714 = vpop.permute.xlu0 %3713
  %3715 = vrot.lane.b32.xlu0 %v2692, 16
  %v3716 = vpop.permute.xlu0 %3715
  %3717 = vrot.lane.b32.xlu0 %v2693, 16
  %v3718 = vpop.permute.xlu0 %3717
  %3719 = vrot.lane.b32.xlu0 %v2694, 16
  %v3720 = vpop.permute.xlu0 %3719
  %3721 = vrot.lane.b32.xlu0 %v2695, 16
  %v3722 = vpop.permute.xlu0 %3721
  %3723 = vrot.lane.b32.xlu0 %v2696, 16
  %v3724 = vpop.permute.xlu0 %3723
  %3725 = vrot.lane.b32.xlu0 %v2701, 16
  %v3726 = vpop.permute.xlu0 %3725
  %3727 = vrot.lane.b32.xlu0 %v2702, 16
  %v3728 = vpop.permute.xlu0 %3727
  %3729 = vrot.lane.b32.xlu0 %v2703, 16
  %v3730 = vpop.permute.xlu0 %3729
  %3731 = vrot.lane.b32.xlu0 %v2704, 16
  %v3732 = vpop.permute.xlu0 %3731
  %3733 = vrot.lane.b32.xlu0 %v2705, 16
  %v3734 = vpop.permute.xlu0 %3733
  %3735 = vrot.lane.b32.xlu0 %v2706, 16
  %v3736 = vpop.permute.xlu0 %3735
  %3737 = vrot.lane.b32.xlu0 %v2707, 16
  %v3738 = vpop.permute.xlu0 %3737
  %3739 = vrot.lane.b32.xlu0 %v2708, 16
  %v3740 = vpop.permute.xlu0 %3739
  %3741 = vrot.lane.b32.xlu0 %v2713, 16
  %v3742 = vpop.permute.xlu0 %3741
  %3743 = vrot.lane.b32.xlu0 %v2714, 16
  %v3744 = vpop.permute.xlu0 %3743
  %3745 = vrot.lane.b32.xlu0 %v2715, 16
  %v3746 = vpop.permute.xlu0 %3745
  %3747 = vrot.lane.b32.xlu0 %v2716, 16
  %v3748 = vpop.permute.xlu0 %3747
  %3749 = vrot.lane.b32.xlu0 %v2717, 16
  %v3750 = vpop.permute.xlu0 %3749
  %3751 = vrot.lane.b32.xlu0 %v2718, 16
  %v3752 = vpop.permute.xlu0 %3751
  %3753 = vrot.lane.b32.xlu0 %v2719, 16
  %v3754 = vpop.permute.xlu0 %3753
  %3755 = vrot.lane.b32.xlu0 %v2720, 16
  %v3756 = vpop.permute.xlu0 %3755
  %3757 = vrot.lane.b32.xlu0 %v2725, 16
  %v3758 = vpop.permute.xlu0 %3757
  %3759 = vrot.lane.b32.xlu0 %v2726, 16
  %v3760 = vpop.permute.xlu0 %3759
  %3761 = vrot.lane.b32.xlu0 %v2727, 16
  %v3762 = vpop.permute.xlu0 %3761
  %3763 = vrot.lane.b32.xlu0 %v2728, 16
  %v3764 = vpop.permute.xlu0 %3763
  %3765 = vrot.lane.b32.xlu0 %v2729, 16
  %v3766 = vpop.permute.xlu0 %3765
  %3767 = vrot.lane.b32.xlu0 %v2730, 16
  %v3768 = vpop.permute.xlu0 %3767
  %3769 = vrot.lane.b32.xlu0 %v2731, 16
  %v3770 = vpop.permute.xlu0 %3769
  %3771 = vrot.lane.b32.xlu0 %v2732, 16
  %v3772 = vpop.permute.xlu0 %3771
  %3773 = vrot.lane.b32.xlu0 %v2737, 16
  %v3774 = vpop.permute.xlu0 %3773
  %3775 = vrot.lane.b32.xlu0 %v2738, 16
  %v3776 = vpop.permute.xlu0 %3775
  %3777 = vrot.lane.b32.xlu0 %v2739, 16
  %v3778 = vpop.permute.xlu0 %3777
  %3779 = vrot.lane.b32.xlu0 %v2740, 16
  %v3780 = vpop.permute.xlu0 %3779
  %3781 = vrot.lane.b32.xlu0 %v2741, 16
  %v3782 = vpop.permute.xlu0 %3781
  %3783 = vrot.lane.b32.xlu0 %v2742, 16
  %v3784 = vpop.permute.xlu0 %3783
  %3785 = vrot.lane.b32.xlu0 %v2743, 16
  %v3786 = vpop.permute.xlu0 %3785
  %3787 = vrot.lane.b32.xlu0 %v2744, 16
  %v3788 = vpop.permute.xlu0 %3787
  %3789 = vrot.lane.b32.xlu0 %v2749, 16
  %v3790 = vpop.permute.xlu0 %3789
  %3791 = vrot.lane.b32.xlu0 %v2750, 16
  %v3792 = vpop.permute.xlu0 %3791
  %3793 = vrot.lane.b32.xlu0 %v2751, 16
  %v3794 = vpop.permute.xlu0 %3793
  %3795 = vrot.lane.b32.xlu0 %v2752, 16
  %v3796 = vpop.permute.xlu0 %3795
  %3797 = vrot.lane.b32.xlu0 %v2753, 16
  %v3798 = vpop.permute.xlu0 %3797
  %3799 = vrot.lane.b32.xlu0 %v2754, 16
  %v3800 = vpop.permute.xlu0 %3799
  %3801 = vrot.lane.b32.xlu0 %v2755, 16
  %v3802 = vpop.permute.xlu0 %3801
  %3803 = vrot.lane.b32.xlu0 %v2756, 16
  %v3804 = vpop.permute.xlu0 %3803
  %3805 = vrot.lane.b32.xlu0 %v2761, 16
  %v3806 = vpop.permute.xlu0 %3805
  %3807 = vrot.lane.b32.xlu0 %v2762, 16
  %v3808 = vpop.permute.xlu0 %3807
  %3809 = vrot.lane.b32.xlu0 %v2763, 16
  %v3810 = vpop.permute.xlu0 %3809
  %3811 = vrot.lane.b32.xlu0 %v2764, 16
  %v3812 = vpop.permute.xlu0 %3811
  %3813 = vrot.lane.b32.xlu0 %v2765, 16
  %v3814 = vpop.permute.xlu0 %3813
  %3815 = vrot.lane.b32.xlu0 %v2766, 16
  %v3816 = vpop.permute.xlu0 %3815
  %3817 = vrot.lane.b32.xlu0 %v2767, 16
  %v3818 = vpop.permute.xlu0 %3817
  %3819 = vrot.lane.b32.xlu0 %v2768, 16
  %v3820 = vpop.permute.xlu0 %3819
  %3821 = vrot.lane.b32.xlu0 %v2773, 16
  %v3822 = vpop.permute.xlu0 %3821
  %3823 = vrot.lane.b32.xlu0 %v2774, 16
  %v3824 = vpop.permute.xlu0 %3823
  %3825 = vrot.lane.b32.xlu0 %v2775, 16
  %v3826 = vpop.permute.xlu0 %3825
  %3827 = vrot.lane.b32.xlu0 %v2776, 16
  %v3828 = vpop.permute.xlu0 %3827
  %3829 = vrot.lane.b32.xlu0 %v2777, 16
  %v3830 = vpop.permute.xlu0 %3829
  %3831 = vrot.lane.b32.xlu0 %v2778, 16
  %v3832 = vpop.permute.xlu0 %3831
  %3833 = vrot.lane.b32.xlu0 %v2779, 16
  %v3834 = vpop.permute.xlu0 %3833
  %3835 = vrot.lane.b32.xlu0 %v2780, 16
  %v3836 = vpop.permute.xlu0 %3835
  %v3837 = vadd.f32 %v3549, %v3646
  %v3838 = vadd.f32 %v3550, %v3648
  %v3839 = vadd.f32 %v3551, %v3650
  %v3840 = vadd.f32 %v3552, %v3652
  %v3841 = vadd.f32 %v3553, %v3654
  %v3842 = vadd.f32 %v3554, %v3656
  %v3843 = vadd.f32 %v3555, %v3658
  %v3844 = vadd.f32 %v3556, %v3660
  %v3845 = vadd.f32 %v3557, %v3662
  %v3846 = vadd.f32 %v3558, %v3664
  %v3847 = vadd.f32 %v3559, %v3666
  %v3848 = vadd.f32 %v3560, %v3668
  %v3849 = vadd.f32 %v3561, %v3670
  %v3850 = vadd.f32 %v3562, %v3672
  %v3851 = vadd.f32 %v3563, %v3674
  %v3852 = vadd.f32 %v3564, %v3676
  %v3853 = vadd.f32 %v3565, %v3678
  %v3854 = vadd.f32 %v3566, %v3680
  %v3855 = vadd.f32 %v3567, %v3682
  %v3856 = vadd.f32 %v3568, %v3684
  %v3857 = vadd.f32 %v3569, %v3686
  %v3858 = vadd.f32 %v3570, %v3688
  %v3859 = vadd.f32 %v3571, %v3690
  %v3860 = vadd.f32 %v3572, %v3692
  %v3861 = vadd.f32 %v3573, %v3694
  %v3862 = vadd.f32 %v3574, %v3696
  %v3863 = vadd.f32 %v3575, %v3698
  %v3864 = vadd.f32 %v3576, %v3700
  %v3865 = vadd.f32 %v3577, %v3702
  %v3866 = vadd.f32 %v3578, %v3704
  %v3867 = vadd.f32 %v3579, %v3706
  %v3868 = vadd.f32 %v3580, %v3708
  %v3869 = vadd.f32 %v3581, %v3710
  %v3870 = vadd.f32 %v3582, %v3712
  %v3871 = vadd.f32 %v3583, %v3714
  %v3872 = vadd.f32 %v3584, %v3716
  %v3873 = vadd.f32 %v3585, %v3718
  %v3874 = vadd.f32 %v3586, %v3720
  %v3875 = vadd.f32 %v3587, %v3722
  %v3876 = vadd.f32 %v3588, %v3724
  %v3877 = vadd.f32 %v3589, %v3726
  %v3878 = vadd.f32 %v3590, %v3728
  %v3879 = vadd.f32 %v3591, %v3730
  %v3880 = vadd.f32 %v3592, %v3732
  %v3881 = vadd.f32 %v3593, %v3734
  %v3882 = vadd.f32 %v3594, %v3736
  %v3883 = vadd.f32 %v3595, %v3738
  %v3884 = vadd.f32 %v3596, %v3740
  %v3885 = vadd.f32 %v3597, %v3742
  %v3886 = vadd.f32 %v3598, %v3744
  %v3887 = vadd.f32 %v3599, %v3746
  %v3888 = vadd.f32 %v3600, %v3748
  %v3889 = vadd.f32 %v3601, %v3750
  %v3890 = vadd.f32 %v3602, %v3752
  %v3891 = vadd.f32 %v3603, %v3754
  %v3892 = vadd.f32 %v3604, %v3756
  %v3893 = vadd.f32 %v3605, %v3758
  %v3894 = vadd.f32 %v3606, %v3760
  %v3895 = vadd.f32 %v3607, %v3762
  %v3896 = vadd.f32 %v3608, %v3764
  %v3897 = vadd.f32 %v3609, %v3766
  %v3898 = vadd.f32 %v3610, %v3768
  %v3899 = vadd.f32 %v3611, %v3770
  %v3900 = vadd.f32 %v3612, %v3772
  %v3901 = vadd.f32 %v3613, %v3774
  %v3902 = vadd.f32 %v3614, %v3776
  %v3903 = vadd.f32 %v3615, %v3778
  %v3904 = vadd.f32 %v3616, %v3780
  %v3905 = vadd.f32 %v3617, %v3782
  %v3906 = vadd.f32 %v3618, %v3784
  %v3907 = vadd.f32 %v3619, %v3786
  %v3908 = vadd.f32 %v3620, %v3788
  %v3909 = vadd.f32 %v3621, %v3790
  %v3910 = vadd.f32 %v3622, %v3792
  %v3911 = vadd.f32 %v3623, %v3794
  %v3912 = vadd.f32 %v3624, %v3796
  %v3913 = vadd.f32 %v3625, %v3798
  %v3914 = vadd.f32 %v3626, %v3800
  %v3915 = vadd.f32 %v3627, %v3802
  %v3916 = vadd.f32 %v3628, %v3804
  %v3917 = vadd.f32 %v3629, %v3806
  %v3918 = vadd.f32 %v3630, %v3808
  %v3919 = vadd.f32 %v3631, %v3810
  %v3920 = vadd.f32 %v3632, %v3812
  %v3921 = vadd.f32 %v3633, %v3814
  %v3922 = vadd.f32 %v3634, %v3816
  %v3923 = vadd.f32 %v3635, %v3818
  %v3924 = vadd.f32 %v3636, %v3820
  %v3925 = vadd.f32 %v3637, %v3822
  %v3926 = vadd.f32 %v3638, %v3824
  %v3927 = vadd.f32 %v3639, %v3826
  %v3928 = vadd.f32 %v3640, %v3828
  %v3929 = vadd.f32 %v3641, %v3830
  %v3930 = vadd.f32 %v3642, %v3832
  %v3931 = vadd.f32 %v3643, %v3834
  %v3932 = vadd.f32 %v3644, %v3836
  %3933 = vrot.lane.b32.xlu0 %v3845, 20
  %v3934 = vpop.permute.xlu0 %3933
  %3935 = vrot.lane.b32.xlu0 %v3846, 20
  %v3936 = vpop.permute.xlu0 %3935
  %3937 = vrot.lane.b32.xlu0 %v3847, 20
  %v3938 = vpop.permute.xlu0 %3937
  %3939 = vrot.lane.b32.xlu0 %v3848, 20
  %v3940 = vpop.permute.xlu0 %3939
  %3941 = vrot.lane.b32.xlu0 %v3849, 20
  %v3942 = vpop.permute.xlu0 %3941
  %3943 = vrot.lane.b32.xlu0 %v3850, 20
  %v3944 = vpop.permute.xlu0 %3943
  %3945 = vrot.lane.b32.xlu0 %v3851, 20
  %v3946 = vpop.permute.xlu0 %3945
  %3947 = vrot.lane.b32.xlu0 %v3852, 20
  %v3948 = vpop.permute.xlu0 %3947
  %3949 = vrot.lane.b32.xlu0 %v3853, 20
  %v3950 = vpop.permute.xlu0 %3949
  %3951 = vrot.lane.b32.xlu0 %v3854, 20
  %v3952 = vpop.permute.xlu0 %3951
  %3953 = vrot.lane.b32.xlu0 %v3855, 20
  %v3954 = vpop.permute.xlu0 %3953
  %3955 = vrot.lane.b32.xlu0 %v3856, 20
  %v3956 = vpop.permute.xlu0 %3955
  %3957 = vrot.lane.b32.xlu0 %v3857, 20
  %v3958 = vpop.permute.xlu0 %3957
  %3959 = vrot.lane.b32.xlu0 %v3858, 20
  %v3960 = vpop.permute.xlu0 %3959
  %3961 = vrot.lane.b32.xlu0 %v3859, 20
  %v3962 = vpop.permute.xlu0 %3961
  %3963 = vrot.lane.b32.xlu0 %v3860, 20
  %v3964 = vpop.permute.xlu0 %3963
  %3965 = vrot.lane.b32.xlu0 %v3861, 20
  %v3966 = vpop.permute.xlu0 %3965
  %3967 = vrot.lane.b32.xlu0 %v3862, 20
  %v3968 = vpop.permute.xlu0 %3967
  %3969 = vrot.lane.b32.xlu0 %v3863, 20
  %v3970 = vpop.permute.xlu0 %3969
  %3971 = vrot.lane.b32.xlu0 %v3864, 20
  %v3972 = vpop.permute.xlu0 %3971
  %3973 = vrot.lane.b32.xlu0 %v3865, 20
  %v3974 = vpop.permute.xlu0 %3973
  %3975 = vrot.lane.b32.xlu0 %v3866, 20
  %v3976 = vpop.permute.xlu0 %3975
  %3977 = vrot.lane.b32.xlu0 %v3867, 20
  %v3978 = vpop.permute.xlu0 %3977
  %3979 = vrot.lane.b32.xlu0 %v3868, 20
  %v3980 = vpop.permute.xlu0 %3979
  %3981 = vrot.lane.b32.xlu0 %v3869, 20
  %v3982 = vpop.permute.xlu0 %3981
  %3983 = vrot.lane.b32.xlu0 %v3870, 20
  %v3984 = vpop.permute.xlu0 %3983
  %3985 = vrot.lane.b32.xlu0 %v3871, 20
  %v3986 = vpop.permute.xlu0 %3985
  %3987 = vrot.lane.b32.xlu0 %v3872, 20
  %v3988 = vpop.permute.xlu0 %3987
  %3989 = vrot.lane.b32.xlu0 %v3873, 20
  %v3990 = vpop.permute.xlu0 %3989
  %3991 = vrot.lane.b32.xlu0 %v3874, 20
  %v3992 = vpop.permute.xlu0 %3991
  %3993 = vrot.lane.b32.xlu0 %v3875, 20
  %v3994 = vpop.permute.xlu0 %3993
  %3995 = vrot.lane.b32.xlu0 %v3876, 20
  %v3996 = vpop.permute.xlu0 %3995
  %3997 = vrot.lane.b32.xlu0 %v3877, 20
  %v3998 = vpop.permute.xlu0 %3997
  %3999 = vrot.lane.b32.xlu0 %v3878, 20
  %v4000 = vpop.permute.xlu0 %3999
  %4001 = vrot.lane.b32.xlu0 %v3879, 20
  %v4002 = vpop.permute.xlu0 %4001
  %4003 = vrot.lane.b32.xlu0 %v3880, 20
  %v4004 = vpop.permute.xlu0 %4003
  %4005 = vrot.lane.b32.xlu0 %v3881, 20
  %v4006 = vpop.permute.xlu0 %4005
  %4007 = vrot.lane.b32.xlu0 %v3882, 20
  %v4008 = vpop.permute.xlu0 %4007
  %4009 = vrot.lane.b32.xlu0 %v3883, 20
  %v4010 = vpop.permute.xlu0 %4009
  %4011 = vrot.lane.b32.xlu0 %v3884, 20
  %v4012 = vpop.permute.xlu0 %4011
  %4013 = vrot.lane.b32.xlu0 %v3885, 20
  %v4014 = vpop.permute.xlu0 %4013
  %4015 = vrot.lane.b32.xlu0 %v3886, 20
  %v4016 = vpop.permute.xlu0 %4015
  %4017 = vrot.lane.b32.xlu0 %v3887, 20
  %v4018 = vpop.permute.xlu0 %4017
  %4019 = vrot.lane.b32.xlu0 %v3888, 20
  %v4020 = vpop.permute.xlu0 %4019
  %4021 = vrot.lane.b32.xlu0 %v3889, 20
  %v4022 = vpop.permute.xlu0 %4021
  %4023 = vrot.lane.b32.xlu0 %v3890, 20
  %v4024 = vpop.permute.xlu0 %4023
  %4025 = vrot.lane.b32.xlu0 %v3891, 20
  %v4026 = vpop.permute.xlu0 %4025
  %4027 = vrot.lane.b32.xlu0 %v3892, 20
  %v4028 = vpop.permute.xlu0 %4027
  %4029 = vrot.lane.b32.xlu0 %v3893, 20
  %v4030 = vpop.permute.xlu0 %4029
  %4031 = vrot.lane.b32.xlu0 %v3894, 20
  %v4032 = vpop.permute.xlu0 %4031
  %4033 = vrot.lane.b32.xlu0 %v3895, 20
  %v4034 = vpop.permute.xlu0 %4033
  %4035 = vrot.lane.b32.xlu0 %v3896, 20
  %v4036 = vpop.permute.xlu0 %4035
  %4037 = vrot.lane.b32.xlu0 %v3897, 20
  %v4038 = vpop.permute.xlu0 %4037
  %4039 = vrot.lane.b32.xlu0 %v3898, 20
  %v4040 = vpop.permute.xlu0 %4039
  %4041 = vrot.lane.b32.xlu0 %v3899, 20
  %v4042 = vpop.permute.xlu0 %4041
  %4043 = vrot.lane.b32.xlu0 %v3900, 20
  %v4044 = vpop.permute.xlu0 %4043
  %4045 = vrot.lane.b32.xlu0 %v3901, 20
  %v4046 = vpop.permute.xlu0 %4045
  %4047 = vrot.lane.b32.xlu0 %v3902, 20
  %v4048 = vpop.permute.xlu0 %4047
  %4049 = vrot.lane.b32.xlu0 %v3903, 20
  %v4050 = vpop.permute.xlu0 %4049
  %4051 = vrot.lane.b32.xlu0 %v3904, 20
  %v4052 = vpop.permute.xlu0 %4051
  %4053 = vrot.lane.b32.xlu0 %v3905, 20
  %v4054 = vpop.permute.xlu0 %4053
  %4055 = vrot.lane.b32.xlu0 %v3906, 20
  %v4056 = vpop.permute.xlu0 %4055
  %4057 = vrot.lane.b32.xlu0 %v3907, 20
  %v4058 = vpop.permute.xlu0 %4057
  %4059 = vrot.lane.b32.xlu0 %v3908, 20
  %v4060 = vpop.permute.xlu0 %4059
  %v4061 = vadd.f32 %v3837, %v3934
  %v4062 = vadd.f32 %v3838, %v3936
  %v4063 = vadd.f32 %v3839, %v3938
  %v4064 = vadd.f32 %v3840, %v3940
  %v4065 = vadd.f32 %v3841, %v3942
  %v4066 = vadd.f32 %v3842, %v3944
  %v4067 = vadd.f32 %v3843, %v3946
  %v4068 = vadd.f32 %v3844, %v3948
  %v4069 = vadd.f32 %v3845, %v3950
  %v4070 = vadd.f32 %v3846, %v3952
  %v4071 = vadd.f32 %v3847, %v3954
  %v4072 = vadd.f32 %v3848, %v3956
  %v4073 = vadd.f32 %v3849, %v3958
  %v4074 = vadd.f32 %v3850, %v3960
  %v4075 = vadd.f32 %v3851, %v3962
  %v4076 = vadd.f32 %v3852, %v3964
  %v4077 = vadd.f32 %v3853, %v3966
  %v4078 = vadd.f32 %v3854, %v3968
  %v4079 = vadd.f32 %v3855, %v3970
  %v4080 = vadd.f32 %v3856, %v3972
  %v4081 = vadd.f32 %v3857, %v3974
  %v4082 = vadd.f32 %v3858, %v3976
  %v4083 = vadd.f32 %v3859, %v3978
  %v4084 = vadd.f32 %v3860, %v3980
  %v4085 = vadd.f32 %v3861, %v3982
  %v4086 = vadd.f32 %v3862, %v3984
  %v4087 = vadd.f32 %v3863, %v3986
  %v4088 = vadd.f32 %v3864, %v3988
  %v4089 = vadd.f32 %v3865, %v3990
  %v4090 = vadd.f32 %v3866, %v3992
  %v4091 = vadd.f32 %v3867, %v3994
  %v4092 = vadd.f32 %v3868, %v3996
  %v4093 = vadd.f32 %v3869, %v3998
  %v4094 = vadd.f32 %v3870, %v4000
  %v4095 = vadd.f32 %v3871, %v4002
  %v4096 = vadd.f32 %v3872, %v4004
  %v4097 = vadd.f32 %v3873, %v4006
  %v4098 = vadd.f32 %v3874, %v4008
  %v4099 = vadd.f32 %v3875, %v4010
  %v4100 = vadd.f32 %v3876, %v4012
  %v4101 = vadd.f32 %v3877, %v4014
  %v4102 = vadd.f32 %v3878, %v4016
  %v4103 = vadd.f32 %v3879, %v4018
  %v4104 = vadd.f32 %v3880, %v4020
  %v4105 = vadd.f32 %v3881, %v4022
  %v4106 = vadd.f32 %v3882, %v4024
  %v4107 = vadd.f32 %v3883, %v4026
  %v4108 = vadd.f32 %v3884, %v4028
  %v4109 = vadd.f32 %v3885, %v4030
  %v4110 = vadd.f32 %v3886, %v4032
  %v4111 = vadd.f32 %v3887, %v4034
  %v4112 = vadd.f32 %v3888, %v4036
  %v4113 = vadd.f32 %v3889, %v4038
  %v4114 = vadd.f32 %v3890, %v4040
  %v4115 = vadd.f32 %v3891, %v4042
  %v4116 = vadd.f32 %v3892, %v4044
  %v4117 = vadd.f32 %v3893, %v4046
  %v4118 = vadd.f32 %v3894, %v4048
  %v4119 = vadd.f32 %v3895, %v4050
  %v4120 = vadd.f32 %v3896, %v4052
  %v4121 = vadd.f32 %v3897, %v4054
  %v4122 = vadd.f32 %v3898, %v4056
  %v4123 = vadd.f32 %v3899, %v4058
  %v4124 = vadd.f32 %v3900, %v4060
  %4125 = vrot.lane.b32.xlu0 %v3853, 40
  %v4126 = vpop.permute.xlu0 %4125
  %4127 = vrot.lane.b32.xlu0 %v3854, 40
  %v4128 = vpop.permute.xlu0 %4127
  %4129 = vrot.lane.b32.xlu0 %v3855, 40
  %v4130 = vpop.permute.xlu0 %4129
  %4131 = vrot.lane.b32.xlu0 %v3856, 40
  %v4132 = vpop.permute.xlu0 %4131
  %4133 = vrot.lane.b32.xlu0 %v3857, 40
  %v4134 = vpop.permute.xlu0 %4133
  %4135 = vrot.lane.b32.xlu0 %v3858, 40
  %v4136 = vpop.permute.xlu0 %4135
  %4137 = vrot.lane.b32.xlu0 %v3859, 40
  %v4138 = vpop.permute.xlu0 %4137
  %4139 = vrot.lane.b32.xlu0 %v3860, 40
  %v4140 = vpop.permute.xlu0 %4139
  %4141 = vrot.lane.b32.xlu0 %v3861, 40
  %v4142 = vpop.permute.xlu0 %4141
  %4143 = vrot.lane.b32.xlu0 %v3862, 40
  %v4144 = vpop.permute.xlu0 %4143
  %4145 = vrot.lane.b32.xlu0 %v3863, 40
  %v4146 = vpop.permute.xlu0 %4145
  %4147 = vrot.lane.b32.xlu0 %v3864, 40
  %v4148 = vpop.permute.xlu0 %4147
  %4149 = vrot.lane.b32.xlu0 %v3865, 40
  %v4150 = vpop.permute.xlu0 %4149
  %4151 = vrot.lane.b32.xlu0 %v3866, 40
  %v4152 = vpop.permute.xlu0 %4151
  %4153 = vrot.lane.b32.xlu0 %v3867, 40
  %v4154 = vpop.permute.xlu0 %4153
  %4155 = vrot.lane.b32.xlu0 %v3868, 40
  %v4156 = vpop.permute.xlu0 %4155
  %4157 = vrot.lane.b32.xlu0 %v3869, 40
  %v4158 = vpop.permute.xlu0 %4157
  %4159 = vrot.lane.b32.xlu0 %v3870, 40
  %v4160 = vpop.permute.xlu0 %4159
  %4161 = vrot.lane.b32.xlu0 %v3871, 40
  %v4162 = vpop.permute.xlu0 %4161
  %4163 = vrot.lane.b32.xlu0 %v3872, 40
  %v4164 = vpop.permute.xlu0 %4163
  %4165 = vrot.lane.b32.xlu0 %v3873, 40
  %v4166 = vpop.permute.xlu0 %4165
  %4167 = vrot.lane.b32.xlu0 %v3874, 40
  %v4168 = vpop.permute.xlu0 %4167
  %4169 = vrot.lane.b32.xlu0 %v3875, 40
  %v4170 = vpop.permute.xlu0 %4169
  %4171 = vrot.lane.b32.xlu0 %v3876, 40
  %v4172 = vpop.permute.xlu0 %4171
  %4173 = vrot.lane.b32.xlu0 %v3877, 40
  %v4174 = vpop.permute.xlu0 %4173
  %4175 = vrot.lane.b32.xlu0 %v3878, 40
  %v4176 = vpop.permute.xlu0 %4175
  %4177 = vrot.lane.b32.xlu0 %v3879, 40
  %v4178 = vpop.permute.xlu0 %4177
  %4179 = vrot.lane.b32.xlu0 %v3880, 40
  %v4180 = vpop.permute.xlu0 %4179
  %4181 = vrot.lane.b32.xlu0 %v3881, 40
  %v4182 = vpop.permute.xlu0 %4181
  %4183 = vrot.lane.b32.xlu0 %v3882, 40
  %v4184 = vpop.permute.xlu0 %4183
  %4185 = vrot.lane.b32.xlu0 %v3883, 40
  %v4186 = vpop.permute.xlu0 %4185
  %4187 = vrot.lane.b32.xlu0 %v3884, 40
  %v4188 = vpop.permute.xlu0 %4187
  %4189 = vrot.lane.b32.xlu0 %v3885, 40
  %v4190 = vpop.permute.xlu0 %4189
  %4191 = vrot.lane.b32.xlu0 %v3886, 40
  %v4192 = vpop.permute.xlu0 %4191
  %4193 = vrot.lane.b32.xlu0 %v3887, 40
  %v4194 = vpop.permute.xlu0 %4193
  %4195 = vrot.lane.b32.xlu0 %v3888, 40
  %v4196 = vpop.permute.xlu0 %4195
  %4197 = vrot.lane.b32.xlu0 %v3889, 40
  %v4198 = vpop.permute.xlu0 %4197
  %4199 = vrot.lane.b32.xlu0 %v3890, 40
  %v4200 = vpop.permute.xlu0 %4199
  %4201 = vrot.lane.b32.xlu0 %v3891, 40
  %v4202 = vpop.permute.xlu0 %4201
  %4203 = vrot.lane.b32.xlu0 %v3892, 40
  %v4204 = vpop.permute.xlu0 %4203
  %4205 = vrot.lane.b32.xlu0 %v3893, 40
  %v4206 = vpop.permute.xlu0 %4205
  %4207 = vrot.lane.b32.xlu0 %v3894, 40
  %v4208 = vpop.permute.xlu0 %4207
  %4209 = vrot.lane.b32.xlu0 %v3895, 40
  %v4210 = vpop.permute.xlu0 %4209
  %4211 = vrot.lane.b32.xlu0 %v3896, 40
  %v4212 = vpop.permute.xlu0 %4211
  %4213 = vrot.lane.b32.xlu0 %v3897, 40
  %v4214 = vpop.permute.xlu0 %4213
  %4215 = vrot.lane.b32.xlu0 %v3898, 40
  %v4216 = vpop.permute.xlu0 %4215
  %4217 = vrot.lane.b32.xlu0 %v3899, 40
  %v4218 = vpop.permute.xlu0 %4217
  %4219 = vrot.lane.b32.xlu0 %v3900, 40
  %v4220 = vpop.permute.xlu0 %4219
  %4221 = vrot.lane.b32.xlu0 %v3901, 40
  %v4222 = vpop.permute.xlu0 %4221
  %4223 = vrot.lane.b32.xlu0 %v3902, 40
  %v4224 = vpop.permute.xlu0 %4223
  %4225 = vrot.lane.b32.xlu0 %v3903, 40
  %v4226 = vpop.permute.xlu0 %4225
  %4227 = vrot.lane.b32.xlu0 %v3904, 40
  %v4228 = vpop.permute.xlu0 %4227
  %4229 = vrot.lane.b32.xlu0 %v3905, 40
  %v4230 = vpop.permute.xlu0 %4229
  %4231 = vrot.lane.b32.xlu0 %v3906, 40
  %v4232 = vpop.permute.xlu0 %4231
  %4233 = vrot.lane.b32.xlu0 %v3907, 40
  %v4234 = vpop.permute.xlu0 %4233
  %4235 = vrot.lane.b32.xlu0 %v3908, 40
  %v4236 = vpop.permute.xlu0 %4235
  %4237 = vrot.lane.b32.xlu0 %v3909, 40
  %v4238 = vpop.permute.xlu0 %4237
  %4239 = vrot.lane.b32.xlu0 %v3910, 40
  %v4240 = vpop.permute.xlu0 %4239
  %4241 = vrot.lane.b32.xlu0 %v3911, 40
  %v4242 = vpop.permute.xlu0 %4241
  %4243 = vrot.lane.b32.xlu0 %v3912, 40
  %v4244 = vpop.permute.xlu0 %4243
  %4245 = vrot.lane.b32.xlu0 %v3913, 40
  %v4246 = vpop.permute.xlu0 %4245
  %4247 = vrot.lane.b32.xlu0 %v3914, 40
  %v4248 = vpop.permute.xlu0 %4247
  %4249 = vrot.lane.b32.xlu0 %v3915, 40
  %v4250 = vpop.permute.xlu0 %4249
  %4251 = vrot.lane.b32.xlu0 %v3916, 40
  %v4252 = vpop.permute.xlu0 %4251
  %v4253 = vadd.f32 %v4061, %v4126
  %v4254 = vadd.f32 %v4062, %v4128
  %v4255 = vadd.f32 %v4063, %v4130
  %v4256 = vadd.f32 %v4064, %v4132
  %v4257 = vadd.f32 %v4065, %v4134
  %v4258 = vadd.f32 %v4066, %v4136
  %v4259 = vadd.f32 %v4067, %v4138
  %v4260 = vadd.f32 %v4068, %v4140
  %v4261 = vadd.f32 %v4069, %v4142
  %v4262 = vadd.f32 %v4070, %v4144
  %v4263 = vadd.f32 %v4071, %v4146
  %v4264 = vadd.f32 %v4072, %v4148
  %v4265 = vadd.f32 %v4073, %v4150
  %v4266 = vadd.f32 %v4074, %v4152
  %v4267 = vadd.f32 %v4075, %v4154
  %v4268 = vadd.f32 %v4076, %v4156
  %v4269 = vadd.f32 %v4077, %v4158
  %v4270 = vadd.f32 %v4078, %v4160
  %v4271 = vadd.f32 %v4079, %v4162
  %v4272 = vadd.f32 %v4080, %v4164
  %v4273 = vadd.f32 %v4081, %v4166
  %v4274 = vadd.f32 %v4082, %v4168
  %v4275 = vadd.f32 %v4083, %v4170
  %v4276 = vadd.f32 %v4084, %v4172
  %v4277 = vadd.f32 %v4085, %v4174
  %v4278 = vadd.f32 %v4086, %v4176
  %v4279 = vadd.f32 %v4087, %v4178
  %v4280 = vadd.f32 %v4088, %v4180
  %v4281 = vadd.f32 %v4089, %v4182
  %v4282 = vadd.f32 %v4090, %v4184
  %v4283 = vadd.f32 %v4091, %v4186
  %v4284 = vadd.f32 %v4092, %v4188
  %v4285 = vadd.f32 %v4093, %v4190
  %v4286 = vadd.f32 %v4094, %v4192
  %v4287 = vadd.f32 %v4095, %v4194
  %v4288 = vadd.f32 %v4096, %v4196
  %v4289 = vadd.f32 %v4097, %v4198
  %v4290 = vadd.f32 %v4098, %v4200
  %v4291 = vadd.f32 %v4099, %v4202
  %v4292 = vadd.f32 %v4100, %v4204
  %v4293 = vadd.f32 %v4101, %v4206
  %v4294 = vadd.f32 %v4102, %v4208
  %v4295 = vadd.f32 %v4103, %v4210
  %v4296 = vadd.f32 %v4104, %v4212
  %v4297 = vadd.f32 %v4105, %v4214
  %v4298 = vadd.f32 %v4106, %v4216
  %v4299 = vadd.f32 %v4107, %v4218
  %v4300 = vadd.f32 %v4108, %v4220
  %v4301 = vadd.f32 %v4109, %v4222
  %v4302 = vadd.f32 %v4110, %v4224
  %v4303 = vadd.f32 %v4111, %v4226
  %v4304 = vadd.f32 %v4112, %v4228
  %v4305 = vadd.f32 %v4113, %v4230
  %v4306 = vadd.f32 %v4114, %v4232
  %v4307 = vadd.f32 %v4115, %v4234
  %v4308 = vadd.f32 %v4116, %v4236
  %v4309 = vadd.f32 %v4117, %v4238
  %v4310 = vadd.f32 %v4118, %v4240
  %v4311 = vadd.f32 %v4119, %v4242
  %v4312 = vadd.f32 %v4120, %v4244
  %v4313 = vadd.f32 %v4121, %v4246
  %v4314 = vadd.f32 %v4122, %v4248
  %v4315 = vadd.f32 %v4123, %v4250
  %v4316 = vadd.f32 %v4124, %v4252
  %4317 = vrot.lane.b32.xlu0 %v3861, 60
  %v4318 = vpop.permute.xlu0 %4317
  %4319 = vrot.lane.b32.xlu0 %v3862, 60
  %v4320 = vpop.permute.xlu0 %4319
  %4321 = vrot.lane.b32.xlu0 %v3863, 60
  %v4322 = vpop.permute.xlu0 %4321
  %4323 = vrot.lane.b32.xlu0 %v3864, 60
  %v4324 = vpop.permute.xlu0 %4323
  %4325 = vrot.lane.b32.xlu0 %v3865, 60
  %v4326 = vpop.permute.xlu0 %4325
  %4327 = vrot.lane.b32.xlu0 %v3866, 60
  %v4328 = vpop.permute.xlu0 %4327
  %4329 = vrot.lane.b32.xlu0 %v3867, 60
  %v4330 = vpop.permute.xlu0 %4329
  %4331 = vrot.lane.b32.xlu0 %v3868, 60
  %v4332 = vpop.permute.xlu0 %4331
  %4333 = vrot.lane.b32.xlu0 %v3869, 60
  %v4334 = vpop.permute.xlu0 %4333
  %4335 = vrot.lane.b32.xlu0 %v3870, 60
  %v4336 = vpop.permute.xlu0 %4335
  %4337 = vrot.lane.b32.xlu0 %v3871, 60
  %v4338 = vpop.permute.xlu0 %4337
  %4339 = vrot.lane.b32.xlu0 %v3872, 60
  %v4340 = vpop.permute.xlu0 %4339
  %4341 = vrot.lane.b32.xlu0 %v3873, 60
  %v4342 = vpop.permute.xlu0 %4341
  %4343 = vrot.lane.b32.xlu0 %v3874, 60
  %v4344 = vpop.permute.xlu0 %4343
  %4345 = vrot.lane.b32.xlu0 %v3875, 60
  %v4346 = vpop.permute.xlu0 %4345
  %4347 = vrot.lane.b32.xlu0 %v3876, 60
  %v4348 = vpop.permute.xlu0 %4347
  %4349 = vrot.lane.b32.xlu0 %v3877, 60
  %v4350 = vpop.permute.xlu0 %4349
  %4351 = vrot.lane.b32.xlu0 %v3878, 60
  %v4352 = vpop.permute.xlu0 %4351
  %4353 = vrot.lane.b32.xlu0 %v3879, 60
  %v4354 = vpop.permute.xlu0 %4353
  %4355 = vrot.lane.b32.xlu0 %v3880, 60
  %v4356 = vpop.permute.xlu0 %4355
  %4357 = vrot.lane.b32.xlu0 %v3881, 60
  %v4358 = vpop.permute.xlu0 %4357
  %4359 = vrot.lane.b32.xlu0 %v3882, 60
  %v4360 = vpop.permute.xlu0 %4359
  %4361 = vrot.lane.b32.xlu0 %v3883, 60
  %v4362 = vpop.permute.xlu0 %4361
  %4363 = vrot.lane.b32.xlu0 %v3884, 60
  %v4364 = vpop.permute.xlu0 %4363
  %4365 = vrot.lane.b32.xlu0 %v3885, 60
  %v4366 = vpop.permute.xlu0 %4365
  %4367 = vrot.lane.b32.xlu0 %v3886, 60
  %v4368 = vpop.permute.xlu0 %4367
  %4369 = vrot.lane.b32.xlu0 %v3887, 60
  %v4370 = vpop.permute.xlu0 %4369
  %4371 = vrot.lane.b32.xlu0 %v3888, 60
  %v4372 = vpop.permute.xlu0 %4371
  %4373 = vrot.lane.b32.xlu0 %v3889, 60
  %v4374 = vpop.permute.xlu0 %4373
  %4375 = vrot.lane.b32.xlu0 %v3890, 60
  %v4376 = vpop.permute.xlu0 %4375
  %4377 = vrot.lane.b32.xlu0 %v3891, 60
  %v4378 = vpop.permute.xlu0 %4377
  %4379 = vrot.lane.b32.xlu0 %v3892, 60
  %v4380 = vpop.permute.xlu0 %4379
  %4381 = vrot.lane.b32.xlu0 %v3893, 60
  %v4382 = vpop.permute.xlu0 %4381
  %4383 = vrot.lane.b32.xlu0 %v3894, 60
  %v4384 = vpop.permute.xlu0 %4383
  %4385 = vrot.lane.b32.xlu0 %v3895, 60
  %v4386 = vpop.permute.xlu0 %4385
  %4387 = vrot.lane.b32.xlu0 %v3896, 60
  %v4388 = vpop.permute.xlu0 %4387
  %4389 = vrot.lane.b32.xlu0 %v3897, 60
  %v4390 = vpop.permute.xlu0 %4389
  %4391 = vrot.lane.b32.xlu0 %v3898, 60
  %v4392 = vpop.permute.xlu0 %4391
  %4393 = vrot.lane.b32.xlu0 %v3899, 60
  %v4394 = vpop.permute.xlu0 %4393
  %4395 = vrot.lane.b32.xlu0 %v3900, 60
  %v4396 = vpop.permute.xlu0 %4395
  %4397 = vrot.lane.b32.xlu0 %v3901, 60
  %v4398 = vpop.permute.xlu0 %4397
  %4399 = vrot.lane.b32.xlu0 %v3902, 60
  %v4400 = vpop.permute.xlu0 %4399
  %4401 = vrot.lane.b32.xlu0 %v3903, 60
  %v4402 = vpop.permute.xlu0 %4401
  %4403 = vrot.lane.b32.xlu0 %v3904, 60
  %v4404 = vpop.permute.xlu0 %4403
  %4405 = vrot.lane.b32.xlu0 %v3905, 60
  %v4406 = vpop.permute.xlu0 %4405
  %4407 = vrot.lane.b32.xlu0 %v3906, 60
  %v4408 = vpop.permute.xlu0 %4407
  %4409 = vrot.lane.b32.xlu0 %v3907, 60
  %v4410 = vpop.permute.xlu0 %4409
  %4411 = vrot.lane.b32.xlu0 %v3908, 60
  %v4412 = vpop.permute.xlu0 %4411
  %4413 = vrot.lane.b32.xlu0 %v3909, 60
  %v4414 = vpop.permute.xlu0 %4413
  %4415 = vrot.lane.b32.xlu0 %v3910, 60
  %v4416 = vpop.permute.xlu0 %4415
  %4417 = vrot.lane.b32.xlu0 %v3911, 60
  %v4418 = vpop.permute.xlu0 %4417
  %4419 = vrot.lane.b32.xlu0 %v3912, 60
  %v4420 = vpop.permute.xlu0 %4419
  %4421 = vrot.lane.b32.xlu0 %v3913, 60
  %v4422 = vpop.permute.xlu0 %4421
  %4423 = vrot.lane.b32.xlu0 %v3914, 60
  %v4424 = vpop.permute.xlu0 %4423
  %4425 = vrot.lane.b32.xlu0 %v3915, 60
  %v4426 = vpop.permute.xlu0 %4425
  %4427 = vrot.lane.b32.xlu0 %v3916, 60
  %v4428 = vpop.permute.xlu0 %4427
  %4429 = vrot.lane.b32.xlu0 %v3917, 60
  %v4430 = vpop.permute.xlu0 %4429
  %4431 = vrot.lane.b32.xlu0 %v3918, 60
  %v4432 = vpop.permute.xlu0 %4431
  %4433 = vrot.lane.b32.xlu0 %v3919, 60
  %v4434 = vpop.permute.xlu0 %4433
  %4435 = vrot.lane.b32.xlu0 %v3920, 60
  %v4436 = vpop.permute.xlu0 %4435
  %4437 = vrot.lane.b32.xlu0 %v3921, 60
  %v4438 = vpop.permute.xlu0 %4437
  %4439 = vrot.lane.b32.xlu0 %v3922, 60
  %v4440 = vpop.permute.xlu0 %4439
  %4441 = vrot.lane.b32.xlu0 %v3923, 60
  %v4442 = vpop.permute.xlu0 %4441
  %4443 = vrot.lane.b32.xlu0 %v3924, 60
  %v4444 = vpop.permute.xlu0 %4443
  %v4445 = vadd.f32 %v4253, %v4318
  %v4446 = vadd.f32 %v4254, %v4320
  %v4447 = vadd.f32 %v4255, %v4322
  %v4448 = vadd.f32 %v4256, %v4324
  %v4449 = vadd.f32 %v4257, %v4326
  %v4450 = vadd.f32 %v4258, %v4328
  %v4451 = vadd.f32 %v4259, %v4330
  %v4452 = vadd.f32 %v4260, %v4332
  %v4453 = vadd.f32 %v4261, %v4334
  %v4454 = vadd.f32 %v4262, %v4336
  %v4455 = vadd.f32 %v4263, %v4338
  %v4456 = vadd.f32 %v4264, %v4340
  %v4457 = vadd.f32 %v4265, %v4342
  %v4458 = vadd.f32 %v4266, %v4344
  %v4459 = vadd.f32 %v4267, %v4346
  %v4460 = vadd.f32 %v4268, %v4348
  %v4461 = vadd.f32 %v4269, %v4350
  %v4462 = vadd.f32 %v4270, %v4352
  %v4463 = vadd.f32 %v4271, %v4354
  %v4464 = vadd.f32 %v4272, %v4356
  %v4465 = vadd.f32 %v4273, %v4358
  %v4466 = vadd.f32 %v4274, %v4360
  %v4467 = vadd.f32 %v4275, %v4362
  %v4468 = vadd.f32 %v4276, %v4364
  %v4469 = vadd.f32 %v4277, %v4366
  %v4470 = vadd.f32 %v4278, %v4368
  %v4471 = vadd.f32 %v4279, %v4370
  %v4472 = vadd.f32 %v4280, %v4372
  %v4473 = vadd.f32 %v4281, %v4374
  %v4474 = vadd.f32 %v4282, %v4376
  %v4475 = vadd.f32 %v4283, %v4378
  %v4476 = vadd.f32 %v4284, %v4380
  %v4477 = vadd.f32 %v4285, %v4382
  %v4478 = vadd.f32 %v4286, %v4384
  %v4479 = vadd.f32 %v4287, %v4386
  %v4480 = vadd.f32 %v4288, %v4388
  %v4481 = vadd.f32 %v4289, %v4390
  %v4482 = vadd.f32 %v4290, %v4392
  %v4483 = vadd.f32 %v4291, %v4394
  %v4484 = vadd.f32 %v4292, %v4396
  %v4485 = vadd.f32 %v4293, %v4398
  %v4486 = vadd.f32 %v4294, %v4400
  %v4487 = vadd.f32 %v4295, %v4402
  %v4488 = vadd.f32 %v4296, %v4404
  %v4489 = vadd.f32 %v4297, %v4406
  %v4490 = vadd.f32 %v4298, %v4408
  %v4491 = vadd.f32 %v4299, %v4410
  %v4492 = vadd.f32 %v4300, %v4412
  %v4493 = vadd.f32 %v4301, %v4414
  %v4494 = vadd.f32 %v4302, %v4416
  %v4495 = vadd.f32 %v4303, %v4418
  %v4496 = vadd.f32 %v4304, %v4420
  %v4497 = vadd.f32 %v4305, %v4422
  %v4498 = vadd.f32 %v4306, %v4424
  %v4499 = vadd.f32 %v4307, %v4426
  %v4500 = vadd.f32 %v4308, %v4428
  %v4501 = vadd.f32 %v4309, %v4430
  %v4502 = vadd.f32 %v4310, %v4432
  %v4503 = vadd.f32 %v4311, %v4434
  %v4504 = vadd.f32 %v4312, %v4436
  %v4505 = vadd.f32 %v4313, %v4438
  %v4506 = vadd.f32 %v4314, %v4440
  %v4507 = vadd.f32 %v4315, %v4442
  %v4508 = vadd.f32 %v4316, %v4444
  %4509 = vrot.lane.b32.xlu0 %v3869, 80
  %v4510 = vpop.permute.xlu0 %4509
  %4511 = vrot.lane.b32.xlu0 %v3870, 80
  %v4512 = vpop.permute.xlu0 %4511
  %4513 = vrot.lane.b32.xlu0 %v3871, 80
  %v4514 = vpop.permute.xlu0 %4513
  %4515 = vrot.lane.b32.xlu0 %v3872, 80
  %v4516 = vpop.permute.xlu0 %4515
  %4517 = vrot.lane.b32.xlu0 %v3873, 80
  %v4518 = vpop.permute.xlu0 %4517
  %4519 = vrot.lane.b32.xlu0 %v3874, 80
  %v4520 = vpop.permute.xlu0 %4519
  %4521 = vrot.lane.b32.xlu0 %v3875, 80
  %v4522 = vpop.permute.xlu0 %4521
  %4523 = vrot.lane.b32.xlu0 %v3876, 80
  %v4524 = vpop.permute.xlu0 %4523
  %4525 = vrot.lane.b32.xlu0 %v3877, 80
  %v4526 = vpop.permute.xlu0 %4525
  %4527 = vrot.lane.b32.xlu0 %v3878, 80
  %v4528 = vpop.permute.xlu0 %4527
  %4529 = vrot.lane.b32.xlu0 %v3879, 80
  %v4530 = vpop.permute.xlu0 %4529
  %4531 = vrot.lane.b32.xlu0 %v3880, 80
  %v4532 = vpop.permute.xlu0 %4531
  %4533 = vrot.lane.b32.xlu0 %v3881, 80
  %v4534 = vpop.permute.xlu0 %4533
  %4535 = vrot.lane.b32.xlu0 %v3882, 80
  %v4536 = vpop.permute.xlu0 %4535
  %4537 = vrot.lane.b32.xlu0 %v3883, 80
  %v4538 = vpop.permute.xlu0 %4537
  %4539 = vrot.lane.b32.xlu0 %v3884, 80
  %v4540 = vpop.permute.xlu0 %4539
  %4541 = vrot.lane.b32.xlu0 %v3885, 80
  %v4542 = vpop.permute.xlu0 %4541
  %4543 = vrot.lane.b32.xlu0 %v3886, 80
  %v4544 = vpop.permute.xlu0 %4543
  %4545 = vrot.lane.b32.xlu0 %v3887, 80
  %v4546 = vpop.permute.xlu0 %4545
  %4547 = vrot.lane.b32.xlu0 %v3888, 80
  %v4548 = vpop.permute.xlu0 %4547
  %4549 = vrot.lane.b32.xlu0 %v3889, 80
  %v4550 = vpop.permute.xlu0 %4549
  %4551 = vrot.lane.b32.xlu0 %v3890, 80
  %v4552 = vpop.permute.xlu0 %4551
  %4553 = vrot.lane.b32.xlu0 %v3891, 80
  %v4554 = vpop.permute.xlu0 %4553
  %4555 = vrot.lane.b32.xlu0 %v3892, 80
  %v4556 = vpop.permute.xlu0 %4555
  %4557 = vrot.lane.b32.xlu0 %v3893, 80
  %v4558 = vpop.permute.xlu0 %4557
  %4559 = vrot.lane.b32.xlu0 %v3894, 80
  %v4560 = vpop.permute.xlu0 %4559
  %4561 = vrot.lane.b32.xlu0 %v3895, 80
  %v4562 = vpop.permute.xlu0 %4561
  %4563 = vrot.lane.b32.xlu0 %v3896, 80
  %v4564 = vpop.permute.xlu0 %4563
  %4565 = vrot.lane.b32.xlu0 %v3897, 80
  %v4566 = vpop.permute.xlu0 %4565
  %4567 = vrot.lane.b32.xlu0 %v3898, 80
  %v4568 = vpop.permute.xlu0 %4567
  %4569 = vrot.lane.b32.xlu0 %v3899, 80
  %v4570 = vpop.permute.xlu0 %4569
  %4571 = vrot.lane.b32.xlu0 %v3900, 80
  %v4572 = vpop.permute.xlu0 %4571
  %4573 = vrot.lane.b32.xlu0 %v3901, 80
  %v4574 = vpop.permute.xlu0 %4573
  %4575 = vrot.lane.b32.xlu0 %v3902, 80
  %v4576 = vpop.permute.xlu0 %4575
  %4577 = vrot.lane.b32.xlu0 %v3903, 80
  %v4578 = vpop.permute.xlu0 %4577
  %4579 = vrot.lane.b32.xlu0 %v3904, 80
  %v4580 = vpop.permute.xlu0 %4579
  %4581 = vrot.lane.b32.xlu0 %v3905, 80
  %v4582 = vpop.permute.xlu0 %4581
  %4583 = vrot.lane.b32.xlu0 %v3906, 80
  %v4584 = vpop.permute.xlu0 %4583
  %4585 = vrot.lane.b32.xlu0 %v3907, 80
  %v4586 = vpop.permute.xlu0 %4585
  %4587 = vrot.lane.b32.xlu0 %v3908, 80
  %v4588 = vpop.permute.xlu0 %4587
  %4589 = vrot.lane.b32.xlu0 %v3909, 80
  %v4590 = vpop.permute.xlu0 %4589
  %4591 = vrot.lane.b32.xlu0 %v3910, 80
  %v4592 = vpop.permute.xlu0 %4591
  %4593 = vrot.lane.b32.xlu0 %v3911, 80
  %v4594 = vpop.permute.xlu0 %4593
  %4595 = vrot.lane.b32.xlu0 %v3912, 80
  %v4596 = vpop.permute.xlu0 %4595
  %4597 = vrot.lane.b32.xlu0 %v3913, 80
  %v4598 = vpop.permute.xlu0 %4597
  %4599 = vrot.lane.b32.xlu0 %v3914, 80
  %v4600 = vpop.permute.xlu0 %4599
  %4601 = vrot.lane.b32.xlu0 %v3915, 80
  %v4602 = vpop.permute.xlu0 %4601
  %4603 = vrot.lane.b32.xlu0 %v3916, 80
  %v4604 = vpop.permute.xlu0 %4603
  %4605 = vrot.lane.b32.xlu0 %v3917, 80
  %v4606 = vpop.permute.xlu0 %4605
  %4607 = vrot.lane.b32.xlu0 %v3918, 80
  %v4608 = vpop.permute.xlu0 %4607
  %4609 = vrot.lane.b32.xlu0 %v3919, 80
  %v4610 = vpop.permute.xlu0 %4609
  %4611 = vrot.lane.b32.xlu0 %v3920, 80
  %v4612 = vpop.permute.xlu0 %4611
  %4613 = vrot.lane.b32.xlu0 %v3921, 80
  %v4614 = vpop.permute.xlu0 %4613
  %4615 = vrot.lane.b32.xlu0 %v3922, 80
  %v4616 = vpop.permute.xlu0 %4615
  %4617 = vrot.lane.b32.xlu0 %v3923, 80
  %v4618 = vpop.permute.xlu0 %4617
  %4619 = vrot.lane.b32.xlu0 %v3924, 80
  %v4620 = vpop.permute.xlu0 %4619
  %4621 = vrot.lane.b32.xlu0 %v3925, 80
  %v4622 = vpop.permute.xlu0 %4621
  %4623 = vrot.lane.b32.xlu0 %v3926, 80
  %v4624 = vpop.permute.xlu0 %4623
  %4625 = vrot.lane.b32.xlu0 %v3927, 80
  %v4626 = vpop.permute.xlu0 %4625
  %4627 = vrot.lane.b32.xlu0 %v3928, 80
  %v4628 = vpop.permute.xlu0 %4627
  %4629 = vrot.lane.b32.xlu0 %v3929, 80
  %v4630 = vpop.permute.xlu0 %4629
  %4631 = vrot.lane.b32.xlu0 %v3930, 80
  %v4632 = vpop.permute.xlu0 %4631
  %4633 = vrot.lane.b32.xlu0 %v3931, 80
  %v4634 = vpop.permute.xlu0 %4633
  %4635 = vrot.lane.b32.xlu0 %v3932, 80
  %v4636 = vpop.permute.xlu0 %4635
  %v4637 = vadd.f32 %v4445, %v4510
  %v4638 = vadd.f32 %v4446, %v4512
  %v4639 = vadd.f32 %v4447, %v4514
  %v4640 = vadd.f32 %v4448, %v4516
  %v4641 = vadd.f32 %v4449, %v4518
  %v4642 = vadd.f32 %v4450, %v4520
  %v4643 = vadd.f32 %v4451, %v4522
  %v4644 = vadd.f32 %v4452, %v4524
  %v4645 = vadd.f32 %v4453, %v4526
  %v4646 = vadd.f32 %v4454, %v4528
  %v4647 = vadd.f32 %v4455, %v4530
  %v4648 = vadd.f32 %v4456, %v4532
  %v4649 = vadd.f32 %v4457, %v4534
  %v4650 = vadd.f32 %v4458, %v4536
  %v4651 = vadd.f32 %v4459, %v4538
  %v4652 = vadd.f32 %v4460, %v4540
  %v4653 = vadd.f32 %v4461, %v4542
  %v4654 = vadd.f32 %v4462, %v4544
  %v4655 = vadd.f32 %v4463, %v4546
  %v4656 = vadd.f32 %v4464, %v4548
  %v4657 = vadd.f32 %v4465, %v4550
  %v4658 = vadd.f32 %v4466, %v4552
  %v4659 = vadd.f32 %v4467, %v4554
  %v4660 = vadd.f32 %v4468, %v4556
  %v4661 = vadd.f32 %v4469, %v4558
  %v4662 = vadd.f32 %v4470, %v4560
  %v4663 = vadd.f32 %v4471, %v4562
  %v4664 = vadd.f32 %v4472, %v4564
  %v4665 = vadd.f32 %v4473, %v4566
  %v4666 = vadd.f32 %v4474, %v4568
  %v4667 = vadd.f32 %v4475, %v4570
  %v4668 = vadd.f32 %v4476, %v4572
  %v4669 = vadd.f32 %v4477, %v4574
  %v4670 = vadd.f32 %v4478, %v4576
  %v4671 = vadd.f32 %v4479, %v4578
  %v4672 = vadd.f32 %v4480, %v4580
  %v4673 = vadd.f32 %v4481, %v4582
  %v4674 = vadd.f32 %v4482, %v4584
  %v4675 = vadd.f32 %v4483, %v4586
  %v4676 = vadd.f32 %v4484, %v4588
  %v4677 = vadd.f32 %v4485, %v4590
  %v4678 = vadd.f32 %v4486, %v4592
  %v4679 = vadd.f32 %v4487, %v4594
  %v4680 = vadd.f32 %v4488, %v4596
  %v4681 = vadd.f32 %v4489, %v4598
  %v4682 = vadd.f32 %v4490, %v4600
  %v4683 = vadd.f32 %v4491, %v4602
  %v4684 = vadd.f32 %v4492, %v4604
  %v4685 = vadd.f32 %v4493, %v4606
  %v4686 = vadd.f32 %v4494, %v4608
  %v4687 = vadd.f32 %v4495, %v4610
  %v4688 = vadd.f32 %v4496, %v4612
  %v4689 = vadd.f32 %v4497, %v4614
  %v4690 = vadd.f32 %v4498, %v4616
  %v4691 = vadd.f32 %v4499, %v4618
  %v4692 = vadd.f32 %v4500, %v4620
  %v4693 = vadd.f32 %v4501, %v4622
  %v4694 = vadd.f32 %v4502, %v4624
  %v4695 = vadd.f32 %v4503, %v4626
  %v4696 = vadd.f32 %v4504, %v4628
  %v4697 = vadd.f32 %v4505, %v4630
  %v4698 = vadd.f32 %v4506, %v4632
  %v4699 = vadd.f32 %v4507, %v4634
  %v4700 = vadd.f32 %v4508, %v4636
  %v4701 = vpack.c.bf16 %v4638, %v4637
  %v4702 = vpack.c.bf16 %v4640, %v4639
  %v4703 = vpack.c.bf16 %v4642, %v4641
  %v4704 = vpack.c.bf16 %v4644, %v4643
  %v4705 = vpack.c.bf16 %v4646, %v4645
  %v4706 = vpack.c.bf16 %v4648, %v4647
  %v4707 = vpack.c.bf16 %v4650, %v4649
  %v4708 = vpack.c.bf16 %v4652, %v4651
  %v4709 = vpack.c.bf16 %v4654, %v4653
  %v4710 = vpack.c.bf16 %v4656, %v4655
  %v4711 = vpack.c.bf16 %v4658, %v4657
  %v4712 = vpack.c.bf16 %v4660, %v4659
  %v4713 = vpack.c.bf16 %v4662, %v4661
  %v4714 = vpack.c.bf16 %v4664, %v4663
  %v4715 = vpack.c.bf16 %v4666, %v4665
  %v4716 = vpack.c.bf16 %v4668, %v4667
  %v4717 = vpack.c.bf16 %v4670, %v4669
  %v4718 = vpack.c.bf16 %v4672, %v4671
  %v4719 = vpack.c.bf16 %v4674, %v4673
  %v4720 = vpack.c.bf16 %v4676, %v4675
  %v4721 = vpack.c.bf16 %v4678, %v4677
  %v4722 = vpack.c.bf16 %v4680, %v4679
  %v4723 = vpack.c.bf16 %v4682, %v4681
  %v4724 = vpack.c.bf16 %v4684, %v4683
  %v4725 = vpack.c.bf16 %v4686, %v4685
  %v4726 = vpack.c.bf16 %v4688, %v4687
  %v4727 = vpack.c.bf16 %v4690, %v4689
  %v4728 = vpack.c.bf16 %v4692, %v4691
  %v4729 = vpack.c.bf16 %v4694, %v4693
  %v4730 = vpack.c.bf16 %v4696, %v4695
  %v4731 = vpack.c.bf16 %v4698, %v4697
  %v4732 = vpack.c.bf16 %v4700, %v4699
  %v4733 = vld [vmem:[%s3] sm:$0xf]
  %v4734 = vld [vmem:[%s3 + $0x4] sm:$0xf]
  %v4735 = vld [vmem:[%s3 + $0x8] sm:$0xf]
  %v4736 = vld [vmem:[%s3 + $0xc] sm:$0xf]
  %v4737 = vld [vmem:[%s3 + $0x10] sm:$0xf]
  %v4738 = vld [vmem:[%s3 + $0x14] sm:$0xf]
  %v4739 = vld [vmem:[%s3 + $0x18] sm:$0xf]
  %v4740 = vld [vmem:[%s3 + $0x1c] sm:$0xf]
  %v4741 = vld [vmem:[%s3 + $0x20] sm:$0xf]
  %v4742 = vld [vmem:[%s3 + $0x24] sm:$0xf]
  %v4743 = vld [vmem:[%s3 + $0x28] sm:$0xf]
  %v4744 = vld [vmem:[%s3 + $0x2c] sm:$0xf]
  %v4745 = vld [vmem:[%s3 + $0x30] sm:$0xf]
  %v4746 = vld [vmem:[%s3 + $0x34] sm:$0xf]
  %v4747 = vld [vmem:[%s3 + $0x38] sm:$0xf]
  %v4748 = vld [vmem:[%s3 + $0x3c] sm:$0xf]
  %v4749 = vld [vmem:[%s4] sm:$0x1]
  %v4751 = vperm.slane %v4749, 0
  %v4769 = vunpack.c.l.b16 %v4733
  %v4770 = vunpack.c.l.b16 %v4734
  %v4771 = vunpack.c.l.b16 %v4735
  %v4772 = vunpack.c.l.b16 %v4736
  %v4773 = vunpack.c.l.b16 %v4737
  %v4774 = vunpack.c.l.b16 %v4738
  %v4775 = vunpack.c.l.b16 %v4739
  %v4776 = vunpack.c.l.b16 %v4740
  %v4777 = vunpack.c.l.b16 %v4741
  %v4778 = vunpack.c.l.b16 %v4742
  %v4779 = vunpack.c.l.b16 %v4743
  %v4780 = vunpack.c.l.b16 %v4744
  %v4781 = vunpack.c.l.b16 %v4745
  %v4782 = vunpack.c.l.b16 %v4746
  %v4783 = vunpack.c.l.b16 %v4747
  %v4784 = vunpack.c.l.b16 %v4748
  %v4785 = vpack.c.b16 %v4770, %v4769
  %v4786 = vpack.c.b16 %v4772, %v4771
  %v4787 = vpack.c.b16 %v4774, %v4773
  %v4788 = vpack.c.b16 %v4776, %v4775
  %v4789 = vpack.c.b16 %v4778, %v4777
  %v4790 = vpack.c.b16 %v4780, %v4779
  %v4791 = vpack.c.b16 %v4782, %v4781
  %v4792 = vpack.c.b16 %v4784, %v4783
  %4801 = vmatpush.bf16.msra.mxu0 %v4792
  %4802 = vmatpush.bf16.msra.mxu0 %v4791
  %4803 = vmatpush.bf16.msra.mxu0 %v4790
  %4804 = vmatpush.bf16.msra.mxu0 %v4789
  %4805 = vmatpush.bf16.msra.mxu0 %v4788
  %4806 = vmatpush.bf16.msra.mxu0 %v4787
  %4807 = vmatpush.bf16.msra.mxu0 %v4786
  %4808 = vmatpush.bf16.msra.mxu0 %v4785
  %4809 = vmatmul.bf16.gmra.mxu0 %v4701
  %v4810 = vpop.f32.mrf.mxu0
  %v4811 = vadd.f32 %v4751, %v4810
  %v4812 = vpop.f32.mrf.mxu0
  %v4813 = vadd.f32 %v4751, %v4812
  %4814 = vmatmul.bf16.gmra.mxu0 %v4702
  %v4815 = vpop.f32.mrf.mxu0
  %v4816 = vadd.f32 %v4751, %v4815
  %v4817 = vpop.f32.mrf.mxu0
  %v4818 = vadd.f32 %v4751, %v4817
  %4819 = vmatmul.bf16.gmra.mxu0 %v4703
  %v4820 = vpop.f32.mrf.mxu0
  %v4821 = vadd.f32 %v4751, %v4820
  %v4822 = vpop.f32.mrf.mxu0
  %v4823 = vadd.f32 %v4751, %v4822
  %4824 = vmatmul.bf16.gmra.mxu0 %v4704
  %v4825 = vpop.f32.mrf.mxu0
  %v4826 = vadd.f32 %v4751, %v4825
  %v4827 = vpop.f32.mrf.mxu0
  %v4828 = vadd.f32 %v4751, %v4827
  %4829 = vmatmul.bf16.gmra.mxu0 %v4705
  %v4830 = vpop.f32.mrf.mxu0
  %v4831 = vadd.f32 %v4751, %v4830
  %v4832 = vpop.f32.mrf.mxu0
  %v4833 = vadd.f32 %v4751, %v4832
  %4834 = vmatmul.bf16.gmra.mxu0 %v4706
  %v4835 = vpop.f32.mrf.mxu0
  %v4836 = vadd.f32 %v4751, %v4835
  %v4837 = vpop.f32.mrf.mxu0
  %v4838 = vadd.f32 %v4751, %v4837
  %4839 = vmatmul.bf16.gmra.mxu0 %v4707
  %v4840 = vpop.f32.mrf.mxu0
  %v4841 = vadd.f32 %v4751, %v4840
  %v4842 = vpop.f32.mrf.mxu0
  %v4843 = vadd.f32 %v4751, %v4842
  %4844 = vmatmul.bf16.gmra.mxu0 %v4708
  %v4845 = vpop.f32.mrf.mxu0
  %v4846 = vadd.f32 %v4751, %v4845
  %v4847 = vpop.f32.mrf.mxu0
  %v4848 = vadd.f32 %v4751, %v4847
  %4849 = vmatmul.bf16.gmra.mxu0 %v4709
  %v4850 = vpop.f32.mrf.mxu0
  %v4851 = vadd.f32 %v4751, %v4850
  %v4852 = vpop.f32.mrf.mxu0
  %v4853 = vadd.f32 %v4751, %v4852
  %4854 = vmatmul.bf16.gmra.mxu0 %v4710
  %v4855 = vpop.f32.mrf.mxu0
  %v4856 = vadd.f32 %v4751, %v4855
  %v4857 = vpop.f32.mrf.mxu0
  %v4858 = vadd.f32 %v4751, %v4857
  %4859 = vmatmul.bf16.gmra.mxu0 %v4711
  %v4860 = vpop.f32.mrf.mxu0
  %v4861 = vadd.f32 %v4751, %v4860
  %v4862 = vpop.f32.mrf.mxu0
  %v4863 = vadd.f32 %v4751, %v4862
  %4864 = vmatmul.bf16.gmra.mxu0 %v4712
  %v4865 = vpop.f32.mrf.mxu0
  %v4866 = vadd.f32 %v4751, %v4865
  %v4867 = vpop.f32.mrf.mxu0
  %v4868 = vadd.f32 %v4751, %v4867
  %4869 = vmatmul.bf16.gmra.mxu0 %v4713
  %v4870 = vpop.f32.mrf.mxu0
  %v4871 = vadd.f32 %v4751, %v4870
  %v4872 = vpop.f32.mrf.mxu0
  %v4873 = vadd.f32 %v4751, %v4872
  %4874 = vmatmul.bf16.gmra.mxu0 %v4714
  %v4875 = vpop.f32.mrf.mxu0
  %v4876 = vadd.f32 %v4751, %v4875
  %v4877 = vpop.f32.mrf.mxu0
  %v4878 = vadd.f32 %v4751, %v4877
  %4879 = vmatmul.bf16.gmra.mxu0 %v4715
  %v4880 = vpop.f32.mrf.mxu0
  %v4881 = vadd.f32 %v4751, %v4880
  %v4882 = vpop.f32.mrf.mxu0
  %v4883 = vadd.f32 %v4751, %v4882
  %4884 = vmatmul.bf16.gmra.mxu0 %v4716
  %v4885 = vpop.f32.mrf.mxu0
  %v4886 = vadd.f32 %v4751, %v4885
  %v4887 = vpop.f32.mrf.mxu0
  %v4888 = vadd.f32 %v4751, %v4887
  %4889 = vmatmul.bf16.gmra.mxu0 %v4717
  %v4890 = vpop.f32.mrf.mxu0
  %v4891 = vadd.f32 %v4751, %v4890
  %v4892 = vpop.f32.mrf.mxu0
  %v4893 = vadd.f32 %v4751, %v4892
  %4894 = vmatmul.bf16.gmra.mxu0 %v4718
  %v4895 = vpop.f32.mrf.mxu0
  %v4896 = vadd.f32 %v4751, %v4895
  %v4897 = vpop.f32.mrf.mxu0
  %v4898 = vadd.f32 %v4751, %v4897
  %4899 = vmatmul.bf16.gmra.mxu0 %v4719
  %v4900 = vpop.f32.mrf.mxu0
  %v4901 = vadd.f32 %v4751, %v4900
  %v4902 = vpop.f32.mrf.mxu0
  %v4903 = vadd.f32 %v4751, %v4902
  %4904 = vmatmul.bf16.gmra.mxu0 %v4720
  %v4905 = vpop.f32.mrf.mxu0
  %v4906 = vadd.f32 %v4751, %v4905
  %v4907 = vpop.f32.mrf.mxu0
  %v4908 = vadd.f32 %v4751, %v4907
  %4909 = vmatmul.bf16.gmra.mxu0 %v4721
  %v4910 = vpop.f32.mrf.mxu0
  %v4911 = vadd.f32 %v4751, %v4910
  %v4912 = vpop.f32.mrf.mxu0
  %v4913 = vadd.f32 %v4751, %v4912
  %4914 = vmatmul.bf16.gmra.mxu0 %v4722
  %v4915 = vpop.f32.mrf.mxu0
  %v4916 = vadd.f32 %v4751, %v4915
  %v4917 = vpop.f32.mrf.mxu0
  %v4918 = vadd.f32 %v4751, %v4917
  %4919 = vmatmul.bf16.gmra.mxu0 %v4723
  %v4920 = vpop.f32.mrf.mxu0
  %v4921 = vadd.f32 %v4751, %v4920
  %v4922 = vpop.f32.mrf.mxu0
  %v4923 = vadd.f32 %v4751, %v4922
  %4924 = vmatmul.bf16.gmra.mxu0 %v4724
  %v4925 = vpop.f32.mrf.mxu0
  %v4926 = vadd.f32 %v4751, %v4925
  %v4927 = vpop.f32.mrf.mxu0
  %v4928 = vadd.f32 %v4751, %v4927
  %4929 = vmatmul.bf16.gmra.mxu0 %v4725
  %v4930 = vpop.f32.mrf.mxu0
  %v4931 = vadd.f32 %v4751, %v4930
  %v4932 = vpop.f32.mrf.mxu0
  %v4933 = vadd.f32 %v4751, %v4932
  %4934 = vmatmul.bf16.gmra.mxu0 %v4726
  %v4935 = vpop.f32.mrf.mxu0
  %v4936 = vadd.f32 %v4751, %v4935
  %v4937 = vpop.f32.mrf.mxu0
  %v4938 = vadd.f32 %v4751, %v4937
  %4939 = vmatmul.bf16.gmra.mxu0 %v4727
  %v4940 = vpop.f32.mrf.mxu0
  %v4941 = vadd.f32 %v4751, %v4940
  %v4942 = vpop.f32.mrf.mxu0
  %v4943 = vadd.f32 %v4751, %v4942
  %4944 = vmatmul.bf16.gmra.mxu0 %v4728
  %v4945 = vpop.f32.mrf.mxu0
  %v4946 = vadd.f32 %v4751, %v4945
  %v4947 = vpop.f32.mrf.mxu0
  %v4948 = vadd.f32 %v4751, %v4947
  %4949 = vmatmul.bf16.gmra.mxu0 %v4729
  %v4950 = vpop.f32.mrf.mxu0
  %v4951 = vadd.f32 %v4751, %v4950
  %v4952 = vpop.f32.mrf.mxu0
  %v4953 = vadd.f32 %v4751, %v4952
  %4954 = vmatmul.bf16.gmra.mxu0 %v4730
  %v4955 = vpop.f32.mrf.mxu0
  %v4956 = vadd.f32 %v4751, %v4955
  %v4957 = vpop.f32.mrf.mxu0
  %v4958 = vadd.f32 %v4751, %v4957
  %4959 = vmatmul.bf16.gmra.mxu0 %v4731
  %v4960 = vpop.f32.mrf.mxu0
  %v4961 = vadd.f32 %v4751, %v4960
  %v4962 = vpop.f32.mrf.mxu0
  %v4963 = vadd.f32 %v4751, %v4962
  %4964 = vmatmul.bf16.gmra.mxu0 %v4732
  %v4965 = vpop.f32.mrf.mxu0
  %v4966 = vadd.f32 %v4751, %v4965
  %v4967 = vpop.f32.mrf.mxu0
  %v4968 = vadd.f32 %v4751, %v4967
  %4969 = vdwg.mxu0
  %v4970 = vmax.f32 %v4811, 0.0
  %v4971 = vmax.f32 %v4813, 0.0
  %v4972 = vmax.f32 %v4816, 0.0
  %v4973 = vmax.f32 %v4818, 0.0
  %v4974 = vmax.f32 %v4821, 0.0
  %v4975 = vmax.f32 %v4823, 0.0
  %v4976 = vmax.f32 %v4826, 0.0
  %v4977 = vmax.f32 %v4828, 0.0
  %v4978 = vmax.f32 %v4831, 0.0
  %v4979 = vmax.f32 %v4833, 0.0
  %v4980 = vmax.f32 %v4836, 0.0
  %v4981 = vmax.f32 %v4838, 0.0
  %v4982 = vmax.f32 %v4841, 0.0
  %v4983 = vmax.f32 %v4843, 0.0
  %v4984 = vmax.f32 %v4846, 0.0
  %v4985 = vmax.f32 %v4848, 0.0
  %v4986 = vmax.f32 %v4851, 0.0
  %v4987 = vmax.f32 %v4853, 0.0
  %v4988 = vmax.f32 %v4856, 0.0
  %v4989 = vmax.f32 %v4858, 0.0
  %v4990 = vmax.f32 %v4861, 0.0
  %v4991 = vmax.f32 %v4863, 0.0
  %v4992 = vmax.f32 %v4866, 0.0
  %v4993 = vmax.f32 %v4868, 0.0
  %v4994 = vmax.f32 %v4871, 0.0
  %v4995 = vmax.f32 %v4873, 0.0
  %v4996 = vmax.f32 %v4876, 0.0
  %v4997 = vmax.f32 %v4878, 0.0
  %v4998 = vmax.f32 %v4881, 0.0
  %v4999 = vmax.f32 %v4883, 0.0
  %v5000 = vmax.f32 %v4886, 0.0
  %v5001 = vmax.f32 %v4888, 0.0
  %v5002 = vmax.f32 %v4891, 0.0
  %v5003 = vmax.f32 %v4893, 0.0
  %v5004 = vmax.f32 %v4896, 0.0
  %v5005 = vmax.f32 %v4898, 0.0
  %v5006 = vmax.f32 %v4901, 0.0
  %v5007 = vmax.f32 %v4903, 0.0
  %v5008 = vmax.f32 %v4906, 0.0
  %v5009 = vmax.f32 %v4908, 0.0
  %v5010 = vmax.f32 %v4911, 0.0
  %v5011 = vmax.f32 %v4913, 0.0
  %v5012 = vmax.f32 %v4916, 0.0
  %v5013 = vmax.f32 %v4918, 0.0
  %v5014 = vmax.f32 %v4921, 0.0
  %v5015 = vmax.f32 %v4923, 0.0
  %v5016 = vmax.f32 %v4926, 0.0
  %v5017 = vmax.f32 %v4928, 0.0
  %v5018 = vmax.f32 %v4931, 0.0
  %v5019 = vmax.f32 %v4933, 0.0
  %v5020 = vmax.f32 %v4936, 0.0
  %v5021 = vmax.f32 %v4938, 0.0
  %v5022 = vmax.f32 %v4941, 0.0
  %v5023 = vmax.f32 %v4943, 0.0
  %v5024 = vmax.f32 %v4946, 0.0
  %v5025 = vmax.f32 %v4948, 0.0
  %v5026 = vmax.f32 %v4951, 0.0
  %v5027 = vmax.f32 %v4953, 0.0
  %v5028 = vmax.f32 %v4956, 0.0
  %v5029 = vmax.f32 %v4958, 0.0
  %v5030 = vmax.f32 %v4961, 0.0
  %v5031 = vmax.f32 %v4963, 0.0
  %v5032 = vmax.f32 %v4966, 0.0
  %v5033 = vmax.f32 %v4968, 0.0
  %v5034 = vmax.f32 %v4970, %v4971
  %v5035 = vmax.f32 %v4972, %v4973
  %v5036 = vmax.f32 %v4974, %v4975
  %v5037 = vmax.f32 %v4976, %v4977
  %v5038 = vmax.f32 %v4986, %v4987
  %v5039 = vmax.f32 %v4988, %v4989
  %v5040 = vmax.f32 %v4990, %v4991
  %v5041 = vmax.f32 %v4992, %v4993
  %v5042 = vmax.f32 %v5002, %v5003
  %v5043 = vmax.f32 %v5004, %v5005
  %v5044 = vmax.f32 %v5006, %v5007
  %v5045 = vmax.f32 %v5008, %v5009
  %v5046 = vmax.f32 %v5018, %v5019
  %v5047 = vmax.f32 %v5020, %v5021
  %v5048 = vmax.f32 %v5022, %v5023
  %v5049 = vmax.f32 %v5024, %v5025
  %v5050 = vmax.f32 %v4978, %v4979
  %v5051 = vmax.f32 %v4980, %v4981
  %v5052 = vmax.f32 %v4982, %v4983
  %v5053 = vmax.f32 %v4984, %v4985
  %v5054 = vmax.f32 %v4994, %v4995
  %v5055 = vmax.f32 %v4996, %v4997
  %v5056 = vmax.f32 %v4998, %v4999
  %v5057 = vmax.f32 %v5000, %v5001
  %v5058 = vmax.f32 %v5010, %v5011
  %v5059 = vmax.f32 %v5012, %v5013
  %v5060 = vmax.f32 %v5014, %v5015
  %v5061 = vmax.f32 %v5016, %v5017
  %v5062 = vmax.f32 %v5026, %v5027
  %v5063 = vmax.f32 %v5028, %v5029
  %v5064 = vmax.f32 %v5030, %v5031
  %v5065 = vmax.f32 %v5032, %v5033
  %v5066 = vmax.f32 %v5034, %v5050
  %v5067 = vmax.f32 %v5035, %v5051
  %v5068 = vmax.f32 %v5036, %v5052
  %v5069 = vmax.f32 %v5037, %v5053
  %v5070 = vmax.f32 %v5038, %v5054
  %v5071 = vmax.f32 %v5039, %v5055
  %v5072 = vmax.f32 %v5040, %v5056
  %v5073 = vmax.f32 %v5041, %v5057
  %v5074 = vmax.f32 %v5042, %v5058
  %v5075 = vmax.f32 %v5043, %v5059
  %v5076 = vmax.f32 %v5044, %v5060
  %v5077 = vmax.f32 %v5045, %v5061
  %v5078 = vmax.f32 %v5046, %v5062
  %v5079 = vmax.f32 %v5047, %v5063
  %v5080 = vmax.f32 %v5048, %v5064
  %v5081 = vmax.f32 %v5049, %v5065
  %5082 = vrot.lane.b32.xlu0 %v5067, 16
  %v5083 = vpop.permute.xlu0 %5082
  %v5084 = vadd.f32 %v5066, %v5083
  %5085 = vrot.lane.b32.xlu0 %v5075, 16
  %v5086 = vpop.permute.xlu0 %5085
  %v5087 = vadd.f32 %v5074, %v5086
  %5088 = vrot.lane.b32.xlu0 %v5068, 32
  %v5089 = vpop.permute.xlu0 %5088
  %v5090 = vadd.f32 %v5084, %v5089
  %5091 = vrot.lane.b32.xlu0 %v5076, 32
  %v5092 = vpop.permute.xlu0 %5091
  %v5093 = vadd.f32 %v5087, %v5092
  %5094 = vrot.lane.b32.xlu0 %v5069, 48
  %v5095 = vpop.permute.xlu0 %5094
  %v5096 = vadd.f32 %v5090, %v5095
  %5097 = vrot.lane.b32.xlu0 %v5077, 48
  %v5098 = vpop.permute.xlu0 %5097
  %v5099 = vadd.f32 %v5093, %v5098
  %5100 = vrot.lane.b32.xlu0 %v5070, 64
  %v5101 = vpop.permute.xlu0 %5100
  %v5102 = vadd.f32 %v5096, %v5101
  %5103 = vrot.lane.b32.xlu0 %v5078, 64
  %v5104 = vpop.permute.xlu0 %5103
  %v5105 = vadd.f32 %v5099, %v5104
  %5106 = vrot.lane.b32.xlu0 %v5071, 80
  %v5107 = vpop.permute.xlu0 %5106
  %v5108 = vadd.f32 %v5102, %v5107
  %5109 = vrot.lane.b32.xlu0 %v5079, 80
  %v5110 = vpop.permute.xlu0 %5109
  %v5111 = vadd.f32 %v5105, %v5110
  %5112 = vrot.lane.b32.xlu0 %v5072, 96
  %v5113 = vpop.permute.xlu0 %5112
  %v5114 = vadd.f32 %v5108, %v5113
  %5115 = vrot.lane.b32.xlu0 %v5080, 96
  %v5116 = vpop.permute.xlu0 %5115
  %v5117 = vadd.f32 %v5111, %v5116
  %5118 = vrot.lane.b32.xlu0 %v5073, 112
  %v5119 = vpop.permute.xlu0 %5118
  %v5120 = vadd.f32 %v5114, %v5119
  %5121 = vrot.lane.b32.xlu0 %v5081, 112
  %v5122 = vpop.permute.xlu0 %5121
  %v5123 = vadd.f32 %v5117, %v5122
  %v5124 = vpack.c.bf16 %v5120, %v5120
  %v5125 = vld [vmem:[%s5] sm:$0xf]
  %v5126 = vld [vmem:[%s5 + $0x4] sm:$0xf]
  %v5127 = vld [vmem:[%s5 + $0x8] sm:$0xf]
  %v5128 = vld [vmem:[%s5 + $0xc] sm:$0xf]
  %v5129 = vld [vmem:[%s5 + $0x10] sm:$0xf]
  %v5130 = vld [vmem:[%s5 + $0x14] sm:$0xf]
  %v5131 = vld [vmem:[%s5 + $0x18] sm:$0xf]
  %v5132 = vld [vmem:[%s5 + $0x1c] sm:$0xf]
  %v5133 = vld [vmem:[%s5 + $0x20] sm:$0xf]
  %v5134 = vld [vmem:[%s5 + $0x24] sm:$0xf]
  %v5135 = vld [vmem:[%s5 + $0x28] sm:$0xf]
  %v5136 = vld [vmem:[%s5 + $0x2c] sm:$0xf]
  %v5137 = vld [vmem:[%s5 + $0x30] sm:$0xf]
  %v5138 = vld [vmem:[%s5 + $0x34] sm:$0xf]
  %v5139 = vld [vmem:[%s5 + $0x38] sm:$0xf]
  %v5140 = vld [vmem:[%s5 + $0x3c] sm:$0xf]
  %v5141 = vpack.c.bf16 %v5123, %v5123
  %v5142 = vld [vmem:[%s6] sm:$0xf]
  %v5143 = vld [vmem:[%s6 + $0x4] sm:$0xf]
  %v5144 = vld [vmem:[%s6 + $0x8] sm:$0xf]
  %v5145 = vld [vmem:[%s6 + $0xc] sm:$0xf]
  %v5146 = vld [vmem:[%s6 + $0x10] sm:$0xf]
  %v5147 = vld [vmem:[%s6 + $0x14] sm:$0xf]
  %v5148 = vld [vmem:[%s6 + $0x18] sm:$0xf]
  %v5149 = vld [vmem:[%s6 + $0x1c] sm:$0xf]
  %v5150 = vld [vmem:[%s6 + $0x20] sm:$0xf]
  %v5151 = vld [vmem:[%s6 + $0x24] sm:$0xf]
  %v5152 = vld [vmem:[%s6 + $0x28] sm:$0xf]
  %v5153 = vld [vmem:[%s6 + $0x2c] sm:$0xf]
  %v5154 = vld [vmem:[%s6 + $0x30] sm:$0xf]
  %v5155 = vld [vmem:[%s6 + $0x34] sm:$0xf]
  %v5156 = vld [vmem:[%s6 + $0x38] sm:$0xf]
  %v5157 = vld [vmem:[%s6 + $0x3c] sm:$0xf]
  %v5174 = vunpack.c.l.b16 %v5142
  %v5175 = vunpack.c.l.b16 %v5143
  %v5176 = vunpack.c.l.b16 %v5144
  %v5177 = vunpack.c.l.b16 %v5145
  %v5178 = vunpack.c.l.b16 %v5146
  %v5179 = vunpack.c.l.b16 %v5147
  %v5180 = vunpack.c.l.b16 %v5148
  %v5181 = vunpack.c.l.b16 %v5149
  %v5182 = vunpack.c.l.b16 %v5150
  %v5183 = vunpack.c.l.b16 %v5151
  %v5184 = vunpack.c.l.b16 %v5152
  %v5185 = vunpack.c.l.b16 %v5153
  %v5186 = vunpack.c.l.b16 %v5154
  %v5187 = vunpack.c.l.b16 %v5155
  %v5188 = vunpack.c.l.b16 %v5156
  %v5189 = vunpack.c.l.b16 %v5157
  %v5190 = vpack.c.b16 %v5175, %v5174
  %v5191 = vpack.c.b16 %v5177, %v5176
  %v5192 = vpack.c.b16 %v5179, %v5178
  %v5193 = vpack.c.b16 %v5181, %v5180
  %v5194 = vpack.c.b16 %v5183, %v5182
  %v5195 = vpack.c.b16 %v5185, %v5184
  %v5196 = vpack.c.b16 %v5187, %v5186
  %v5197 = vpack.c.b16 %v5189, %v5188
  %5206 = vmatpush.bf16.msra.mxu0 %v5197
  %5207 = vmatpush.bf16.msra.mxu0 %v5196
  %5208 = vmatpush.bf16.msra.mxu0 %v5195
  %5209 = vmatpush.bf16.msra.mxu0 %v5194
  %5210 = vmatpush.bf16.msra.mxu0 %v5193
  %5211 = vmatpush.bf16.msra.mxu0 %v5192
  %5212 = vmatpush.bf16.msra.mxu0 %v5191
  %5213 = vmatpush.bf16.msra.mxu0 %v5190
  %5214 = vmatmul.bf16.gmra.mxu0 %v5141
  %v5215 = vpop.f32.mrf.mxu0
  %v5216 = vadd.f32 0.0, %v5215
  %v5217 = vpop.f32.mrf.mxu0
  %5218 = vdwg.mxu0
  %v5235 = vunpack.c.l.b16 %v5125
  %v5236 = vunpack.c.l.b16 %v5126
  %v5237 = vunpack.c.l.b16 %v5127
  %v5238 = vunpack.c.l.b16 %v5128
  %v5239 = vunpack.c.l.b16 %v5129
  %v5240 = vunpack.c.l.b16 %v5130
  %v5241 = vunpack.c.l.b16 %v5131
  %v5242 = vunpack.c.l.b16 %v5132
  %v5243 = vunpack.c.l.b16 %v5133
  %v5244 = vunpack.c.l.b16 %v5134
  %v5245 = vunpack.c.l.b16 %v5135
  %v5246 = vunpack.c.l.b16 %v5136
  %v5247 = vunpack.c.l.b16 %v5137
  %v5248 = vunpack.c.l.b16 %v5138
  %v5249 = vunpack.c.l.b16 %v5139
  %v5250 = vunpack.c.l.b16 %v5140
  %v5251 = vpack.c.b16 %v5236, %v5235
  %v5252 = vpack.c.b16 %v5238, %v5237
  %v5253 = vpack.c.b16 %v5240, %v5239
  %v5254 = vpack.c.b16 %v5242, %v5241
  %v5255 = vpack.c.b16 %v5244, %v5243
  %v5256 = vpack.c.b16 %v5246, %v5245
  %v5257 = vpack.c.b16 %v5248, %v5247
  %v5258 = vpack.c.b16 %v5250, %v5249
  %5267 = vmatpush.bf16.msra.mxu0 %v5258
  %5268 = vmatpush.bf16.msra.mxu0 %v5257
  %5269 = vmatpush.bf16.msra.mxu0 %v5256
  %5270 = vmatpush.bf16.msra.mxu0 %v5255
  %5271 = vmatpush.bf16.msra.mxu0 %v5254
  %5272 = vmatpush.bf16.msra.mxu0 %v5253
  %5273 = vmatpush.bf16.msra.mxu0 %v5252
  %5274 = vmatpush.bf16.msra.mxu0 %v5251
  %5275 = vmatmul.bf16.gmra.mxu0 %v5124
  %v5276 = vpop.f32.mrf.mxu0
  %v5277 = vadd.f32 %v5216, %v5276
  %v5278 = vpop.f32.mrf.mxu0
  %5279 = vdwg.mxu0
  %v5280 = vld [vmem:[%s7] sm:$0x1]
  %v5282 = vperm.slane %v5280, 0
  %v5284 = vadd.f32 %v5277, %v5282
  %v5285 = vmax.f32 %v5284, 0.0
  %v5286 = vpack.c.bf16 %v5285, %v5285
  %v5287 = vld [vmem:[%s8] sm:$0xf]
  %v5288 = vld [vmem:[%s8 + $0x4] sm:$0xf]
  %v5289 = vld [vmem:[%s8 + $0x8] sm:$0xf]
  %v5290 = vld [vmem:[%s8 + $0xc] sm:$0xf]
  %v5291 = vld [vmem:[%s8 + $0x10] sm:$0xf]
  %v5292 = vld [vmem:[%s8 + $0x14] sm:$0xf]
  %v5293 = vld [vmem:[%s8 + $0x18] sm:$0xf]
  %v5294 = vld [vmem:[%s8 + $0x1c] sm:$0xf]
  %v5295 = vld [vmem:[%s8 + $0x20] sm:$0xf]
  %v5296 = vld [vmem:[%s8 + $0x24] sm:$0xf]
  %v5297 = vld [vmem:[%s8 + $0x28] sm:$0xf]
  %v5298 = vld [vmem:[%s8 + $0x2c] sm:$0xf]
  %v5299 = vld [vmem:[%s8 + $0x30] sm:$0xf]
  %v5300 = vld [vmem:[%s8 + $0x34] sm:$0xf]
  %v5301 = vld [vmem:[%s8 + $0x38] sm:$0xf]
  %v5302 = vld [vmem:[%s8 + $0x3c] sm:$0xf]
  %v5303 = vld [vmem:[%s9] sm:$0x1]
  %v5305 = vperm.slane %v5303, 0
  %v5323 = vunpack.c.l.b16 %v5287
  %v5324 = vunpack.c.l.b16 %v5288
  %v5325 = vunpack.c.l.b16 %v5289
  %v5326 = vunpack.c.l.b16 %v5290
  %v5327 = vunpack.c.l.b16 %v5291
  %v5328 = vunpack.c.l.b16 %v5292
  %v5329 = vunpack.c.l.b16 %v5293
  %v5330 = vunpack.c.l.b16 %v5294
  %v5331 = vunpack.c.l.b16 %v5295
  %v5332 = vunpack.c.l.b16 %v5296
  %v5333 = vunpack.c.l.b16 %v5297
  %v5334 = vunpack.c.l.b16 %v5298
  %v5335 = vunpack.c.l.b16 %v5299
  %v5336 = vunpack.c.l.b16 %v5300
  %v5337 = vunpack.c.l.b16 %v5301
  %v5338 = vunpack.c.l.b16 %v5302
  %v5339 = vpack.c.b16 %v5324, %v5323
  %v5340 = vpack.c.b16 %v5326, %v5325
  %v5341 = vpack.c.b16 %v5328, %v5327
  %v5342 = vpack.c.b16 %v5330, %v5329
  %v5343 = vpack.c.b16 %v5332, %v5331
  %v5344 = vpack.c.b16 %v5334, %v5333
  %v5345 = vpack.c.b16 %v5336, %v5335
  %v5346 = vpack.c.b16 %v5338, %v5337
  %5355 = vmatpush.bf16.msra.mxu0 %v5346
  %5356 = vmatpush.bf16.msra.mxu0 %v5345
  %5357 = vmatpush.bf16.msra.mxu0 %v5344
  %5358 = vmatpush.bf16.msra.mxu0 %v5343
  %5359 = vmatpush.bf16.msra.mxu0 %v5342
  %5360 = vmatpush.bf16.msra.mxu0 %v5341
  %5361 = vmatpush.bf16.msra.mxu0 %v5340
  %5362 = vmatpush.bf16.msra.mxu0 %v5339
  %5363 = vmatmul.bf16.gmra.mxu0 %v5286
  %v5364 = vpop.f32.mrf.mxu0
  %v5365 = vadd.f32 %v5305, %v5364
  %v5366 = vpop.f32.mrf.mxu0
  %5367 = vdwg.mxu0
  %5368 = vst [vmem:[%s10] sm:$0xff] %v5365
  // Predicated region
  $region42: #{net_forward.1} parent=0 // pred_check
    _
  $region43: #{net_forward.1} parent=0 // pred_check_branch
    %5370 = sbr.rel (0) target = $region45
  $region44: #{net_forward.1} parent=0 // pred_region
    _
  $region45: #{net_forward.1} parent=0 // pred_fallthru
    _
  // Predicated region
  $region46: #{net_forward.1} parent=0 // pred_check
    _
  $region47: #{net_forward.1} parent=0 // pred_check_branch
    %5372 = sbr.rel (0) target = $region49
  $region48: #{net_forward.1} parent=0 // pred_region
    _
  $region49: #{net_forward.1} parent=0 // pred_fallthru
    _

</llo_original>
